<compile_context>
chip_gen: v5e
topology: v5e:2x2
jax: 0.10.0
libtpu: 0.0.40
codegen_flags: <defaults>
</compile_context>

<pallas_src>
import functools
import numpy as np
import jax
import jax.numpy as jnp
from jax import lax
from jax.experimental import pallas as pl
from jax.experimental.pallas import tpu as pltpu


def _round_up(x, m):
    return (x + m - 1) // m * m


def _bottleneck_kernel(x_ref, w1_ref, t1_ref, w2_ref, t2_ref, w3_ref, t3_ref,
                       *rest, H, W, Cin, planes, Cout, stride, mode):
    # mode: "identity"  - identity shortcut (stride==1, Cin==Cout)
    #       "fused"     - 1x1 conv shortcut merged into the conv1 matmul (stride==1)
    #       "separate"  - 1x1 conv shortcut with its own matmul (stride!=1)
    if mode == "identity":
        out_ref, pad_ref = rest
    elif mode == "fused":
        tsc_ref, out_ref, pad_ref = rest
    else:
        wsc_ref, tsc_ref, out_ref, pad_ref = rest

    Ho = (H - 1) // stride + 1
    Wo = (W - 1) // stride + 1
    Wpad = pad_ref.shape[1]
    f32 = jnp.float32
    bf16 = jnp.bfloat16

    x2d = x_ref[0]                         # (H*W, Cin) f32
    x_bf = x2d.astype(bf16)                # bf16 MXU operand, f32 accumulation

    # ---- conv1 1x1 (+ fused shortcut 1x1) ----
    # BN scales already folded into the bf16 weights; only '+bias' remains.
    y = jnp.dot(x_bf, w1_ref[...], preferred_element_type=f32)
    if mode == "fused":
        h1 = jnp.maximum(y[:, :planes] + t1_ref[...], 0.0)       # (H*W, planes)
        sc = y[:, planes:] + tsc_ref[...]                        # (H*W, Cout)
    else:
        h1 = jnp.maximum(y + t1_ref[...], 0.0)

    # ---- stage conv2 input into the zero-padded scratch ----
    # Only the 1-element halo is zeroed (cheap); interior fully rewritten each
    # step.  Scratch kept f32 so odd-offset sublane stores/loads stay in the
    # plain (non-packed) layout path; taps are cast to bf16 at the dot input.
    pad_ref[0:1, :, :] = jnp.zeros((1, Wpad, planes), f32)
    pad_ref[H + 1:H + 2, :, :] = jnp.zeros((1, Wpad, planes), f32)
    pad_ref[1:H + 1, 0:1, :] = jnp.zeros((H, 1, planes), f32)
    pad_ref[1:H + 1, W + 1:W + 2, :] = jnp.zeros((H, 1, planes), f32)
    pad_ref[1:H + 1, 1:W + 1, :] = h1.reshape(H, W, planes)

    # ---- conv2: 3x3, stride s, pad 1 -> 9 tap-major accumulated matmuls ----
    h2 = jnp.zeros((Ho * Wo, planes), f32)
    for dy in range(3):
        for dx in range(3):
            if stride == 1:
                tap = pad_ref[dy:dy + Ho, dx:dx + Wo, :]
            else:
                # TODO(synk): compact strided rows once instead of 9 strided loads.
                tap = pad_ref[pl.ds(dy, Ho, stride=stride),
                              pl.ds(dx, Wo, stride=stride), :]
            h2 = h2 + jnp.dot(tap.reshape(Ho * Wo, planes).astype(bf16),
                              w2_ref[dy * 3 + dx],
                              preferred_element_type=f32)
    h2 = jnp.maximum(h2 + t2_ref[...], 0.0)                      # (Ho*Wo, planes)

    # ---- conv3 1x1 (no relu yet) ----
    h3 = jnp.dot(h2.astype(bf16), w3_ref[...],
                 preferred_element_type=f32) + t3_ref[...]       # (Ho*Wo, Cout)

    # ---- shortcut for the non-fused modes ----
    if mode == "identity":
        sc = x2d                          # stride==1 and Cin==Cout (asserted)
    elif mode == "separate":
        if stride == 1:
            xs = x_bf
        else:
            xs = lax.slice(x2d.reshape(H, W, Cin), (0, 0, 0), (H, W, Cin),
                           (stride, stride, 1)).reshape(Ho * Wo, Cin).astype(bf16)
        sc = jnp.dot(xs, wsc_ref[...], preferred_element_type=f32) + tsc_ref[...]

    out_ref[0] = jnp.maximum(h3 + sc, 0.0).astype(out_ref.dtype)


def bottleneck_forward(x_nhwc, fp, *, stride, has_shortcut):
    B, H, W, Cin = x_nhwc.shape
    planes = fp["t1"].shape[-1]
    Cout = fp["t3"].shape[-1]
    if not has_shortcut:
        assert stride == 1 and Cin == Cout, (
            "identity shortcut requires stride == 1 and in_planes == expansion*planes")
    Ho = (H - 1) // stride + 1
    Wo = (W - 1) // stride + 1
    Wpad = _round_up(W + 2, 8)

    if not has_shortcut:
        mode = "identity"
    elif stride == 1:
        mode = "fused"
    else:
        mode = "separate"

    # Free host-side reshape; avoids in-kernel retiling reshapes of x / out.
    x = x_nhwc.reshape(B, H * W, Cin)

    if mode == "fused":
        # conv1 and the 1x1 shortcut conv share the same LHS -> one matmul.
        w1 = jnp.concatenate([fp["w1"], fp["wsc"]], axis=1)      # (Cin, planes+Cout)
    else:
        w1 = fp["w1"]

    inputs = [x, w1, fp["t1"], fp["w2"], fp["t2"], fp["w3"], fp["t3"]]
    in_specs = [
        pl.BlockSpec((1, H * W, Cin), lambda b: (b, 0, 0)),
        pl.BlockSpec(w1.shape, lambda b: (0, 0)),
        pl.BlockSpec((1, planes), lambda b: (0, 0)),
        pl.BlockSpec((9, planes, planes), lambda b: (0, 0, 0)),
        pl.BlockSpec((1, planes), lambda b: (0, 0)),
        pl.BlockSpec((planes, Cout), lambda b: (0, 0)),
        pl.BlockSpec((1, Cout), lambda b: (0, 0)),
    ]
    if mode == "fused":
        inputs += [fp["tsc"]]
        in_specs += [pl.BlockSpec((1, Cout), lambda b: (0, 0))]
    elif mode == "separate":
        inputs += [fp["wsc"], fp["tsc"]]
        in_specs += [pl.BlockSpec((Cin, Cout), lambda b: (0, 0)),
                     pl.BlockSpec((1, Cout), lambda b: (0, 0))]

    kernel = functools.partial(_bottleneck_kernel, H=H, W=W, Cin=Cin,
                               planes=planes, Cout=Cout, stride=stride, mode=mode)

    # Scoped-VMEM budget from the actual block / scratch sizes (+ headroom for
    # compiler-managed temporaries) rather than relying on backend defaults.
    blocks = 2 * H * W * Cin * x_nhwc.dtype.itemsize            # x (double-buffered)
    blocks += 2 * Ho * Wo * Cout * x_nhwc.dtype.itemsize        # out
    blocks += sum(2 * int(a.size) * a.dtype.itemsize for a in inputs[1:])
    scratch = (H + 2) * Wpad * planes * 4
    temporaries = 10 * max(H * W, Ho * Wo) * max(planes, Cout, Cin) * 4
    vmem_limit = int(min(120 * 1024 * 1024,
                         max(2 * (blocks + scratch + temporaries),
                             32 * 1024 * 1024)))

    out = pl.pallas_call(
        kernel,
        out_shape=jax.ShapeDtypeStruct((B, Ho * Wo, Cout), x_nhwc.dtype),
        grid_spec=pltpu.PrefetchScalarGridSpec(
            num_scalar_prefetch=0,
            grid=(B,),
            in_specs=in_specs,
            out_specs=pl.BlockSpec((1, Ho * Wo, Cout), lambda b: (b, 0, 0)),
            scratch_shapes=[pltpu.VMEM((H + 2, Wpad, planes), jnp.float32)]),
        compiler_params=pltpu.CompilerParams(
            dimension_semantics=("parallel",),
            vmem_limit_bytes=vmem_limit),
    )(*inputs)
    return out.reshape(B, Ho, Wo, Cout)


# ------------------------- params / references / test ------------------------

def make_params(key, in_planes, planes, expansion=4):
    Cout = expansion * planes
    ks = iter(jax.random.split(key, 32))

    def conv(shape, fan_in):
        return jax.random.normal(next(ks), shape, jnp.float32) / np.sqrt(fan_in)

    def bn(c):
        return dict(
            gamma=1.0 + 0.1 * jax.random.normal(next(ks), (c,), jnp.float32),
            beta=0.1 * jax.random.normal(next(ks), (c,), jnp.float32),
            mean=0.1 * jax.random.normal(next(ks), (c,), jnp.float32),
            var=0.25 + jax.nn.softplus(jax.random.normal(next(ks), (c,), jnp.float32)))

    return dict(
        w1=conv((in_planes, planes), in_planes),
        b1=0.1 * jax.random.normal(next(ks), (planes,), jnp.float32),
        bn1=bn(planes),
        w2=conv((3, 3, planes, planes), 9 * planes),
        b2=0.1 * jax.random.normal(next(ks), (planes,), jnp.float32),
        bn2=bn(planes),
        w3=conv((planes, Cout), planes),
        b3=0.1 * jax.random.normal(next(ks), (Cout,), jnp.float32),
        bn3=bn(Cout),
        wsc=conv((in_planes, Cout), in_planes),
        bsc=0.1 * jax.random.normal(next(ks), (Cout,), jnp.float32),
        bnsc=bn(Cout),
    )


def fold_params(p, eps=1e-5):
    """Fold eval-mode BN: scale into the bf16 conv weights, shift+conv-bias into one bias."""
    def fold(w, bias, bnp):
        s = bnp["gamma"] / jnp.sqrt(bnp["var"] + eps)
        t = bnp["beta"] - bnp["mean"] * s + s * bias
        return (w * s).astype(jnp.bfloat16), t.reshape(1, -1).astype(jnp.float32)

    planes = p["w2"].shape[-1]
    w1, t1 = fold(p["w1"], p["b1"], p["bn1"])
    w2, t2 = fold(p["w2"], p["b2"], p["bn2"])
    w3, t3 = fold(p["w3"], p["b3"], p["bn3"])
    wsc, tsc = fold(p["wsc"], p["bsc"], p["bnsc"])
    return dict(w1=w1, t1=t1,
                w2=w2.reshape(9, planes, planes), t2=t2,   # tap-major
                w3=w3, t3=t3, wsc=wsc, tsc=tsc)


def reference_forward_folded(x, fp, *, stride, has_shortcut):
    """Same numeric plan as the kernel (bf16 conv operands, f32 accum, folded BN)."""
    dn = ('NHWC', 'HWIO', 'NHWC')
    bf16, f32 = jnp.bfloat16, jnp.float32
    planes = fp["t1"].shape[-1]

    def conv(a, w, strides, pad):
        return lax.conv_general_dilated(a.astype(bf16), w, strides, pad,
                                        dimension_numbers=dn,
                                        preferred_element_type=f32,
                                        precision=lax.Precision.HIGHEST)

    h = jnp.maximum(conv(x, fp["w1"][None, None], (1, 1), ((0, 0), (0, 0))) + fp["t1"], 0.0)
    h = jnp.maximum(conv(h, fp["w2"].reshape(3, 3, planes, planes), (stride, stride),
                         ((1, 1), (1, 1))) + fp["t2"], 0.0)
    h = conv(h, fp["w3"][None, None], (1, 1), ((0, 0), (0, 0))) + fp["t3"]
    if has_shortcut:
        s = conv(x, fp["wsc"][None, None], (stride, stride), ((0, 0), (0, 0))) + fp["tsc"]
    else:
        s = x
    return jnp.maximum(h + s, 0.0)


def reference_forward_f32(x, p, *, stride, has_shortcut, eps=1e-5):
    """Plain f32 reference of the PyTorch Bottleneck (eval mode), NHWC/HWIO."""
    dn = ('NHWC', 'HWIO', 'NHWC')
    prec = lax.Precision.HIGHEST

    def bn(y, bnp):
        s = bnp["gamma"] / jnp.sqrt(bnp["var"] + eps)
        return (y - bnp["mean"]) * s + bnp["beta"]

    o = lax.conv_general_dilated(x, p["w1"][None, None], (1, 1), ((0, 0), (0, 0)),
                                 dimension_numbers=dn, precision=prec) + p["b1"]
    o = jax.nn.relu(bn(o, p["bn1"]))
    o = lax.conv_general_dilated(o, p["w2"], (stride, stride), ((1, 1), (1, 1)),
                                 dimension_numbers=dn, precision=prec) + p["b2"]
    o = jax.nn.relu(bn(o, p["bn2"]))
    o = lax.conv_general_dilated(o, p["w3"][None, None], (1, 1), ((0, 0), (0, 0)),
                                 dimension_numbers=dn, precision=prec) + p["b3"]
    o = bn(o, p["bn3"])
    if has_shortcut:
        s = lax.conv_general_dilated(x, p["wsc"][None, None], (stride, stride),
                                     ((0, 0), (0, 0)),
                                     dimension_numbers=dn, precision=prec) + p["bsc"]
        s = bn(s, p["bnsc"])
    else:
        s = x
    return jax.nn.relu(o + s)


if __name__ == "__main__":
    configs = [
        # Bottleneck(in_planes=4, planes=8, stride=1) -> 1x1-conv + BN shortcut (fused)
        dict(B=2, Cin=4, H=16, W=16, planes=8, stride=1),
        # Bottleneck(in_planes=32, planes=8, stride=1) -> identity shortcut
        dict(B=2, Cin=32, H=16, W=16, planes=8, stride=1),
    ]
    key = jax.random.PRNGKey(0)
    for cfg in configs:
        key, kx, kp = jax.random.split(key, 3)
        B, Cin, H, W = cfg["B"], cfg["Cin"], cfg["H"], cfg["W"]
        planes, stride = cfg["planes"], cfg["stride"]
        Cout = 4 * planes
        has_shortcut = (stride != 1) or (Cin != Cout)

        x = jax.random.normal(kx, (B, H, W, Cin), jnp.float32)
        p = make_params(kp, Cin, planes)
        fp = fold_params(p)

        out = bottleneck_forward(x, fp, stride=stride, has_shortcut=has_shortcut)
        out = jax.block_until_ready(out)

        # Tight check: identical bf16-operand / f32-accumulate plan via XLA convs.
        ref_bf = reference_forward_folded(x, fp, stride=stride, has_shortcut=has_shortcut)
        np.testing.assert_allclose(np.asarray(out), np.asarray(ref_bf),
                                   rtol=5e-4, atol=5e-4)

        # Sanity check against the f32 PyTorch-semantics reference
        # (tolerance absorbs intended bf16 MXU drift).
        ref_f32 = reference_forward_f32(x, p, stride=stride, has_shortcut=has_shortcut)
        np.testing.assert_allclose(np.asarray(out), np.asarray(ref_f32),
                                   rtol=5e-2, atol=5e-2)
    print("KERNEL_OK")
</pallas_src>

<mosaic_0001>
module attributes {stable_mosaic.version = 11 : i64} {
  func.func @_bottleneck_kernel(%arg0: i32, %arg1: memref<1x256x4xf32, #tpu.memory_space<vmem>>, %arg2: memref<4x40xbf16, #tpu.memory_space<vmem>>, %arg3: memref<1x8xf32, #tpu.memory_space<vmem>>, %arg4: memref<9x8x8xbf16, #tpu.memory_space<vmem>>, %arg5: memref<1x8xf32, #tpu.memory_space<vmem>>, %arg6: memref<8x32xbf16, #tpu.memory_space<vmem>>, %arg7: memref<1x32xf32, #tpu.memory_space<vmem>>, %arg8: memref<1x32xf32, #tpu.memory_space<vmem>>, %arg9: memref<1x256x32xf32, #tpu.memory_space<vmem>>, %arg10: memref<18x24x8xf32, #tpu.memory_space<vmem>>) attributes {dimension_semantics = [#tpu.dimension_semantics<parallel>], iteration_bounds = array<i64: 2>, scalar_prefetch = 0 : i64, scratch_operands = 1 : i64, tpu.core_type = #tpu.core_type<tc>, window_params = [{transform_indices = @transform_0, window_bounds = array<i64: 1, 256, 4>}, {pipeline_mode = #tpu.pipeline_mode<synchronous>, transform_indices = @transform_1, window_bounds = array<i64: 4, 40>}, {pipeline_mode = #tpu.pipeline_mode<synchronous>, transform_indices = @transform_2, window_bounds = array<i64: 1, 8>}, {pipeline_mode = #tpu.pipeline_mode<synchronous>, transform_indices = @transform_3, window_bounds = array<i64: 9, 8, 8>}, {pipeline_mode = #tpu.pipeline_mode<synchronous>, transform_indices = @transform_4, window_bounds = array<i64: 1, 8>}, {pipeline_mode = #tpu.pipeline_mode<synchronous>, transform_indices = @transform_5, window_bounds = array<i64: 8, 32>}, {pipeline_mode = #tpu.pipeline_mode<synchronous>, transform_indices = @transform_6, window_bounds = array<i64: 1, 32>}, {pipeline_mode = #tpu.pipeline_mode<synchronous>, transform_indices = @transform_7, window_bounds = array<i64: 1, 32>}, {transform_indices = @transform_8, window_bounds = array<i64: 1, 256, 32>}]} {
    %c0 = arith.constant 0 : index
    %c0_0 = arith.constant 0 : index
    %c0_1 = arith.constant 0 : index
    %0 = vector.load %arg1[%c0, %c0_0, %c0_1] : memref<1x256x4xf32, #tpu.memory_space<vmem>>, vector<1x256x4xf32>
    %1 = vector.shape_cast %0 : vector<1x256x4xf32> to vector<256x4xf32>
    %2 = arith.truncf %1 : vector<256x4xf32> to vector<256x4xbf16>
    %c0_2 = arith.constant 0 : index
    %c0_3 = arith.constant 0 : index
    %3 = vector.load %arg2[%c0_2, %c0_3] : memref<4x40xbf16, #tpu.memory_space<vmem>>, vector<4x40xbf16>
    %cst = arith.constant dense<0.000000e+00> : vector<256x40xf32>
    %4 = tpu.matmul %2, %3, %cst {dimension_numbers = #tpu.dot_dimension_numbers<[1], [0], [0], [1], [0, 0, 1, 1], [], []>} : vector<256x4xbf16>, vector<4x40xbf16>, vector<256x40xf32> -> vector<256x40xf32>
    %5 = vector.extract_strided_slice %4 {offsets = [0, 0], sizes = [256, 8], strides = [1, 1]} : vector<256x40xf32> to vector<256x8xf32>
    %c0_4 = arith.constant 0 : index
    %c0_5 = arith.constant 0 : index
    %6 = vector.load %arg3[%c0_4, %c0_5] : memref<1x8xf32, #tpu.memory_space<vmem>>, vector<1x8xf32>
    %7 = vector.broadcast %6 : vector<1x8xf32> to vector<256x8xf32>
    %8 = arith.addf %5, %7 : vector<256x8xf32>
    %cst_6 = arith.constant 0.000000e+00 : f32
    %9 = vector.broadcast %cst_6 : f32 to vector<256x8xf32>
    %10 = arith.maximumf %8, %9 : vector<256x8xf32>
    %11 = vector.extract_strided_slice %4 {offsets = [0, 8], sizes = [256, 32], strides = [1, 1]} : vector<256x40xf32> to vector<256x32xf32>
    %c0_7 = arith.constant 0 : index
    %c0_8 = arith.constant 0 : index
    %12 = vector.load %arg8[%c0_7, %c0_8] : memref<1x32xf32, #tpu.memory_space<vmem>>, vector<1x32xf32>
    %13 = vector.broadcast %12 : vector<1x32xf32> to vector<256x32xf32>
    %14 = arith.addf %11, %13 : vector<256x32xf32>
    %cst_9 = arith.constant 0.000000e+00 : f32
    %15 = vector.broadcast %cst_9 : f32 to vector<1x24x8xf32>
    %c0_10 = arith.constant 0 : index
    %c0_11 = arith.constant 0 : index
    %c0_12 = arith.constant 0 : index
    %16 = vector.load %arg10[%c0_10, %c0_11, %c0_12] : memref<18x24x8xf32, #tpu.memory_space<vmem>>, vector<1x24x8xf32>
    tpu.vector_store %arg10[%c0_10, %c0_11, %c0_12], %15 {strides = array<i32>} : memref<18x24x8xf32, #tpu.memory_space<vmem>>, vector<1x24x8xf32>,
    %cst_13 = arith.constant 0.000000e+00 : f32
    %17 = vector.broadcast %cst_13 : f32 to vector<1x24x8xf32>
    %c17 = arith.constant 17 : index
    %c0_14 = arith.constant 0 : index
    %c0_15 = arith.constant 0 : index
    %18 = vector.load %arg10[%c17, %c0_14, %c0_15] : memref<18x24x8xf32, #tpu.memory_space<vmem>>, vector<1x24x8xf32>
    tpu.vector_store %arg10[%c17, %c0_14, %c0_15], %17 {strides = array<i32>} : memref<18x24x8xf32, #tpu.memory_space<vmem>>, vector<1x24x8xf32>,
    %cst_16 = arith.constant 0.000000e+00 : f32
    %19 = vector.broadcast %cst_16 : f32 to vector<16x1x8xf32>
    %c1 = arith.constant 1 : index
    %c0_17 = arith.constant 0 : index
    %c0_18 = arith.constant 0 : index
    %20 = vector.load %arg10[%c1, %c0_17, %c0_18] : memref<18x24x8xf32, #tpu.memory_space<vmem>>, vector<16x1x8xf32>
    tpu.vector_store %arg10[%c1, %c0_17, %c0_18], %19 {strides = array<i32>} : memref<18x24x8xf32, #tpu.memory_space<vmem>>, vector<16x1x8xf32>,
    %cst_19 = arith.constant 0.000000e+00 : f32
    %21 = vector.broadcast %cst_19 : f32 to vector<16x1x8xf32>
    %c1_20 = arith.constant 1 : index
    %c17_21 = arith.constant 17 : index
    %c0_22 = arith.constant 0 : index
    %22 = vector.load %arg10[%c1_20, %c17_21, %c0_22] : memref<18x24x8xf32, #tpu.memory_space<vmem>>, vector<16x1x8xf32>
    tpu.vector_store %arg10[%c1_20, %c17_21, %c0_22], %21 {strides = array<i32>} : memref<18x24x8xf32, #tpu.memory_space<vmem>>, vector<16x1x8xf32>,
    %23 = vector.shape_cast %10 : vector<256x8xf32> to vector<16x16x8xf32>
    %c1_23 = arith.constant 1 : index
    %c1_24 = arith.constant 1 : index
    %c0_25 = arith.constant 0 : index
    %24 = vector.load %arg10[%c1_23, %c1_24, %c0_25] : memref<18x24x8xf32, #tpu.memory_space<vmem>>, vector<16x16x8xf32>
    tpu.vector_store %arg10[%c1_23, %c1_24, %c0_25], %23 {strides = array<i32>} : memref<18x24x8xf32, #tpu.memory_space<vmem>>, vector<16x16x8xf32>,
    %cst_26 = arith.constant 0.000000e+00 : f32
    %25 = vector.broadcast %cst_26 : f32 to vector<256x8xf32>
    %c0_27 = arith.constant 0 : index
    %c0_28 = arith.constant 0 : index
    %c0_29 = arith.constant 0 : index
    %26 = vector.load %arg10[%c0_27, %c0_28, %c0_29] : memref<18x24x8xf32, #tpu.memory_space<vmem>>, vector<16x16x8xf32>
    %27 = vector.shape_cast %26 : vector<16x16x8xf32> to vector<256x8xf32>
    %28 = arith.truncf %27 : vector<256x8xf32> to vector<256x8xbf16>
    %c0_30 = arith.constant 0 : index
    %c0_31 = arith.constant 0 : index
    %c0_32 = arith.constant 0 : index
    %29 = vector.load %arg4[%c0_30, %c0_31, %c0_32] : memref<9x8x8xbf16, #tpu.memory_space<vmem>>, vector<1x8x8xbf16>
    %30 = vector.shape_cast %29 : vector<1x8x8xbf16> to vector<8x8xbf16>
    %cst_33 = arith.constant dense<0.000000e+00> : vector<256x8xf32>
    %31 = tpu.matmul %28, %30, %cst_33 {dimension_numbers = #tpu.dot_dimension_numbers<[1], [0], [0], [1], [0, 0, 1, 1], [], []>} : vector<256x8xbf16>, vector<8x8xbf16>, vector<256x8xf32> -> vector<256x8xf32>
    %32 = arith.addf %25, %31 : vector<256x8xf32>
    %c0_34 = arith.constant 0 : index
    %c1_35 = arith.constant 1 : index
    %c0_36 = arith.constant 0 : index
    %33 = vector.load %arg10[%c0_34, %c1_35, %c0_36] : memref<18x24x8xf32, #tpu.memory_space<vmem>>, vector<16x16x8xf32>
    %34 = vector.shape_cast %33 : vector<16x16x8xf32> to vector<256x8xf32>
    %35 = arith.truncf %34 : vector<256x8xf32> to vector<256x8xbf16>
    %c1_37 = arith.constant 1 : index
    %c0_38 = arith.constant 0 : index
    %c0_39 = arith.constant 0 : index
    %36 = vector.load %arg4[%c1_37, %c0_38, %c0_39] : memref<9x8x8xbf16, #tpu.memory_space<vmem>>, vector<1x8x8xbf16>
    %37 = vector.shape_cast %36 : vector<1x8x8xbf16> to vector<8x8xbf16>
    %cst_40 = arith.constant dense<0.000000e+00> : vector<256x8xf32>
    %38 = tpu.matmul %35, %37, %cst_40 {dimension_numbers = #tpu.dot_dimension_numbers<[1], [0], [0], [1], [0, 0, 1, 1], [], []>} : vector<256x8xbf16>, vector<8x8xbf16>, vector<256x8xf32> -> vector<256x8xf32>
    %39 = arith.addf %32, %38 : vector<256x8xf32>
    %c0_41 = arith.constant 0 : index
    %c2 = arith.constant 2 : index
    %c0_42 = arith.constant 0 : index
    %40 = vector.load %arg10[%c0_41, %c2, %c0_42] : memref<18x24x8xf32, #tpu.memory_space<vmem>>, vector<16x16x8xf32>
    %41 = vector.shape_cast %40 : vector<16x16x8xf32> to vector<256x8xf32>
    %42 = arith.truncf %41 : vector<256x8xf32> to vector<256x8xbf16>
    %c2_43 = arith.constant 2 : index
    %c0_44 = arith.constant 0 : index
    %c0_45 = arith.constant 0 : index
    %43 = vector.load %arg4[%c2_43, %c0_44, %c0_45] : memref<9x8x8xbf16, #tpu.memory_space<vmem>>, vector<1x8x8xbf16>
    %44 = vector.shape_cast %43 : vector<1x8x8xbf16> to vector<8x8xbf16>
    %cst_46 = arith.constant dense<0.000000e+00> : vector<256x8xf32>
    %45 = tpu.matmul %42, %44, %cst_46 {dimension_numbers = #tpu.dot_dimension_numbers<[1], [0], [0], [1], [0, 0, 1, 1], [], []>} : vector<256x8xbf16>, vector<8x8xbf16>, vector<256x8xf32> -> vector<256x8xf32>
    %46 = arith.addf %39, %45 : vector<256x8xf32>
    %c1_47 = arith.constant 1 : index
    %c0_48 = arith.constant 0 : index
    %c0_49 = arith.constant 0 : index
    %47 = vector.load %arg10[%c1_47, %c0_48, %c0_49] : memref<18x24x8xf32, #tpu.memory_space<vmem>>, vector<16x16x8xf32>
    %48 = vector.shape_cast %47 : vector<16x16x8xf32> to vector<256x8xf32>
    %49 = arith.truncf %48 : vector<256x8xf32> to vector<256x8xbf16>
    %c3 = arith.constant 3 : index
    %c0_50 = arith.constant 0 : index
    %c0_51 = arith.constant 0 : index
    %50 = vector.load %arg4[%c3, %c0_50, %c0_51] : memref<9x8x8xbf16, #tpu.memory_space<vmem>>, vector<1x8x8xbf16>
    %51 = vector.shape_cast %50 : vector<1x8x8xbf16> to vector<8x8xbf16>
    %cst_52 = arith.constant dense<0.000000e+00> : vector<256x8xf32>
    %52 = tpu.matmul %49, %51, %cst_52 {dimension_numbers = #tpu.dot_dimension_numbers<[1], [0], [0], [1], [0, 0, 1, 1], [], []>} : vector<256x8xbf16>, vector<8x8xbf16>, vector<256x8xf32> -> vector<256x8xf32>
    %53 = arith.addf %46, %52 : vector<256x8xf32>
    %c1_53 = arith.constant 1 : index
    %c1_54 = arith.constant 1 : index
    %c0_55 = arith.constant 0 : index
    %54 = vector.load %arg10[%c1_53, %c1_54, %c0_55] : memref<18x24x8xf32, #tpu.memory_space<vmem>>, vector<16x16x8xf32>
    %55 = vector.shape_cast %54 : vector<16x16x8xf32> to vector<256x8xf32>
    %56 = arith.truncf %55 : vector<256x8xf32> to vector<256x8xbf16>
    %c4 = arith.constant 4 : index
    %c0_56 = arith.constant 0 : index
    %c0_57 = arith.constant 0 : index
    %57 = vector.load %arg4[%c4, %c0_56, %c0_57] : memref<9x8x8xbf16, #tpu.memory_space<vmem>>, vector<1x8x8xbf16>
    %58 = vector.shape_cast %57 : vector<1x8x8xbf16> to vector<8x8xbf16>
    %cst_58 = arith.constant dense<0.000000e+00> : vector<256x8xf32>
    %59 = tpu.matmul %56, %58, %cst_58 {dimension_numbers = #tpu.dot_dimension_numbers<[1], [0], [0], [1], [0, 0, 1, 1], [], []>} : vector<256x8xbf16>, vector<8x8xbf16>, vector<256x8xf32> -> vector<256x8xf32>
    %60 = arith.addf %53, %59 : vector<256x8xf32>
    %c1_59 = arith.constant 1 : index
    %c2_60 = arith.constant 2 : index
    %c0_61 = arith.constant 0 : index
    %61 = vector.load %arg10[%c1_59, %c2_60, %c0_61] : memref<18x24x8xf32, #tpu.memory_space<vmem>>, vector<16x16x8xf32>
    %62 = vector.shape_cast %61 : vector<16x16x8xf32> to vector<256x8xf32>
    %63 = arith.truncf %62 : vector<256x8xf32> to vector<256x8xbf16>
    %c5 = arith.constant 5 : index
    %c0_62 = arith.constant 0 : index
    %c0_63 = arith.constant 0 : index
    %64 = vector.load %arg4[%c5, %c0_62, %c0_63] : memref<9x8x8xbf16, #tpu.memory_space<vmem>>, vector<1x8x8xbf16>
    %65 = vector.shape_cast %64 : vector<1x8x8xbf16> to vector<8x8xbf16>
    %cst_64 = arith.constant dense<0.000000e+00> : vector<256x8xf32>
    %66 = tpu.matmul %63, %65, %cst_64 {dimension_numbers = #tpu.dot_dimension_numbers<[1], [0], [0], [1], [0, 0, 1, 1], [], []>} : vector<256x8xbf16>, vector<8x8xbf16>, vector<256x8xf32> -> vector<256x8xf32>
    %67 = arith.addf %60, %66 : vector<256x8xf32>
    %c2_65 = arith.constant 2 : index
    %c0_66 = arith.constant 0 : index
    %c0_67 = arith.constant 0 : index
    %68 = vector.load %arg10[%c2_65, %c0_66, %c0_67] : memref<18x24x8xf32, #tpu.memory_space<vmem>>, vector<16x16x8xf32>
    %69 = vector.shape_cast %68 : vector<16x16x8xf32> to vector<256x8xf32>
    %70 = arith.truncf %69 : vector<256x8xf32> to vector<256x8xbf16>
    %c6 = arith.constant 6 : index
    %c0_68 = arith.constant 0 : index
    %c0_69 = arith.constant 0 : index
    %71 = vector.load %arg4[%c6, %c0_68, %c0_69] : memref<9x8x8xbf16, #tpu.memory_space<vmem>>, vector<1x8x8xbf16>
    %72 = vector.shape_cast %71 : vector<1x8x8xbf16> to vector<8x8xbf16>
    %cst_70 = arith.constant dense<0.000000e+00> : vector<256x8xf32>
    %73 = tpu.matmul %70, %72, %cst_70 {dimension_numbers = #tpu.dot_dimension_numbers<[1], [0], [0], [1], [0, 0, 1, 1], [], []>} : vector<256x8xbf16>, vector<8x8xbf16>, vector<256x8xf32> -> vector<256x8xf32>
    %74 = arith.addf %67, %73 : vector<256x8xf32>
    %c2_71 = arith.constant 2 : index
    %c1_72 = arith.constant 1 : index
    %c0_73 = arith.constant 0 : index
    %75 = vector.load %arg10[%c2_71, %c1_72, %c0_73] : memref<18x24x8xf32, #tpu.memory_space<vmem>>, vector<16x16x8xf32>
    %76 = vector.shape_cast %75 : vector<16x16x8xf32> to vector<256x8xf32>
    %77 = arith.truncf %76 : vector<256x8xf32> to vector<256x8xbf16>
    %c7 = arith.constant 7 : index
    %c0_74 = arith.constant 0 : index
    %c0_75 = arith.constant 0 : index
    %78 = vector.load %arg4[%c7, %c0_74, %c0_75] : memref<9x8x8xbf16, #tpu.memory_space<vmem>>, vector<1x8x8xbf16>
    %79 = vector.shape_cast %78 : vector<1x8x8xbf16> to vector<8x8xbf16>
    %cst_76 = arith.constant dense<0.000000e+00> : vector<256x8xf32>
    %80 = tpu.matmul %77, %79, %cst_76 {dimension_numbers = #tpu.dot_dimension_numbers<[1], [0], [0], [1], [0, 0, 1, 1], [], []>} : vector<256x8xbf16>, vector<8x8xbf16>, vector<256x8xf32> -> vector<256x8xf32>
    %81 = arith.addf %74, %80 : vector<256x8xf32>
    %c2_77 = arith.constant 2 : index
    %c2_78 = arith.constant 2 : index
    %c0_79 = arith.constant 0 : index
    %82 = vector.load %arg10[%c2_77, %c2_78, %c0_79] : memref<18x24x8xf32, #tpu.memory_space<vmem>>, vector<16x16x8xf32>
    %83 = vector.shape_cast %82 : vector<16x16x8xf32> to vector<256x8xf32>
    %84 = arith.truncf %83 : vector<256x8xf32> to vector<256x8xbf16>
    %c8 = arith.constant 8 : index
    %c0_80 = arith.constant 0 : index
    %c0_81 = arith.constant 0 : index
    %85 = vector.load %arg4[%c8, %c0_80, %c0_81] : memref<9x8x8xbf16, #tpu.memory_space<vmem>>, vector<1x8x8xbf16>
    %86 = vector.shape_cast %85 : vector<1x8x8xbf16> to vector<8x8xbf16>
    %cst_82 = arith.constant dense<0.000000e+00> : vector<256x8xf32>
    %87 = tpu.matmul %84, %86, %cst_82 {dimension_numbers = #tpu.dot_dimension_numbers<[1], [0], [0], [1], [0, 0, 1, 1], [], []>} : vector<256x8xbf16>, vector<8x8xbf16>, vector<256x8xf32> -> vector<256x8xf32>
    %88 = arith.addf %81, %87 : vector<256x8xf32>
    %c0_83 = arith.constant 0 : index
    %c0_84 = arith.constant 0 : index
    %89 = vector.load %arg5[%c0_83, %c0_84] : memref<1x8xf32, #tpu.memory_space<vmem>>, vector<1x8xf32>
    %90 = vector.broadcast %89 : vector<1x8xf32> to vector<256x8xf32>
    %91 = arith.addf %88, %90 : vector<256x8xf32>
    %cst_85 = arith.constant 0.000000e+00 : f32
    %92 = vector.broadcast %cst_85 : f32 to vector<256x8xf32>
    %93 = arith.maximumf %91, %92 : vector<256x8xf32>
    %94 = arith.truncf %93 : vector<256x8xf32> to vector<256x8xbf16>
    %c0_86 = arith.constant 0 : index
    %c0_87 = arith.constant 0 : index
    %95 = vector.load %arg6[%c0_86, %c0_87] : memref<8x32xbf16, #tpu.memory_space<vmem>>, vector<8x32xbf16>
    %cst_88 = arith.constant dense<0.000000e+00> : vector<256x32xf32>
    %96 = tpu.matmul %94, %95, %cst_88 {dimension_numbers = #tpu.dot_dimension_numbers<[1], [0], [0], [1], [0, 0, 1, 1], [], []>} : vector<256x8xbf16>, vector<8x32xbf16>, vector<256x32xf32> -> vector<256x32xf32>
    %c0_89 = arith.constant 0 : index
    %c0_90 = arith.constant 0 : index
    %97 = vector.load %arg7[%c0_89, %c0_90] : memref<1x32xf32, #tpu.memory_space<vmem>>, vector<1x32xf32>
    %98 = vector.broadcast %97 : vector<1x32xf32> to vector<256x32xf32>
    %99 = arith.addf %96, %98 : vector<256x32xf32>
    %100 = arith.addf %99, %14 : vector<256x32xf32>
    %cst_91 = arith.constant 0.000000e+00 : f32
    %101 = vector.broadcast %cst_91 : f32 to vector<256x32xf32>
    %102 = arith.maximumf %100, %101 : vector<256x32xf32>
    %c0_92 = arith.constant 0 : index
    %c0_93 = arith.constant 0 : index
    %c0_94 = arith.constant 0 : index
    %103 = vector.load %arg9[%c0_92, %c0_93, %c0_94] : memref<1x256x32xf32, #tpu.memory_space<vmem>>, vector<1x256x32xf32>
    %104 = vector.shape_cast %103 : vector<1x256x32xf32> to vector<256x32xf32>
    %105 = vector.shape_cast %102 : vector<256x32xf32> to vector<1x256x32xf32>
    tpu.vector_store %arg9[%c0_92, %c0_93, %c0_94], %105 {strides = array<i32>} : memref<1x256x32xf32, #tpu.memory_space<vmem>>, vector<1x256x32xf32>,
    return
  }
  func.func @transform_0(%arg0: i32) -> (i32, i32, i32) {
    %c0_i32 = arith.constant 0 : i32
    %c0_i32_0 = arith.constant 0 : i32
    %c0_i32_1 = arith.constant 0 : i32
    return %arg0, %c0_i32, %c0_i32_0 : i32, i32, i32
  }
  func.func @transform_1(%arg0: i32) -> (i32, i32) {
    %c0_i32 = arith.constant 0 : i32
    %c0_i32_0 = arith.constant 0 : i32
    %c0_i32_1 = arith.constant 0 : i32
    return %c0_i32, %c0_i32_0 : i32, i32
  }
  func.func @transform_2(%arg0: i32) -> (i32, i32) {
    %c0_i32 = arith.constant 0 : i32
    %c0_i32_0 = arith.constant 0 : i32
    %c0_i32_1 = arith.constant 0 : i32
    return %c0_i32, %c0_i32_0 : i32, i32
  }
  func.func @transform_3(%arg0: i32) -> (i32, i32, i32) {
    %c0_i32 = arith.constant 0 : i32
    %c0_i32_0 = arith.constant 0 : i32
    %c0_i32_1 = arith.constant 0 : i32
    %c0_i32_2 = arith.constant 0 : i32
    return %c0_i32, %c0_i32_0, %c0_i32_1 : i32, i32, i32
  }
  func.func @transform_4(%arg0: i32) -> (i32, i32) {
    %c0_i32 = arith.constant 0 : i32
    %c0_i32_0 = arith.constant 0 : i32
    %c0_i32_1 = arith.constant 0 : i32
    return %c0_i32, %c0_i32_0 : i32, i32
  }
  func.func @transform_5(%arg0: i32) -> (i32, i32) {
    %c0_i32 = arith.constant 0 : i32
    %c0_i32_0 = arith.constant 0 : i32
    %c0_i32_1 = arith.constant 0 : i32
    return %c0_i32, %c0_i32_0 : i32, i32
  }
  func.func @transform_6(%arg0: i32) -> (i32, i32) {
    %c0_i32 = arith.constant 0 : i32
    %c0_i32_0 = arith.constant 0 : i32
    %c0_i32_1 = arith.constant 0 : i32
    return %c0_i32, %c0_i32_0 : i32, i32
  }
  func.func @transform_7(%arg0: i32) -> (i32, i32) {
    %c0_i32 = arith.constant 0 : i32
    %c0_i32_0 = arith.constant 0 : i32
    %c0_i32_1 = arith.constant 0 : i32
    return %c0_i32, %c0_i32_0 : i32, i32
  }
  func.func @transform_8(%arg0: i32) -> (i32, i32, i32) {
    %c0_i32 = arith.constant 0 : i32
    %c0_i32_0 = arith.constant 0 : i32
    %c0_i32_1 = arith.constant 0 : i32
    return %arg0, %c0_i32, %c0_i32_0 : i32, i32, i32
  }
}

</mosaic_0001>

<llo_original>
// kernel: tpu_custom_call.1
$region0: #{tpu_custom_call.1}
  #allocation0 [shape = 'u32[]', space=smem, size = 0x4, offset = 0x4, fixed_abs, tag = 'smem constant byte address 0x4 - core index']
  #allocation1 [shape = 'u32[72,128]{1,0:T(1,128)}', space=vmem, size = 0x9000, scoped, tag = 'internal scratch']
  #allocation2 [shape = 'f32[18,24,8]{2,1,0:T(8,128)}', space=vmem, size = 0x36000, scoped, tag = 'scratch operand']
  %s0 = inlined_call_operand.vmem [shape: f32[2,256,4], index: 0, kind: input, shape index: {}]
  %s1 = inlined_call_operand.vmem [shape: bf16[4,40], index: 1, kind: input, shape index: {}]
  %s2 = inlined_call_operand.vmem [shape: f32[1,8], index: 2, kind: input, shape index: {}]
  %s3 = inlined_call_operand.vmem [shape: bf16[9,8,8], index: 3, kind: input, shape index: {}]
  %s4 = inlined_call_operand.vmem [shape: f32[1,8], index: 4, kind: input, shape index: {}]
  %s5 = inlined_call_operand.vmem [shape: bf16[8,32], index: 5, kind: input, shape index: {}]
  %s6 = inlined_call_operand.vmem [shape: f32[1,32], index: 6, kind: input, shape index: {}]
  %s7 = inlined_call_operand.vmem [shape: f32[1,32], index: 7, kind: input, shape index: {}]
  %s8 = inlined_call_operand.vmem [shape: f32[2,256,32], index: 8, kind: output, shape index: {}]
  %s9 = sld [smem:[#allocation0]]
  $region65: #{tpu_custom_call.1} parent=0
    _
  %s11 = ssub.s32 1, %s9
  %s12 = scalar_select 0, %s11, %s9
  loop: start=0, step=1, limit=4
  $region2: #{tpu_custom_call.1} parent=0 // loop_pre_header
    _
  $region3: #{tpu_custom_call.1} parent=0 // loop_header
    %s14 = sphi 0, %s18
    %p15 = scmp.ge.s32.totalorder %s14, 4
    %s24 = sphi 0, %s26
    %s27 = sphi 0, %s24
    %s28 = sphi 0, %s27
    %s44 = sphi 0, %s28
    %s48 = sphi 0, %s48
    %s50 = sphi 0, %s48
    %s51 = sphi 0, %s50
    %s65 = sphi 0, %s51
    %s69 = sphi 0, %s69
    %s71 = sphi 0, %s69
    %s72 = sphi 0, %s71
    %s86 = sphi 0, %s72
    %s90 = sphi 0, %s90
    %s92 = sphi 0, %s90
    %s93 = sphi 0, %s92
    %s107 = sphi 0, %s93
    %s111 = sphi 0, %s111
    %s113 = sphi 0, %s111
    %s114 = sphi 0, %s113
    %s128 = sphi 0, %s114
    %s132 = sphi 0, %s132
    %s134 = sphi 0, %s132
    %s135 = sphi 0, %s134
    %s149 = sphi 0, %s135
    %s153 = sphi 0, %s153
    %s155 = sphi 0, %s153
    %s156 = sphi 0, %s155
    %s170 = sphi 0, %s156
    %s174 = sphi 0, %s174
    %s176 = sphi 0, %s174
    %s177 = sphi 0, %s176
    %s191 = sphi 0, %s177
    %s197 = sphi 0, %s199
    %s200 = sphi 0, %s197
    %s201 = sphi 0, %s200
    %s217 = sphi 0, %s201
  $region4: #{tpu_custom_call.1} parent=0 // loop_header_branch
    %17 = sbr.rel (%p15) target = $region8
  $region5: #{tpu_custom_call.1} parent=0 // loop_body
    %s19 = ssub.s32 %s14, 1
    %s20 = ssub.s32 %s14, 2
    %s21 = sadd.s32 %s14, 1
    %s22 = ssub.s32 %s14, %s21
    %p23 = scmp.eq.s32.totalorder %s22, 0
    %s25 = sadd.s32 %s24, 1
    %s26 = scalar_select %p23, %s24, %s25
    %p29 = pneg %p23
    %p30 = scmp.eq.s32.totalorder %s14, 1
    %p31 = por %p29, %p30
    %p32 = scmp.ne.s32.totalorder %s24, %s27
    %p33 = scmp.eq.s32.totalorder %s14, 0
    %p34 = por %p32, %p33
    %p35 = scmp.ne.s32.totalorder %s24, %s27
    %p36 = scmp.eq.s32.totalorder %s19, 1
    %p37 = por %p35, %p36
    %p38 = scmp.ne.s32.totalorder %s27, %s28
    %p39 = scmp.eq.s32.totalorder %s19, 0
    %p40 = por %p38, %p39
    %p41 = scmp.ne.s32.totalorder %s27, %s28
    %p42 = scmp.eq.s32.totalorder %s20, 1
    %p43 = por %p41, %p42
    %p45 = scmp.ne.s32.totalorder %s28, %s44
    %p46 = scmp.eq.s32.totalorder %s20, 0
    %p47 = por %p45, %p46
    %s49 = sadd.s32 %s48, 1
    %p52 = scmp.eq.s32.totalorder %s14, 1
    %p53 = scmp.ne.s32.totalorder %s48, %s50
    %p54 = scmp.eq.s32.totalorder %s14, 0
    %p55 = por %p53, %p54
    %p56 = scmp.ne.s32.totalorder %s48, %s50
    %p57 = scmp.eq.s32.totalorder %s19, 1
    %p58 = por %p56, %p57
    %p59 = scmp.ne.s32.totalorder %s50, %s51
    %p60 = scmp.eq.s32.totalorder %s19, 0
    %p61 = por %p59, %p60
    %p62 = scmp.ne.s32.totalorder %s50, %s51
    %p63 = scmp.eq.s32.totalorder %s20, 1
    %p64 = por %p62, %p63
    %p66 = scmp.ne.s32.totalorder %s51, %s65
    %p67 = scmp.eq.s32.totalorder %s20, 0
    %p68 = por %p66, %p67
    %s70 = sadd.s32 %s69, 1
    %p73 = scmp.eq.s32.totalorder %s14, 1
    %p74 = scmp.ne.s32.totalorder %s69, %s71
    %p75 = scmp.eq.s32.totalorder %s14, 0
    %p76 = por %p74, %p75
    %p77 = scmp.ne.s32.totalorder %s69, %s71
    %p78 = scmp.eq.s32.totalorder %s19, 1
    %p79 = por %p77, %p78
    %p80 = scmp.ne.s32.totalorder %s71, %s72
    %p81 = scmp.eq.s32.totalorder %s19, 0
    %p82 = por %p80, %p81
    %p83 = scmp.ne.s32.totalorder %s71, %s72
    %p84 = scmp.eq.s32.totalorder %s20, 1
    %p85 = por %p83, %p84
    %p87 = scmp.ne.s32.totalorder %s72, %s86
    %p88 = scmp.eq.s32.totalorder %s20, 0
    %p89 = por %p87, %p88
    %s91 = sadd.s32 %s90, 1
    %p94 = scmp.eq.s32.totalorder %s14, 1
    %p95 = scmp.ne.s32.totalorder %s90, %s92
    %p96 = scmp.eq.s32.totalorder %s14, 0
    %p97 = por %p95, %p96
    %p98 = scmp.ne.s32.totalorder %s90, %s92
    %p99 = scmp.eq.s32.totalorder %s19, 1
    %p100 = por %p98, %p99
    %p101 = scmp.ne.s32.totalorder %s92, %s93
    %p102 = scmp.eq.s32.totalorder %s19, 0
    %p103 = por %p101, %p102
    %p104 = scmp.ne.s32.totalorder %s92, %s93
    %p105 = scmp.eq.s32.totalorder %s20, 1
    %p106 = por %p104, %p105
    %p108 = scmp.ne.s32.totalorder %s93, %s107
    %p109 = scmp.eq.s32.totalorder %s20, 0
    %p110 = por %p108, %p109
    %s112 = sadd.s32 %s111, 1
    %p115 = scmp.eq.s32.totalorder %s14, 1
    %p116 = scmp.ne.s32.totalorder %s111, %s113
    %p117 = scmp.eq.s32.totalorder %s14, 0
    %p118 = por %p116, %p117
    %p119 = scmp.ne.s32.totalorder %s111, %s113
    %p120 = scmp.eq.s32.totalorder %s19, 1
    %p121 = por %p119, %p120
    %p122 = scmp.ne.s32.totalorder %s113, %s114
    %p123 = scmp.eq.s32.totalorder %s19, 0
    %p124 = por %p122, %p123
    %p125 = scmp.ne.s32.totalorder %s113, %s114
    %p126 = scmp.eq.s32.totalorder %s20, 1
    %p127 = por %p125, %p126
    %p129 = scmp.ne.s32.totalorder %s114, %s128
    %p130 = scmp.eq.s32.totalorder %s20, 0
    %p131 = por %p129, %p130
    %s133 = sadd.s32 %s132, 1
    %p136 = scmp.eq.s32.totalorder %s14, 1
    %p137 = scmp.ne.s32.totalorder %s132, %s134
    %p138 = scmp.eq.s32.totalorder %s14, 0
    %p139 = por %p137, %p138
    %p140 = scmp.ne.s32.totalorder %s132, %s134
    %p141 = scmp.eq.s32.totalorder %s19, 1
    %p142 = por %p140, %p141
    %p143 = scmp.ne.s32.totalorder %s134, %s135
    %p144 = scmp.eq.s32.totalorder %s19, 0
    %p145 = por %p143, %p144
    %p146 = scmp.ne.s32.totalorder %s134, %s135
    %p147 = scmp.eq.s32.totalorder %s20, 1
    %p148 = por %p146, %p147
    %p150 = scmp.ne.s32.totalorder %s135, %s149
    %p151 = scmp.eq.s32.totalorder %s20, 0
    %p152 = por %p150, %p151
    %s154 = sadd.s32 %s153, 1
    %p157 = scmp.eq.s32.totalorder %s14, 1
    %p158 = scmp.ne.s32.totalorder %s153, %s155
    %p159 = scmp.eq.s32.totalorder %s14, 0
    %p160 = por %p158, %p159
    %p161 = scmp.ne.s32.totalorder %s153, %s155
    %p162 = scmp.eq.s32.totalorder %s19, 1
    %p163 = por %p161, %p162
    %p164 = scmp.ne.s32.totalorder %s155, %s156
    %p165 = scmp.eq.s32.totalorder %s19, 0
    %p166 = por %p164, %p165
    %p167 = scmp.ne.s32.totalorder %s155, %s156
    %p168 = scmp.eq.s32.totalorder %s20, 1
    %p169 = por %p167, %p168
    %p171 = scmp.ne.s32.totalorder %s156, %s170
    %p172 = scmp.eq.s32.totalorder %s20, 0
    %p173 = por %p171, %p172
    %s175 = sadd.s32 %s174, 1
    %p178 = scmp.eq.s32.totalorder %s14, 1
    %p179 = scmp.ne.s32.totalorder %s174, %s176
    %p180 = scmp.eq.s32.totalorder %s14, 0
    %p181 = por %p179, %p180
    %p182 = scmp.ne.s32.totalorder %s174, %s176
    %p183 = scmp.eq.s32.totalorder %s19, 1
    %p184 = por %p182, %p183
    %p185 = scmp.ne.s32.totalorder %s176, %s177
    %p186 = scmp.eq.s32.totalorder %s19, 0
    %p187 = por %p185, %p186
    %p188 = scmp.ne.s32.totalorder %s176, %s177
    %p189 = scmp.eq.s32.totalorder %s20, 1
    %p190 = por %p188, %p189
    %p192 = scmp.ne.s32.totalorder %s177, %s191
    %p193 = scmp.eq.s32.totalorder %s20, 0
    %p194 = por %p192, %p193
    %s195 = ssub.s32 %s14, %s21
    %p196 = scmp.eq.s32.totalorder %s195, 0
    %s198 = sadd.s32 %s197, 1
    %s199 = scalar_select %p196, %s197, %s198
    %p202 = pneg %p196
    %p203 = scmp.eq.s32.totalorder %s14, 1
    %p204 = por %p202, %p203
    %p205 = scmp.ne.s32.totalorder %s197, %s200
    %p206 = scmp.eq.s32.totalorder %s14, 0
    %p207 = por %p205, %p206
    %p208 = scmp.ne.s32.totalorder %s197, %s200
    %p209 = scmp.eq.s32.totalorder %s19, 1
    %p210 = por %p208, %p209
    %p211 = scmp.ne.s32.totalorder %s200, %s201
    %p212 = scmp.eq.s32.totalorder %s19, 0
    %p213 = por %p211, %p212
    %p214 = scmp.ne.s32.totalorder %s200, %s201
    %p215 = scmp.eq.s32.totalorder %s20, 1
    %p216 = por %p214, %p215
    %p218 = scmp.ne.s32.totalorder %s201, %s217
    %p219 = scmp.eq.s32.totalorder %s20, 0
    %p220 = por %p218, %p219
    %p221 = scmp.le.s32.totalorder 1, %s14
    %p222 = scmp.lt.s32.totalorder %s14, 3
    %p223 = pnand %p221, %p222
    %p224 = pneg %p223
    // Predicated region
    $region9: #{tpu_custom_call.1} parent=5 // pred_check
      _
    $region10: #{tpu_custom_call.1} parent=5 // pred_check_branch
      %226 = sbr.rel (%p223) target = $region12
    $region11: #{tpu_custom_call.1} parent=5 // pred_region
      %s227 = ssub.s32 %s14, 1
      // Predicated region
      $region13: #{tpu_custom_call.1} parent=11 // pred_check
        %p228 = pneg %p61
      $region14: #{tpu_custom_call.1} parent=11 // pred_check_branch
        %230 = sbr.rel (%p228) target = $region16
      $region15: #{tpu_custom_call.1} parent=11 // pred_region
        _
      $region16: #{tpu_custom_call.1} parent=11 // pred_fallthru
        _
      // Predicated region
      $region17: #{tpu_custom_call.1} parent=11 // pred_check
        %p231 = pneg %p82
      $region18: #{tpu_custom_call.1} parent=11 // pred_check_branch
        %233 = sbr.rel (%p231) target = $region20
      $region19: #{tpu_custom_call.1} parent=11 // pred_region
        _
      $region20: #{tpu_custom_call.1} parent=11 // pred_fallthru
        _
      // Predicated region
      $region21: #{tpu_custom_call.1} parent=11 // pred_check
        %p234 = pneg %p103
      $region22: #{tpu_custom_call.1} parent=11 // pred_check_branch
        %236 = sbr.rel (%p234) target = $region24
      $region23: #{tpu_custom_call.1} parent=11 // pred_region
        _
      $region24: #{tpu_custom_call.1} parent=11 // pred_fallthru
        _
      // Predicated region
      $region25: #{tpu_custom_call.1} parent=11 // pred_check
        %p237 = pneg %p124
      $region26: #{tpu_custom_call.1} parent=11 // pred_check_branch
        %239 = sbr.rel (%p237) target = $region28
      $region27: #{tpu_custom_call.1} parent=11 // pred_region
        _
      $region28: #{tpu_custom_call.1} parent=11 // pred_fallthru
        _
      // Predicated region
      $region29: #{tpu_custom_call.1} parent=11 // pred_check
        %p240 = pneg %p145
      $region30: #{tpu_custom_call.1} parent=11 // pred_check_branch
        %242 = sbr.rel (%p240) target = $region32
      $region31: #{tpu_custom_call.1} parent=11 // pred_region
        _
      $region32: #{tpu_custom_call.1} parent=11 // pred_fallthru
        _
      // Predicated region
      $region33: #{tpu_custom_call.1} parent=11 // pred_check
        %p243 = pneg %p166
      $region34: #{tpu_custom_call.1} parent=11 // pred_check_branch
        %245 = sbr.rel (%p243) target = $region36
      $region35: #{tpu_custom_call.1} parent=11 // pred_region
        _
      $region36: #{tpu_custom_call.1} parent=11 // pred_fallthru
        _
      // Predicated region
      $region37: #{tpu_custom_call.1} parent=11 // pred_check
        %p246 = pneg %p187
      $region38: #{tpu_custom_call.1} parent=11 // pred_check_branch
        %248 = sbr.rel (%p246) target = $region40
      $region39: #{tpu_custom_call.1} parent=11 // pred_region
        _
      $region40: #{tpu_custom_call.1} parent=11 // pred_fallthru
        _
    $region12: #{tpu_custom_call.1} parent=5 // pred_fallthru
      _
    %p249 = scmp.lt.s32.totalorder %s14, 2
    // Predicated region
    $region41: #{tpu_custom_call.1} parent=5 // pred_check
      %p250 = pneg %p249
    $region42: #{tpu_custom_call.1} parent=5 // pred_check_branch
      %252 = sbr.rel (%p250) target = $region44
    $region43: #{tpu_custom_call.1} parent=5 // pred_region
      // Predicated region
      $region45: #{tpu_custom_call.1} parent=43 // pred_check
        %p253 = pneg %p34
      $region46: #{tpu_custom_call.1} parent=43 // pred_check_branch
        %255 = sbr.rel (%p253) target = $region48
      $region47: #{tpu_custom_call.1} parent=43 // pred_region
        %p256 = scmp.lt.s32.totalorder %s14, 1
        %s257 = scalar_select %p256, %s14, 1
        %s258 = smul.addr %s257, 32
        %s259 = smul.addr %s258, 8
        %s260 = scalar_lea.vmem %s0, %s259
      $region48: #{tpu_custom_call.1} parent=43 // pred_fallthru
        _
    $region44: #{tpu_custom_call.1} parent=5 // pred_fallthru
      _
    %p261 = scmp.le.s32.totalorder 1, %s14
    %p262 = scmp.lt.s32.totalorder %s14, 3
    %p263 = pnand %p261, %p262
    %p264 = pneg %p263
    // Predicated region
    $region49: #{tpu_custom_call.1} parent=5 // pred_check
      _
    $region50: #{tpu_custom_call.1} parent=5 // pred_check_branch
      %266 = sbr.rel (%p263) target = $region52
    $region51: #{tpu_custom_call.1} parent=5 // pred_region
      %s267 = ssub.s32 %s14, 1
      %p268 = scmp.lt.s32.totalorder %s19, 1
      %s269 = scalar_select %p268, %s19, 1
      %s270 = smul.addr %s269, 32
      %s271 = smul.addr %s270, 8
      %s272 = scalar_lea.vmem %s0, %s271
      %p273 = pneg %p40
      %p274 = pneg %p37
      %p275 = pneg %p61
      %p276 = pneg %p58
      %p277 = pneg %p82
      %p278 = pneg %p79
      %p279 = pneg %p103
      %p280 = pneg %p100
      %p281 = pneg %p124
      %p282 = pneg %p121
      %p283 = pneg %p145
      %p284 = pneg %p142
      %p285 = pneg %p166
      %p286 = pneg %p163
      %p287 = pneg %p187
      %p288 = pneg %p184
      %p289 = pneg %p213
      %p290 = pneg %p210
      %p291 = scmp.lt.s32.totalorder %s19, 1
      %s292 = scalar_select %p291, %s19, 1
      %s293 = smul.addr %s292, 32
      %s294 = smul.addr %s293, 8
      %s295 = scalar_lea.vmem %s8, %s294
      %p296 = scmp.lt.s32.totalorder %s19, 1
      %s297 = scalar_select %p296, %s19, 1
      %s298 = smul.addr %s297, 32
      %s299 = smul.addr %s298, 8
      %s300 = scalar_lea.vmem %s0, %s299
      %p301 = scmp.lt.s32.totalorder %s19, 1
      %s302 = scalar_select %p301, %s19, 1
      %s303 = smul.addr %s302, 32
      %s304 = smul.addr %s303, 8
      %s305 = scalar_lea.vmem %s8, %s304
      %v307 = vld [vmem:[%s300] sm:$0xff]
      %v308 = vld [vmem:[%s300 + $0x8] sm:$0xff]
      %v309 = vld [vmem:[%s300 + $0x10] sm:$0xff]
      %v310 = vld [vmem:[%s300 + $0x18] sm:$0xff]
      %v311 = vld [vmem:[%s300 + $0x20] sm:$0xff]
      %v312 = vld [vmem:[%s300 + $0x28] sm:$0xff]
      %v313 = vld [vmem:[%s300 + $0x30] sm:$0xff]
      %v314 = vld [vmem:[%s300 + $0x38] sm:$0xff]
      %v315 = vld [vmem:[%s300 + $0x40] sm:$0xff]
      %v316 = vld [vmem:[%s300 + $0x48] sm:$0xff]
      %v317 = vld [vmem:[%s300 + $0x50] sm:$0xff]
      %v318 = vld [vmem:[%s300 + $0x58] sm:$0xff]
      %v319 = vld [vmem:[%s300 + $0x60] sm:$0xff]
      %v320 = vld [vmem:[%s300 + $0x68] sm:$0xff]
      %v321 = vld [vmem:[%s300 + $0x70] sm:$0xff]
      %v322 = vld [vmem:[%s300 + $0x78] sm:$0xff]
      %v323 = vld [vmem:[%s300 + $0x80] sm:$0xff]
      %v324 = vld [vmem:[%s300 + $0x88] sm:$0xff]
      %v325 = vld [vmem:[%s300 + $0x90] sm:$0xff]
      %v326 = vld [vmem:[%s300 + $0x98] sm:$0xff]
      %v327 = vld [vmem:[%s300 + $0xa0] sm:$0xff]
      %v328 = vld [vmem:[%s300 + $0xa8] sm:$0xff]
      %v329 = vld [vmem:[%s300 + $0xb0] sm:$0xff]
      %v330 = vld [vmem:[%s300 + $0xb8] sm:$0xff]
      %v331 = vld [vmem:[%s300 + $0xc0] sm:$0xff]
      %v332 = vld [vmem:[%s300 + $0xc8] sm:$0xff]
      %v333 = vld [vmem:[%s300 + $0xd0] sm:$0xff]
      %v334 = vld [vmem:[%s300 + $0xd8] sm:$0xff]
      %v335 = vld [vmem:[%s300 + $0xe0] sm:$0xff]
      %v336 = vld [vmem:[%s300 + $0xe8] sm:$0xff]
      %v337 = vld [vmem:[%s300 + $0xf0] sm:$0xff]
      %v338 = vld [vmem:[%s300 + $0xf8] sm:$0xff]
      %v339 = vpack.c.bf16 %v308, %v307
      %v340 = vpack.c.bf16 %v310, %v309
      %v341 = vpack.c.bf16 %v312, %v311
      %v342 = vpack.c.bf16 %v314, %v313
      %v343 = vpack.c.bf16 %v316, %v315
      %v344 = vpack.c.bf16 %v318, %v317
      %v345 = vpack.c.bf16 %v320, %v319
      %v346 = vpack.c.bf16 %v322, %v321
      %v347 = vpack.c.bf16 %v324, %v323
      %v348 = vpack.c.bf16 %v326, %v325
      %v349 = vpack.c.bf16 %v328, %v327
      %v350 = vpack.c.bf16 %v330, %v329
      %v351 = vpack.c.bf16 %v332, %v331
      %v352 = vpack.c.bf16 %v334, %v333
      %v353 = vpack.c.bf16 %v336, %v335
      %v354 = vpack.c.bf16 %v338, %v337
      %v355 = vld [vmem:[%s1] sm:$0x3]
      %vm356 = vcmask 31744
      %v358 = vsel %vm356, %v339, 0
      %v361 = vsel %vm356, %v340, 0
      %v364 = vsel %vm356, %v341, 0
      %v367 = vsel %vm356, %v342, 0
      %v370 = vsel %vm356, %v343, 0
      %v373 = vsel %vm356, %v344, 0
      %v376 = vsel %vm356, %v345, 0
      %v379 = vsel %vm356, %v346, 0
      %v382 = vsel %vm356, %v347, 0
      %v385 = vsel %vm356, %v348, 0
      %v388 = vsel %vm356, %v349, 0
      %v391 = vsel %vm356, %v350, 0
      %v394 = vsel %vm356, %v351, 0
      %v397 = vsel %vm356, %v352, 0
      %v400 = vsel %vm356, %v353, 0
      %v403 = vsel %vm356, %v354, 0
      %vm405 = vcmask 1041408
      %v407 = vsel %vm405, %v355, 0
      %409 = vmatpush.bf16.msra.mxu0 0
      %410 = vmatpush.bf16.msra.mxu0 0
      %411 = vmatpush.bf16.msra.mxu0 0
      %412 = vmatpush.bf16.msra.mxu0 0
      %413 = vmatpush.bf16.msra.mxu0 0
      %414 = vmatpush.bf16.msra.mxu0 0
      %415 = vmatpush.bf16.msra.mxu0 0
      %416 = vmatpush.bf16.msra.mxu0 %v407
      %417 = vmatmul.bf16.gmra.mxu0 %v358
      %v418 = vpop.f32.mrf.mxu0
      %v419 = vadd.f32 0.0, %v418
      %v420 = vpop.f32.mrf.mxu0
      %v421 = vadd.f32 0.0, %v420
      %422 = vmatmul.bf16.gmra.mxu0 %v361
      %v423 = vpop.f32.mrf.mxu0
      %v424 = vadd.f32 0.0, %v423
      %v425 = vpop.f32.mrf.mxu0
      %v426 = vadd.f32 0.0, %v425
      %427 = vmatmul.bf16.gmra.mxu0 %v364
      %v428 = vpop.f32.mrf.mxu0
      %v429 = vadd.f32 0.0, %v428
      %v430 = vpop.f32.mrf.mxu0
      %v431 = vadd.f32 0.0, %v430
      %432 = vmatmul.bf16.gmra.mxu0 %v367
      %v433 = vpop.f32.mrf.mxu0
      %v434 = vadd.f32 0.0, %v433
      %v435 = vpop.f32.mrf.mxu0
      %v436 = vadd.f32 0.0, %v435
      %437 = vmatmul.bf16.gmra.mxu0 %v370
      %v438 = vpop.f32.mrf.mxu0
      %v439 = vadd.f32 0.0, %v438
      %v440 = vpop.f32.mrf.mxu0
      %v441 = vadd.f32 0.0, %v440
      %442 = vmatmul.bf16.gmra.mxu0 %v373
      %v443 = vpop.f32.mrf.mxu0
      %v444 = vadd.f32 0.0, %v443
      %v445 = vpop.f32.mrf.mxu0
      %v446 = vadd.f32 0.0, %v445
      %447 = vmatmul.bf16.gmra.mxu0 %v376
      %v448 = vpop.f32.mrf.mxu0
      %v449 = vadd.f32 0.0, %v448
      %v450 = vpop.f32.mrf.mxu0
      %v451 = vadd.f32 0.0, %v450
      %452 = vmatmul.bf16.gmra.mxu0 %v379
      %v453 = vpop.f32.mrf.mxu0
      %v454 = vadd.f32 0.0, %v453
      %v455 = vpop.f32.mrf.mxu0
      %v456 = vadd.f32 0.0, %v455
      %457 = vmatmul.bf16.gmra.mxu0 %v382
      %v458 = vpop.f32.mrf.mxu0
      %v459 = vadd.f32 0.0, %v458
      %v460 = vpop.f32.mrf.mxu0
      %v461 = vadd.f32 0.0, %v460
      %462 = vmatmul.bf16.gmra.mxu0 %v385
      %v463 = vpop.f32.mrf.mxu0
      %v464 = vadd.f32 0.0, %v463
      %v465 = vpop.f32.mrf.mxu0
      %v466 = vadd.f32 0.0, %v465
      %467 = vmatmul.bf16.gmra.mxu0 %v388
      %v468 = vpop.f32.mrf.mxu0
      %v469 = vadd.f32 0.0, %v468
      %v470 = vpop.f32.mrf.mxu0
      %v471 = vadd.f32 0.0, %v470
      %472 = vmatmul.bf16.gmra.mxu0 %v391
      %v473 = vpop.f32.mrf.mxu0
      %v474 = vadd.f32 0.0, %v473
      %v475 = vpop.f32.mrf.mxu0
      %v476 = vadd.f32 0.0, %v475
      %477 = vmatmul.bf16.gmra.mxu0 %v394
      %v478 = vpop.f32.mrf.mxu0
      %v479 = vadd.f32 0.0, %v478
      %v480 = vpop.f32.mrf.mxu0
      %v481 = vadd.f32 0.0, %v480
      %482 = vmatmul.bf16.gmra.mxu0 %v397
      %v483 = vpop.f32.mrf.mxu0
      %v484 = vadd.f32 0.0, %v483
      %v485 = vpop.f32.mrf.mxu0
      %v486 = vadd.f32 0.0, %v485
      %487 = vmatmul.bf16.gmra.mxu0 %v400
      %v488 = vpop.f32.mrf.mxu0
      %v489 = vadd.f32 0.0, %v488
      %v490 = vpop.f32.mrf.mxu0
      %v491 = vadd.f32 0.0, %v490
      %492 = vmatmul.bf16.gmra.mxu0 %v403
      %v493 = vpop.f32.mrf.mxu0
      %v494 = vadd.f32 0.0, %v493
      %v495 = vpop.f32.mrf.mxu0
      %v496 = vadd.f32 0.0, %v495
      %497 = vdwg.mxu0
      %v498 = vld [vmem:[%s2] sm:$0x1]
      %v500 = vperm.slane %v498, 0
      %v502 = vadd.f32 %v419, %v500
      %v503 = vadd.f32 %v421, %v500
      %v504 = vadd.f32 %v424, %v500
      %v505 = vadd.f32 %v426, %v500
      %v506 = vadd.f32 %v429, %v500
      %v507 = vadd.f32 %v431, %v500
      %v508 = vadd.f32 %v434, %v500
      %v509 = vadd.f32 %v436, %v500
      %v510 = vadd.f32 %v439, %v500
      %v511 = vadd.f32 %v441, %v500
      %v512 = vadd.f32 %v444, %v500
      %v513 = vadd.f32 %v446, %v500
      %v514 = vadd.f32 %v449, %v500
      %v515 = vadd.f32 %v451, %v500
      %v516 = vadd.f32 %v454, %v500
      %v517 = vadd.f32 %v456, %v500
      %v518 = vadd.f32 %v459, %v500
      %v519 = vadd.f32 %v461, %v500
      %v520 = vadd.f32 %v464, %v500
      %v521 = vadd.f32 %v466, %v500
      %v522 = vadd.f32 %v469, %v500
      %v523 = vadd.f32 %v471, %v500
      %v524 = vadd.f32 %v474, %v500
      %v525 = vadd.f32 %v476, %v500
      %v526 = vadd.f32 %v479, %v500
      %v527 = vadd.f32 %v481, %v500
      %v528 = vadd.f32 %v484, %v500
      %v529 = vadd.f32 %v486, %v500
      %v530 = vadd.f32 %v489, %v500
      %v531 = vadd.f32 %v491, %v500
      %v532 = vadd.f32 %v494, %v500
      %v533 = vadd.f32 %v496, %v500
      %v534 = vmax.f32 %v502, 0.0
      %v535 = vmax.f32 %v503, 0.0
      %v536 = vmax.f32 %v504, 0.0
      %v537 = vmax.f32 %v505, 0.0
      %v538 = vmax.f32 %v506, 0.0
      %v539 = vmax.f32 %v507, 0.0
      %v540 = vmax.f32 %v508, 0.0
      %v541 = vmax.f32 %v509, 0.0
      %v542 = vmax.f32 %v510, 0.0
      %v543 = vmax.f32 %v511, 0.0
      %v544 = vmax.f32 %v512, 0.0
      %v545 = vmax.f32 %v513, 0.0
      %v546 = vmax.f32 %v514, 0.0
      %v547 = vmax.f32 %v515, 0.0
      %v548 = vmax.f32 %v516, 0.0
      %v549 = vmax.f32 %v517, 0.0
      %v550 = vmax.f32 %v518, 0.0
      %v551 = vmax.f32 %v519, 0.0
      %v552 = vmax.f32 %v520, 0.0
      %v553 = vmax.f32 %v521, 0.0
      %v554 = vmax.f32 %v522, 0.0
      %v555 = vmax.f32 %v523, 0.0
      %v556 = vmax.f32 %v524, 0.0
      %v557 = vmax.f32 %v525, 0.0
      %v558 = vmax.f32 %v526, 0.0
      %v559 = vmax.f32 %v527, 0.0
      %v560 = vmax.f32 %v528, 0.0
      %v561 = vmax.f32 %v529, 0.0
      %v562 = vmax.f32 %v530, 0.0
      %v563 = vmax.f32 %v531, 0.0
      %v564 = vmax.f32 %v532, 0.0
      %v565 = vmax.f32 %v533, 0.0
      %v566 = vld [vmem:[%s7] sm:$0x1]
      %v568 = vperm.slane %v566, 0
      %569 = vrot.lane.b32.xlu0 %v568, 8
      %v570 = vpop.permute.xlu0 %569
      %v572 = vadd.f32 %v419, %v570
      %v573 = vadd.f32 %v421, %v570
      %v574 = vadd.f32 %v424, %v570
      %v575 = vadd.f32 %v426, %v570
      %v576 = vadd.f32 %v429, %v570
      %v577 = vadd.f32 %v431, %v570
      %v578 = vadd.f32 %v434, %v570
      %v579 = vadd.f32 %v436, %v570
      %v580 = vadd.f32 %v439, %v570
      %v581 = vadd.f32 %v441, %v570
      %v582 = vadd.f32 %v444, %v570
      %v583 = vadd.f32 %v446, %v570
      %v584 = vadd.f32 %v449, %v570
      %v585 = vadd.f32 %v451, %v570
      %v586 = vadd.f32 %v454, %v570
      %v587 = vadd.f32 %v456, %v570
      %v588 = vadd.f32 %v459, %v570
      %v589 = vadd.f32 %v461, %v570
      %v590 = vadd.f32 %v464, %v570
      %v591 = vadd.f32 %v466, %v570
      %v592 = vadd.f32 %v469, %v570
      %v593 = vadd.f32 %v471, %v570
      %v594 = vadd.f32 %v474, %v570
      %v595 = vadd.f32 %v476, %v570
      %v596 = vadd.f32 %v479, %v570
      %v597 = vadd.f32 %v481, %v570
      %v598 = vadd.f32 %v484, %v570
      %v599 = vadd.f32 %v486, %v570
      %v600 = vadd.f32 %v489, %v570
      %v601 = vadd.f32 %v491, %v570
      %v602 = vadd.f32 %v494, %v570
      %v603 = vadd.f32 %v496, %v570
      %vm604 = vcmask 64512
      %605 = vst.msk [vmem:[#allocation2] sm:$0xff] %vm604, 0.0
      %606 = vst.msk [vmem:[#allocation2 + $0x8] sm:$0xff] %vm604, 0.0
      %607 = vst.msk [vmem:[#allocation2 + $0x10] sm:$0xff] %vm604, 0.0
      %s608 = scalar_lea.vmem [#allocation2], 408
      %609 = vst.msk [vmem:[%s608] sm:$0xff] %vm604, 0.0
      %610 = vst.msk [vmem:[%s608 + $0x8] sm:$0xff] %vm604, 0.0
      %611 = vst.msk [vmem:[%s608 + $0x10] sm:$0xff] %vm604, 0.0
      %s612 = scalar_lea.vmem [#allocation2], 24
      %vm613 = vcmask 57344
      %614 = vst.msk [vmem:[%s612] sm:$0x1] %vm613, 0.0
      %615 = vst.msk [vmem:[%s612 + $0x18] sm:$0x1] %vm613, 0.0
      %616 = vst.msk [vmem:[%s612 + $0x30] sm:$0x1] %vm613, 0.0
      %617 = vst.msk [vmem:[%s612 + $0x48] sm:$0x1] %vm613, 0.0
      %618 = vst.msk [vmem:[%s612 + $0x60] sm:$0x1] %vm613, 0.0
      %619 = vst.msk [vmem:[%s612 + $0x78] sm:$0x1] %vm613, 0.0
      %620 = vst.msk [vmem:[%s612 + $0x90] sm:$0x1] %vm613, 0.0
      %621 = vst.msk [vmem:[%s612 + $0xa8] sm:$0x1] %vm613, 0.0
      %622 = vst.msk [vmem:[%s612 + $0xc0] sm:$0x1] %vm613, 0.0
      %623 = vst.msk [vmem:[%s612 + $0xd8] sm:$0x1] %vm613, 0.0
      %624 = vst.msk [vmem:[%s612 + $0xf0] sm:$0x1] %vm613, 0.0
      %625 = vst.msk [vmem:[%s612 + $0x108] sm:$0x1] %vm613, 0.0
      %626 = vst.msk [vmem:[%s612 + $0x120] sm:$0x1] %vm613, 0.0
      %627 = vst.msk [vmem:[%s612 + $0x138] sm:$0x1] %vm613, 0.0
      %628 = vst.msk [vmem:[%s612 + $0x150] sm:$0x1] %vm613, 0.0
      %629 = vst.msk [vmem:[%s612 + $0x168] sm:$0x1] %vm613, 0.0
      %630 = vst.msk [vmem:[%s612 + $0x11] sm:$0x1] %vm613, 0.0
      %631 = vst.msk [vmem:[%s612 + $0x29] sm:$0x1] %vm613, 0.0
      %632 = vst.msk [vmem:[%s612 + $0x41] sm:$0x1] %vm613, 0.0
      %633 = vst.msk [vmem:[%s612 + $0x59] sm:$0x1] %vm613, 0.0
      %634 = vst.msk [vmem:[%s612 + $0x71] sm:$0x1] %vm613, 0.0
      %635 = vst.msk [vmem:[%s612 + $0x89] sm:$0x1] %vm613, 0.0
      %636 = vst.msk [vmem:[%s612 + $0xa1] sm:$0x1] %vm613, 0.0
      %637 = vst.msk [vmem:[%s612 + $0xb9] sm:$0x1] %vm613, 0.0
      %638 = vst.msk [vmem:[%s612 + $0xd1] sm:$0x1] %vm613, 0.0
      %639 = vst.msk [vmem:[%s612 + $0xe9] sm:$0x1] %vm613, 0.0
      %640 = vst.msk [vmem:[%s612 + $0x101] sm:$0x1] %vm613, 0.0
      %641 = vst.msk [vmem:[%s612 + $0x119] sm:$0x1] %vm613, 0.0
      %642 = vst.msk [vmem:[%s612 + $0x131] sm:$0x1] %vm613, 0.0
      %643 = vst.msk [vmem:[%s612 + $0x149] sm:$0x1] %vm613, 0.0
      %644 = vst.msk [vmem:[%s612 + $0x161] sm:$0x1] %vm613, 0.0
      %645 = vst.msk [vmem:[%s612 + $0x179] sm:$0x1] %vm613, 0.0
      %646 = vst.msk [vmem:[%s612 + $0x1] sm:$0xff] %vm604, %v534
      %647 = vst.msk [vmem:[%s612 + $0x9] sm:$0xff] %vm604, %v535
      %648 = vst.msk [vmem:[%s612 + $0x19] sm:$0xff] %vm604, %v536
      %649 = vst.msk [vmem:[%s612 + $0x21] sm:$0xff] %vm604, %v537
      %650 = vst.msk [vmem:[%s612 + $0x31] sm:$0xff] %vm604, %v538
      %651 = vst.msk [vmem:[%s612 + $0x39] sm:$0xff] %vm604, %v539
      %652 = vst.msk [vmem:[%s612 + $0x49] sm:$0xff] %vm604, %v540
      %653 = vst.msk [vmem:[%s612 + $0x51] sm:$0xff] %vm604, %v541
      %654 = vst.msk [vmem:[%s612 + $0x61] sm:$0xff] %vm604, %v542
      %655 = vst.msk [vmem:[%s612 + $0x69] sm:$0xff] %vm604, %v543
      %656 = vst.msk [vmem:[%s612 + $0x79] sm:$0xff] %vm604, %v544
      %657 = vst.msk [vmem:[%s612 + $0x81] sm:$0xff] %vm604, %v545
      %658 = vst.msk [vmem:[%s612 + $0x91] sm:$0xff] %vm604, %v546
      %659 = vst.msk [vmem:[%s612 + $0x99] sm:$0xff] %vm604, %v547
      %660 = vst.msk [vmem:[%s612 + $0xa9] sm:$0xff] %vm604, %v548
      %661 = vst.msk [vmem:[%s612 + $0xb1] sm:$0xff] %vm604, %v549
      %662 = vst.msk [vmem:[%s612 + $0xc1] sm:$0xff] %vm604, %v550
      %663 = vst.msk [vmem:[%s612 + $0xc9] sm:$0xff] %vm604, %v551
      %664 = vst.msk [vmem:[%s612 + $0xd9] sm:$0xff] %vm604, %v552
      %665 = vst.msk [vmem:[%s612 + $0xe1] sm:$0xff] %vm604, %v553
      %666 = vst.msk [vmem:[%s612 + $0xf1] sm:$0xff] %vm604, %v554
      %667 = vst.msk [vmem:[%s612 + $0xf9] sm:$0xff] %vm604, %v555
      %668 = vst.msk [vmem:[%s612 + $0x109] sm:$0xff] %vm604, %v556
      %669 = vst.msk [vmem:[%s612 + $0x111] sm:$0xff] %vm604, %v557
      %670 = vst.msk [vmem:[%s612 + $0x121] sm:$0xff] %vm604, %v558
      %671 = vst.msk [vmem:[%s612 + $0x129] sm:$0xff] %vm604, %v559
      %672 = vst.msk [vmem:[%s612 + $0x139] sm:$0xff] %vm604, %v560
      %673 = vst.msk [vmem:[%s612 + $0x141] sm:$0xff] %vm604, %v561
      %674 = vst.msk [vmem:[%s612 + $0x151] sm:$0xff] %vm604, %v562
      %675 = vst.msk [vmem:[%s612 + $0x159] sm:$0xff] %vm604, %v563
      %676 = vst.msk [vmem:[%s612 + $0x169] sm:$0xff] %vm604, %v564
      %677 = vst.msk [vmem:[%s612 + $0x171] sm:$0xff] %vm604, %v565
      %v678 = vld [vmem:[#allocation2] sm:$0xff]
      %v679 = vld [vmem:[#allocation2 + $0x8] sm:$0xff]
      %v680 = vld [vmem:[#allocation2 + $0x18] sm:$0xff]
      %v681 = vld [vmem:[#allocation2 + $0x20] sm:$0xff]
      %v682 = vld [vmem:[#allocation2 + $0x30] sm:$0xff]
      %v683 = vld [vmem:[#allocation2 + $0x38] sm:$0xff]
      %v684 = vld [vmem:[#allocation2 + $0x48] sm:$0xff]
      %v685 = vld [vmem:[#allocation2 + $0x50] sm:$0xff]
      %v686 = vld [vmem:[#allocation2 + $0x60] sm:$0xff]
      %v687 = vld [vmem:[#allocation2 + $0x68] sm:$0xff]
      %v688 = vld [vmem:[#allocation2 + $0x78] sm:$0xff]
      %v689 = vld [vmem:[#allocation2 + $0x80] sm:$0xff]
      %v690 = vld [vmem:[#allocation2 + $0x90] sm:$0xff]
      %v691 = vld [vmem:[#allocation2 + $0x98] sm:$0xff]
      %v692 = vld [vmem:[#allocation2 + $0xa8] sm:$0xff]
      %v693 = vld [vmem:[#allocation2 + $0xb0] sm:$0xff]
      %v694 = vld [vmem:[#allocation2 + $0xc0] sm:$0xff]
      %v695 = vld [vmem:[#allocation2 + $0xc8] sm:$0xff]
      %v696 = vld [vmem:[#allocation2 + $0xd8] sm:$0xff]
      %v697 = vld [vmem:[#allocation2 + $0xe0] sm:$0xff]
      %v698 = vld [vmem:[#allocation2 + $0xf0] sm:$0xff]
      %v699 = vld [vmem:[#allocation2 + $0xf8] sm:$0xff]
      %v700 = vld [vmem:[#allocation2 + $0x108] sm:$0xff]
      %v701 = vld [vmem:[#allocation2 + $0x110] sm:$0xff]
      %v702 = vld [vmem:[#allocation2 + $0x120] sm:$0xff]
      %v703 = vld [vmem:[#allocation2 + $0x128] sm:$0xff]
      %v704 = vld [vmem:[#allocation2 + $0x138] sm:$0xff]
      %v705 = vld [vmem:[#allocation2 + $0x140] sm:$0xff]
      %v706 = vld [vmem:[#allocation2 + $0x150] sm:$0xff]
      %v707 = vld [vmem:[#allocation2 + $0x158] sm:$0xff]
      %v708 = vld [vmem:[#allocation2 + $0x168] sm:$0xff]
      %v709 = vld [vmem:[#allocation2 + $0x170] sm:$0xff]
      %v710 = vpack.c.bf16 %v679, %v678
      %v711 = vpack.c.bf16 %v681, %v680
      %v712 = vpack.c.bf16 %v683, %v682
      %v713 = vpack.c.bf16 %v685, %v684
      %v714 = vpack.c.bf16 %v687, %v686
      %v715 = vpack.c.bf16 %v689, %v688
      %v716 = vpack.c.bf16 %v691, %v690
      %v717 = vpack.c.bf16 %v693, %v692
      %v718 = vpack.c.bf16 %v695, %v694
      %v719 = vpack.c.bf16 %v697, %v696
      %v720 = vpack.c.bf16 %v699, %v698
      %v721 = vpack.c.bf16 %v701, %v700
      %v722 = vpack.c.bf16 %v703, %v702
      %v723 = vpack.c.bf16 %v705, %v704
      %v724 = vpack.c.bf16 %v707, %v706
      %v725 = vpack.c.bf16 %v709, %v708
      %v726 = vld [vmem:[%s3] sm:$0xf]
      %v727 = vld [vmem:[#allocation2 + $0x1] sm:$0xff]
      %v728 = vld [vmem:[#allocation2 + $0x9] sm:$0xff]
      %v729 = vld [vmem:[#allocation2 + $0x19] sm:$0xff]
      %v730 = vld [vmem:[#allocation2 + $0x21] sm:$0xff]
      %v731 = vld [vmem:[#allocation2 + $0x31] sm:$0xff]
      %v732 = vld [vmem:[#allocation2 + $0x39] sm:$0xff]
      %v733 = vld [vmem:[#allocation2 + $0x49] sm:$0xff]
      %v734 = vld [vmem:[#allocation2 + $0x51] sm:$0xff]
      %v735 = vld [vmem:[#allocation2 + $0x61] sm:$0xff]
      %v736 = vld [vmem:[#allocation2 + $0x69] sm:$0xff]
      %v737 = vld [vmem:[#allocation2 + $0x79] sm:$0xff]
      %v738 = vld [vmem:[#allocation2 + $0x81] sm:$0xff]
      %v739 = vld [vmem:[#allocation2 + $0x91] sm:$0xff]
      %v740 = vld [vmem:[#allocation2 + $0x99] sm:$0xff]
      %v741 = vld [vmem:[#allocation2 + $0xa9] sm:$0xff]
      %v742 = vld [vmem:[#allocation2 + $0xb1] sm:$0xff]
      %v743 = vld [vmem:[#allocation2 + $0xc1] sm:$0xff]
      %v744 = vld [vmem:[#allocation2 + $0xc9] sm:$0xff]
      %v745 = vld [vmem:[#allocation2 + $0xd9] sm:$0xff]
      %v746 = vld [vmem:[#allocation2 + $0xe1] sm:$0xff]
      %v747 = vld [vmem:[#allocation2 + $0xf1] sm:$0xff]
      %v748 = vld [vmem:[#allocation2 + $0xf9] sm:$0xff]
      %v749 = vld [vmem:[#allocation2 + $0x109] sm:$0xff]
      %v750 = vld [vmem:[#allocation2 + $0x111] sm:$0xff]
      %v751 = vld [vmem:[#allocation2 + $0x121] sm:$0xff]
      %v752 = vld [vmem:[#allocation2 + $0x129] sm:$0xff]
      %v753 = vld [vmem:[#allocation2 + $0x139] sm:$0xff]
      %v754 = vld [vmem:[#allocation2 + $0x141] sm:$0xff]
      %v755 = vld [vmem:[#allocation2 + $0x151] sm:$0xff]
      %v756 = vld [vmem:[#allocation2 + $0x159] sm:$0xff]
      %v757 = vld [vmem:[#allocation2 + $0x169] sm:$0xff]
      %v758 = vld [vmem:[#allocation2 + $0x171] sm:$0xff]
      %v759 = vpack.c.bf16 %v728, %v727
      %v760 = vpack.c.bf16 %v730, %v729
      %v761 = vpack.c.bf16 %v732, %v731
      %v762 = vpack.c.bf16 %v734, %v733
      %v763 = vpack.c.bf16 %v736, %v735
      %v764 = vpack.c.bf16 %v738, %v737
      %v765 = vpack.c.bf16 %v740, %v739
      %v766 = vpack.c.bf16 %v742, %v741
      %v767 = vpack.c.bf16 %v744, %v743
      %v768 = vpack.c.bf16 %v746, %v745
      %v769 = vpack.c.bf16 %v748, %v747
      %v770 = vpack.c.bf16 %v750, %v749
      %v771 = vpack.c.bf16 %v752, %v751
      %v772 = vpack.c.bf16 %v754, %v753
      %v773 = vpack.c.bf16 %v756, %v755
      %v774 = vpack.c.bf16 %v758, %v757
      %s775 = scalar_lea.vmem %s3, 4
      %v776 = vld [vmem:[%s775] sm:$0xf]
      %v778 = vsel %vm604, %v759, 0
      %v781 = vsel %vm604, %v760, 0
      %v784 = vsel %vm604, %v761, 0
      %v787 = vsel %vm604, %v762, 0
      %v790 = vsel %vm604, %v763, 0
      %v793 = vsel %vm604, %v764, 0
      %v796 = vsel %vm604, %v765, 0
      %v799 = vsel %vm604, %v766, 0
      %v802 = vsel %vm604, %v767, 0
      %v805 = vsel %vm604, %v768, 0
      %v808 = vsel %vm604, %v769, 0
      %v811 = vsel %vm604, %v770, 0
      %v814 = vsel %vm604, %v771, 0
      %v817 = vsel %vm604, %v772, 0
      %v820 = vsel %vm604, %v773, 0
      %v823 = vsel %vm604, %v774, 0
      %vm825 = vcmask 1043456
      %v827 = vsel %vm825, %v776, 0
      %829 = vmatpush.bf16.msra.mxu0 0
      %830 = vmatpush.bf16.msra.mxu0 0
      %831 = vmatpush.bf16.msra.mxu0 0
      %832 = vmatpush.bf16.msra.mxu0 0
      %833 = vmatpush.bf16.msra.mxu0 0
      %834 = vmatpush.bf16.msra.mxu0 0
      %835 = vmatpush.bf16.msra.mxu0 0
      %836 = vmatpush.bf16.msra.mxu0 %v827
      %837 = vmatmul.bf16.gmra.mxu0 %v778
      %v838 = vpop.f32.mrf.mxu0
      %v839 = vadd.f32 0.0, %v838
      %v840 = vpop.f32.mrf.mxu0
      %v841 = vadd.f32 0.0, %v840
      %842 = vmatmul.bf16.gmra.mxu0 %v781
      %v843 = vpop.f32.mrf.mxu0
      %v844 = vadd.f32 0.0, %v843
      %v845 = vpop.f32.mrf.mxu0
      %v846 = vadd.f32 0.0, %v845
      %847 = vmatmul.bf16.gmra.mxu0 %v784
      %v848 = vpop.f32.mrf.mxu0
      %v849 = vadd.f32 0.0, %v848
      %v850 = vpop.f32.mrf.mxu0
      %v851 = vadd.f32 0.0, %v850
      %852 = vmatmul.bf16.gmra.mxu0 %v787
      %v853 = vpop.f32.mrf.mxu0
      %v854 = vadd.f32 0.0, %v853
      %v855 = vpop.f32.mrf.mxu0
      %v856 = vadd.f32 0.0, %v855
      %857 = vmatmul.bf16.gmra.mxu0 %v790
      %v858 = vpop.f32.mrf.mxu0
      %v859 = vadd.f32 0.0, %v858
      %v860 = vpop.f32.mrf.mxu0
      %v861 = vadd.f32 0.0, %v860
      %862 = vmatmul.bf16.gmra.mxu0 %v793
      %v863 = vpop.f32.mrf.mxu0
      %v864 = vadd.f32 0.0, %v863
      %v865 = vpop.f32.mrf.mxu0
      %v866 = vadd.f32 0.0, %v865
      %867 = vmatmul.bf16.gmra.mxu0 %v796
      %v868 = vpop.f32.mrf.mxu0
      %v869 = vadd.f32 0.0, %v868
      %v870 = vpop.f32.mrf.mxu0
      %v871 = vadd.f32 0.0, %v870
      %872 = vmatmul.bf16.gmra.mxu0 %v799
      %v873 = vpop.f32.mrf.mxu0
      %v874 = vadd.f32 0.0, %v873
      %v875 = vpop.f32.mrf.mxu0
      %v876 = vadd.f32 0.0, %v875
      %877 = vmatmul.bf16.gmra.mxu0 %v802
      %v878 = vpop.f32.mrf.mxu0
      %v879 = vadd.f32 0.0, %v878
      %v880 = vpop.f32.mrf.mxu0
      %v881 = vadd.f32 0.0, %v880
      %882 = vmatmul.bf16.gmra.mxu0 %v805
      %v883 = vpop.f32.mrf.mxu0
      %v884 = vadd.f32 0.0, %v883
      %v885 = vpop.f32.mrf.mxu0
      %v886 = vadd.f32 0.0, %v885
      %887 = vmatmul.bf16.gmra.mxu0 %v808
      %v888 = vpop.f32.mrf.mxu0
      %v889 = vadd.f32 0.0, %v888
      %v890 = vpop.f32.mrf.mxu0
      %v891 = vadd.f32 0.0, %v890
      %892 = vmatmul.bf16.gmra.mxu0 %v811
      %v893 = vpop.f32.mrf.mxu0
      %v894 = vadd.f32 0.0, %v893
      %v895 = vpop.f32.mrf.mxu0
      %v896 = vadd.f32 0.0, %v895
      %897 = vmatmul.bf16.gmra.mxu0 %v814
      %v898 = vpop.f32.mrf.mxu0
      %v899 = vadd.f32 0.0, %v898
      %v900 = vpop.f32.mrf.mxu0
      %v901 = vadd.f32 0.0, %v900
      %902 = vmatmul.bf16.gmra.mxu0 %v817
      %v903 = vpop.f32.mrf.mxu0
      %v904 = vadd.f32 0.0, %v903
      %v905 = vpop.f32.mrf.mxu0
      %v906 = vadd.f32 0.0, %v905
      %907 = vmatmul.bf16.gmra.mxu0 %v820
      %v908 = vpop.f32.mrf.mxu0
      %v909 = vadd.f32 0.0, %v908
      %v910 = vpop.f32.mrf.mxu0
      %v911 = vadd.f32 0.0, %v910
      %912 = vmatmul.bf16.gmra.mxu0 %v823
      %v913 = vpop.f32.mrf.mxu0
      %v914 = vadd.f32 0.0, %v913
      %v915 = vpop.f32.mrf.mxu0
      %v916 = vadd.f32 0.0, %v915
      %917 = vdwg.mxu0
      %v919 = vsel %vm604, %v710, 0
      %v922 = vsel %vm604, %v711, 0
      %v925 = vsel %vm604, %v712, 0
      %v928 = vsel %vm604, %v713, 0
      %v931 = vsel %vm604, %v714, 0
      %v934 = vsel %vm604, %v715, 0
      %v937 = vsel %vm604, %v716, 0
      %v940 = vsel %vm604, %v717, 0
      %v943 = vsel %vm604, %v718, 0
      %v946 = vsel %vm604, %v719, 0
      %v949 = vsel %vm604, %v720, 0
      %v952 = vsel %vm604, %v721, 0
      %v955 = vsel %vm604, %v722, 0
      %v958 = vsel %vm604, %v723, 0
      %v961 = vsel %vm604, %v724, 0
      %v964 = vsel %vm604, %v725, 0
      %v967 = vsel %vm825, %v726, 0
      %969 = vmatpush.bf16.msra.mxu0 0
      %970 = vmatpush.bf16.msra.mxu0 0
      %971 = vmatpush.bf16.msra.mxu0 0
      %972 = vmatpush.bf16.msra.mxu0 0
      %973 = vmatpush.bf16.msra.mxu0 0
      %974 = vmatpush.bf16.msra.mxu0 0
      %975 = vmatpush.bf16.msra.mxu0 0
      %976 = vmatpush.bf16.msra.mxu0 %v967
      %977 = vmatmul.bf16.gmra.mxu0 %v919
      %v978 = vpop.f32.mrf.mxu0
      %v979 = vadd.f32 %v839, %v978
      %v980 = vpop.f32.mrf.mxu0
      %v981 = vadd.f32 %v841, %v980
      %982 = vmatmul.bf16.gmra.mxu0 %v922
      %v983 = vpop.f32.mrf.mxu0
      %v984 = vadd.f32 %v844, %v983
      %v985 = vpop.f32.mrf.mxu0
      %v986 = vadd.f32 %v846, %v985
      %987 = vmatmul.bf16.gmra.mxu0 %v925
      %v988 = vpop.f32.mrf.mxu0
      %v989 = vadd.f32 %v849, %v988
      %v990 = vpop.f32.mrf.mxu0
      %v991 = vadd.f32 %v851, %v990
      %992 = vmatmul.bf16.gmra.mxu0 %v928
      %v993 = vpop.f32.mrf.mxu0
      %v994 = vadd.f32 %v854, %v993
      %v995 = vpop.f32.mrf.mxu0
      %v996 = vadd.f32 %v856, %v995
      %997 = vmatmul.bf16.gmra.mxu0 %v931
      %v998 = vpop.f32.mrf.mxu0
      %v999 = vadd.f32 %v859, %v998
      %v1000 = vpop.f32.mrf.mxu0
      %v1001 = vadd.f32 %v861, %v1000
      %1002 = vmatmul.bf16.gmra.mxu0 %v934
      %v1003 = vpop.f32.mrf.mxu0
      %v1004 = vadd.f32 %v864, %v1003
      %v1005 = vpop.f32.mrf.mxu0
      %v1006 = vadd.f32 %v866, %v1005
      %1007 = vmatmul.bf16.gmra.mxu0 %v937
      %v1008 = vpop.f32.mrf.mxu0
      %v1009 = vadd.f32 %v869, %v1008
      %v1010 = vpop.f32.mrf.mxu0
      %v1011 = vadd.f32 %v871, %v1010
      %1012 = vmatmul.bf16.gmra.mxu0 %v940
      %v1013 = vpop.f32.mrf.mxu0
      %v1014 = vadd.f32 %v874, %v1013
      %v1015 = vpop.f32.mrf.mxu0
      %v1016 = vadd.f32 %v876, %v1015
      %1017 = vmatmul.bf16.gmra.mxu0 %v943
      %v1018 = vpop.f32.mrf.mxu0
      %v1019 = vadd.f32 %v879, %v1018
      %v1020 = vpop.f32.mrf.mxu0
      %v1021 = vadd.f32 %v881, %v1020
      %1022 = vmatmul.bf16.gmra.mxu0 %v946
      %v1023 = vpop.f32.mrf.mxu0
      %v1024 = vadd.f32 %v884, %v1023
      %v1025 = vpop.f32.mrf.mxu0
      %v1026 = vadd.f32 %v886, %v1025
      %1027 = vmatmul.bf16.gmra.mxu0 %v949
      %v1028 = vpop.f32.mrf.mxu0
      %v1029 = vadd.f32 %v889, %v1028
      %v1030 = vpop.f32.mrf.mxu0
      %v1031 = vadd.f32 %v891, %v1030
      %1032 = vmatmul.bf16.gmra.mxu0 %v952
      %v1033 = vpop.f32.mrf.mxu0
      %v1034 = vadd.f32 %v894, %v1033
      %v1035 = vpop.f32.mrf.mxu0
      %v1036 = vadd.f32 %v896, %v1035
      %1037 = vmatmul.bf16.gmra.mxu0 %v955
      %v1038 = vpop.f32.mrf.mxu0
      %v1039 = vadd.f32 %v899, %v1038
      %v1040 = vpop.f32.mrf.mxu0
      %v1041 = vadd.f32 %v901, %v1040
      %1042 = vmatmul.bf16.gmra.mxu0 %v958
      %v1043 = vpop.f32.mrf.mxu0
      %v1044 = vadd.f32 %v904, %v1043
      %v1045 = vpop.f32.mrf.mxu0
      %v1046 = vadd.f32 %v906, %v1045
      %1047 = vmatmul.bf16.gmra.mxu0 %v961
      %v1048 = vpop.f32.mrf.mxu0
      %v1049 = vadd.f32 %v909, %v1048
      %v1050 = vpop.f32.mrf.mxu0
      %v1051 = vadd.f32 %v911, %v1050
      %1052 = vmatmul.bf16.gmra.mxu0 %v964
      %v1053 = vpop.f32.mrf.mxu0
      %v1054 = vadd.f32 %v914, %v1053
      %v1055 = vpop.f32.mrf.mxu0
      %v1056 = vadd.f32 %v916, %v1055
      %1057 = vdwg.mxu0
      %v1058 = vld [vmem:[#allocation2 + $0x2] sm:$0xff]
      %v1059 = vld [vmem:[#allocation2 + $0xa] sm:$0xff]
      %v1060 = vld [vmem:[#allocation2 + $0x1a] sm:$0xff]
      %v1061 = vld [vmem:[#allocation2 + $0x22] sm:$0xff]
      %v1062 = vld [vmem:[#allocation2 + $0x32] sm:$0xff]
      %v1063 = vld [vmem:[#allocation2 + $0x3a] sm:$0xff]
      %v1064 = vld [vmem:[#allocation2 + $0x4a] sm:$0xff]
      %v1065 = vld [vmem:[#allocation2 + $0x52] sm:$0xff]
      %v1066 = vld [vmem:[#allocation2 + $0x62] sm:$0xff]
      %v1067 = vld [vmem:[#allocation2 + $0x6a] sm:$0xff]
      %v1068 = vld [vmem:[#allocation2 + $0x7a] sm:$0xff]
      %v1069 = vld [vmem:[#allocation2 + $0x82] sm:$0xff]
      %v1070 = vld [vmem:[#allocation2 + $0x92] sm:$0xff]
      %v1071 = vld [vmem:[#allocation2 + $0x9a] sm:$0xff]
      %v1072 = vld [vmem:[#allocation2 + $0xaa] sm:$0xff]
      %v1073 = vld [vmem:[#allocation2 + $0xb2] sm:$0xff]
      %v1074 = vld [vmem:[#allocation2 + $0xc2] sm:$0xff]
      %v1075 = vld [vmem:[#allocation2 + $0xca] sm:$0xff]
      %v1076 = vld [vmem:[#allocation2 + $0xda] sm:$0xff]
      %v1077 = vld [vmem:[#allocation2 + $0xe2] sm:$0xff]
      %v1078 = vld [vmem:[#allocation2 + $0xf2] sm:$0xff]
      %v1079 = vld [vmem:[#allocation2 + $0xfa] sm:$0xff]
      %v1080 = vld [vmem:[#allocation2 + $0x10a] sm:$0xff]
      %v1081 = vld [vmem:[#allocation2 + $0x112] sm:$0xff]
      %v1082 = vld [vmem:[#allocation2 + $0x122] sm:$0xff]
      %v1083 = vld [vmem:[#allocation2 + $0x12a] sm:$0xff]
      %v1084 = vld [vmem:[#allocation2 + $0x13a] sm:$0xff]
      %v1085 = vld [vmem:[#allocation2 + $0x142] sm:$0xff]
      %v1086 = vld [vmem:[#allocation2 + $0x152] sm:$0xff]
      %v1087 = vld [vmem:[#allocation2 + $0x15a] sm:$0xff]
      %v1088 = vld [vmem:[#allocation2 + $0x16a] sm:$0xff]
      %v1089 = vld [vmem:[#allocation2 + $0x172] sm:$0xff]
      %v1090 = vpack.c.bf16 %v1059, %v1058
      %v1091 = vpack.c.bf16 %v1061, %v1060
      %v1092 = vpack.c.bf16 %v1063, %v1062
      %v1093 = vpack.c.bf16 %v1065, %v1064
      %v1094 = vpack.c.bf16 %v1067, %v1066
      %v1095 = vpack.c.bf16 %v1069, %v1068
      %v1096 = vpack.c.bf16 %v1071, %v1070
      %v1097 = vpack.c.bf16 %v1073, %v1072
      %v1098 = vpack.c.bf16 %v1075, %v1074
      %v1099 = vpack.c.bf16 %v1077, %v1076
      %v1100 = vpack.c.bf16 %v1079, %v1078
      %v1101 = vpack.c.bf16 %v1081, %v1080
      %v1102 = vpack.c.bf16 %v1083, %v1082
      %v1103 = vpack.c.bf16 %v1085, %v1084
      %v1104 = vpack.c.bf16 %v1087, %v1086
      %v1105 = vpack.c.bf16 %v1089, %v1088
      %s1106 = scalar_lea.vmem %s3, 8
      %v1107 = vld [vmem:[%s1106] sm:$0xf]
      %v1109 = vsel %vm604, %v1090, 0
      %v1112 = vsel %vm604, %v1091, 0
      %v1115 = vsel %vm604, %v1092, 0
      %v1118 = vsel %vm604, %v1093, 0
      %v1121 = vsel %vm604, %v1094, 0
      %v1124 = vsel %vm604, %v1095, 0
      %v1127 = vsel %vm604, %v1096, 0
      %v1130 = vsel %vm604, %v1097, 0
      %v1133 = vsel %vm604, %v1098, 0
      %v1136 = vsel %vm604, %v1099, 0
      %v1139 = vsel %vm604, %v1100, 0
      %v1142 = vsel %vm604, %v1101, 0
      %v1145 = vsel %vm604, %v1102, 0
      %v1148 = vsel %vm604, %v1103, 0
      %v1151 = vsel %vm604, %v1104, 0
      %v1154 = vsel %vm604, %v1105, 0
      %v1157 = vsel %vm825, %v1107, 0
      %1159 = vmatpush.bf16.msra.mxu0 0
      %1160 = vmatpush.bf16.msra.mxu0 0
      %1161 = vmatpush.bf16.msra.mxu0 0
      %1162 = vmatpush.bf16.msra.mxu0 0
      %1163 = vmatpush.bf16.msra.mxu0 0
      %1164 = vmatpush.bf16.msra.mxu0 0
      %1165 = vmatpush.bf16.msra.mxu0 0
      %1166 = vmatpush.bf16.msra.mxu0 %v1157
      %1167 = vmatmul.bf16.gmra.mxu0 %v1109
      %v1168 = vpop.f32.mrf.mxu0
      %v1169 = vadd.f32 0.0, %v1168
      %v1170 = vpop.f32.mrf.mxu0
      %v1171 = vadd.f32 0.0, %v1170
      %1172 = vmatmul.bf16.gmra.mxu0 %v1112
      %v1173 = vpop.f32.mrf.mxu0
      %v1174 = vadd.f32 0.0, %v1173
      %v1175 = vpop.f32.mrf.mxu0
      %v1176 = vadd.f32 0.0, %v1175
      %1177 = vmatmul.bf16.gmra.mxu0 %v1115
      %v1178 = vpop.f32.mrf.mxu0
      %v1179 = vadd.f32 0.0, %v1178
      %v1180 = vpop.f32.mrf.mxu0
      %v1181 = vadd.f32 0.0, %v1180
      %1182 = vmatmul.bf16.gmra.mxu0 %v1118
      %v1183 = vpop.f32.mrf.mxu0
      %v1184 = vadd.f32 0.0, %v1183
      %v1185 = vpop.f32.mrf.mxu0
      %v1186 = vadd.f32 0.0, %v1185
      %1187 = vmatmul.bf16.gmra.mxu0 %v1121
      %v1188 = vpop.f32.mrf.mxu0
      %v1189 = vadd.f32 0.0, %v1188
      %v1190 = vpop.f32.mrf.mxu0
      %v1191 = vadd.f32 0.0, %v1190
      %1192 = vmatmul.bf16.gmra.mxu0 %v1124
      %v1193 = vpop.f32.mrf.mxu0
      %v1194 = vadd.f32 0.0, %v1193
      %v1195 = vpop.f32.mrf.mxu0
      %v1196 = vadd.f32 0.0, %v1195
      %1197 = vmatmul.bf16.gmra.mxu0 %v1127
      %v1198 = vpop.f32.mrf.mxu0
      %v1199 = vadd.f32 0.0, %v1198
      %v1200 = vpop.f32.mrf.mxu0
      %v1201 = vadd.f32 0.0, %v1200
      %1202 = vmatmul.bf16.gmra.mxu0 %v1130
      %v1203 = vpop.f32.mrf.mxu0
      %v1204 = vadd.f32 0.0, %v1203
      %v1205 = vpop.f32.mrf.mxu0
      %v1206 = vadd.f32 0.0, %v1205
      %1207 = vmatmul.bf16.gmra.mxu0 %v1133
      %v1208 = vpop.f32.mrf.mxu0
      %v1209 = vadd.f32 0.0, %v1208
      %v1210 = vpop.f32.mrf.mxu0
      %v1211 = vadd.f32 0.0, %v1210
      %1212 = vmatmul.bf16.gmra.mxu0 %v1136
      %v1213 = vpop.f32.mrf.mxu0
      %v1214 = vadd.f32 0.0, %v1213
      %v1215 = vpop.f32.mrf.mxu0
      %v1216 = vadd.f32 0.0, %v1215
      %1217 = vmatmul.bf16.gmra.mxu0 %v1139
      %v1218 = vpop.f32.mrf.mxu0
      %v1219 = vadd.f32 0.0, %v1218
      %v1220 = vpop.f32.mrf.mxu0
      %v1221 = vadd.f32 0.0, %v1220
      %1222 = vmatmul.bf16.gmra.mxu0 %v1142
      %v1223 = vpop.f32.mrf.mxu0
      %v1224 = vadd.f32 0.0, %v1223
      %v1225 = vpop.f32.mrf.mxu0
      %v1226 = vadd.f32 0.0, %v1225
      %1227 = vmatmul.bf16.gmra.mxu0 %v1145
      %v1228 = vpop.f32.mrf.mxu0
      %v1229 = vadd.f32 0.0, %v1228
      %v1230 = vpop.f32.mrf.mxu0
      %v1231 = vadd.f32 0.0, %v1230
      %1232 = vmatmul.bf16.gmra.mxu0 %v1148
      %v1233 = vpop.f32.mrf.mxu0
      %v1234 = vadd.f32 0.0, %v1233
      %v1235 = vpop.f32.mrf.mxu0
      %v1236 = vadd.f32 0.0, %v1235
      %1237 = vmatmul.bf16.gmra.mxu0 %v1151
      %v1238 = vpop.f32.mrf.mxu0
      %v1239 = vadd.f32 0.0, %v1238
      %v1240 = vpop.f32.mrf.mxu0
      %v1241 = vadd.f32 0.0, %v1240
      %1242 = vmatmul.bf16.gmra.mxu0 %v1154
      %v1243 = vpop.f32.mrf.mxu0
      %v1244 = vadd.f32 0.0, %v1243
      %v1245 = vpop.f32.mrf.mxu0
      %v1246 = vadd.f32 0.0, %v1245
      %1247 = vdwg.mxu0
      %v1248 = vadd.f32 %v979, %v1169
      %v1249 = vadd.f32 %v981, %v1171
      %v1250 = vadd.f32 %v984, %v1174
      %v1251 = vadd.f32 %v986, %v1176
      %v1252 = vadd.f32 %v989, %v1179
      %v1253 = vadd.f32 %v991, %v1181
      %v1254 = vadd.f32 %v994, %v1184
      %v1255 = vadd.f32 %v996, %v1186
      %v1256 = vadd.f32 %v999, %v1189
      %v1257 = vadd.f32 %v1001, %v1191
      %v1258 = vadd.f32 %v1004, %v1194
      %v1259 = vadd.f32 %v1006, %v1196
      %v1260 = vadd.f32 %v1009, %v1199
      %v1261 = vadd.f32 %v1011, %v1201
      %v1262 = vadd.f32 %v1014, %v1204
      %v1263 = vadd.f32 %v1016, %v1206
      %v1264 = vadd.f32 %v1019, %v1209
      %v1265 = vadd.f32 %v1021, %v1211
      %v1266 = vadd.f32 %v1024, %v1214
      %v1267 = vadd.f32 %v1026, %v1216
      %v1268 = vadd.f32 %v1029, %v1219
      %v1269 = vadd.f32 %v1031, %v1221
      %v1270 = vadd.f32 %v1034, %v1224
      %v1271 = vadd.f32 %v1036, %v1226
      %v1272 = vadd.f32 %v1039, %v1229
      %v1273 = vadd.f32 %v1041, %v1231
      %v1274 = vadd.f32 %v1044, %v1234
      %v1275 = vadd.f32 %v1046, %v1236
      %v1276 = vadd.f32 %v1049, %v1239
      %v1277 = vadd.f32 %v1051, %v1241
      %v1278 = vadd.f32 %v1054, %v1244
      %v1279 = vadd.f32 %v1056, %v1246
      %v1280 = vld [vmem:[%s612] sm:$0xff]
      %v1281 = vld [vmem:[%s612 + $0x8] sm:$0xff]
      %v1282 = vld [vmem:[%s612 + $0x18] sm:$0xff]
      %v1283 = vld [vmem:[%s612 + $0x20] sm:$0xff]
      %v1284 = vld [vmem:[%s612 + $0x30] sm:$0xff]
      %v1285 = vld [vmem:[%s612 + $0x38] sm:$0xff]
      %v1286 = vld [vmem:[%s612 + $0x48] sm:$0xff]
      %v1287 = vld [vmem:[%s612 + $0x50] sm:$0xff]
      %v1288 = vld [vmem:[%s612 + $0x60] sm:$0xff]
      %v1289 = vld [vmem:[%s612 + $0x68] sm:$0xff]
      %v1290 = vld [vmem:[%s612 + $0x78] sm:$0xff]
      %v1291 = vld [vmem:[%s612 + $0x80] sm:$0xff]
      %v1292 = vld [vmem:[%s612 + $0x90] sm:$0xff]
      %v1293 = vld [vmem:[%s612 + $0x98] sm:$0xff]
      %v1294 = vld [vmem:[%s612 + $0xa8] sm:$0xff]
      %v1295 = vld [vmem:[%s612 + $0xb0] sm:$0xff]
      %v1296 = vld [vmem:[%s612 + $0xc0] sm:$0xff]
      %v1297 = vld [vmem:[%s612 + $0xc8] sm:$0xff]
      %v1298 = vld [vmem:[%s612 + $0xd8] sm:$0xff]
      %v1299 = vld [vmem:[%s612 + $0xe0] sm:$0xff]
      %v1300 = vld [vmem:[%s612 + $0xf0] sm:$0xff]
      %v1301 = vld [vmem:[%s612 + $0xf8] sm:$0xff]
      %v1302 = vld [vmem:[%s612 + $0x108] sm:$0xff]
      %v1303 = vld [vmem:[%s612 + $0x110] sm:$0xff]
      %v1304 = vld [vmem:[%s612 + $0x120] sm:$0xff]
      %v1305 = vld [vmem:[%s612 + $0x128] sm:$0xff]
      %v1306 = vld [vmem:[%s612 + $0x138] sm:$0xff]
      %v1307 = vld [vmem:[%s612 + $0x140] sm:$0xff]
      %v1308 = vld [vmem:[%s612 + $0x150] sm:$0xff]
      %v1309 = vld [vmem:[%s612 + $0x158] sm:$0xff]
      %v1310 = vld [vmem:[%s612 + $0x168] sm:$0xff]
      %v1311 = vld [vmem:[%s612 + $0x170] sm:$0xff]
      %v1312 = vpack.c.bf16 %v1281, %v1280
      %v1313 = vpack.c.bf16 %v1283, %v1282
      %v1314 = vpack.c.bf16 %v1285, %v1284
      %v1315 = vpack.c.bf16 %v1287, %v1286
      %v1316 = vpack.c.bf16 %v1289, %v1288
      %v1317 = vpack.c.bf16 %v1291, %v1290
      %v1318 = vpack.c.bf16 %v1293, %v1292
      %v1319 = vpack.c.bf16 %v1295, %v1294
      %v1320 = vpack.c.bf16 %v1297, %v1296
      %v1321 = vpack.c.bf16 %v1299, %v1298
      %v1322 = vpack.c.bf16 %v1301, %v1300
      %v1323 = vpack.c.bf16 %v1303, %v1302
      %v1324 = vpack.c.bf16 %v1305, %v1304
      %v1325 = vpack.c.bf16 %v1307, %v1306
      %v1326 = vpack.c.bf16 %v1309, %v1308
      %v1327 = vpack.c.bf16 %v1311, %v1310
      %s1328 = scalar_lea.vmem %s3, 12
      %v1329 = vld [vmem:[%s1328] sm:$0xf]
      %v1331 = vsel %vm604, %v1312, 0
      %v1334 = vsel %vm604, %v1313, 0
      %v1337 = vsel %vm604, %v1314, 0
      %v1340 = vsel %vm604, %v1315, 0
      %v1343 = vsel %vm604, %v1316, 0
      %v1346 = vsel %vm604, %v1317, 0
      %v1349 = vsel %vm604, %v1318, 0
      %v1352 = vsel %vm604, %v1319, 0
      %v1355 = vsel %vm604, %v1320, 0
      %v1358 = vsel %vm604, %v1321, 0
      %v1361 = vsel %vm604, %v1322, 0
      %v1364 = vsel %vm604, %v1323, 0
      %v1367 = vsel %vm604, %v1324, 0
      %v1370 = vsel %vm604, %v1325, 0
      %v1373 = vsel %vm604, %v1326, 0
      %v1376 = vsel %vm604, %v1327, 0
      %v1379 = vsel %vm825, %v1329, 0
      %1381 = vmatpush.bf16.msra.mxu0 0
      %1382 = vmatpush.bf16.msra.mxu0 0
      %1383 = vmatpush.bf16.msra.mxu0 0
      %1384 = vmatpush.bf16.msra.mxu0 0
      %1385 = vmatpush.bf16.msra.mxu0 0
      %1386 = vmatpush.bf16.msra.mxu0 0
      %1387 = vmatpush.bf16.msra.mxu0 0
      %1388 = vmatpush.bf16.msra.mxu0 %v1379
      %1389 = vmatmul.bf16.gmra.mxu0 %v1331
      %v1390 = vpop.f32.mrf.mxu0
      %v1391 = vadd.f32 0.0, %v1390
      %v1392 = vpop.f32.mrf.mxu0
      %v1393 = vadd.f32 0.0, %v1392
      %1394 = vmatmul.bf16.gmra.mxu0 %v1334
      %v1395 = vpop.f32.mrf.mxu0
      %v1396 = vadd.f32 0.0, %v1395
      %v1397 = vpop.f32.mrf.mxu0
      %v1398 = vadd.f32 0.0, %v1397
      %1399 = vmatmul.bf16.gmra.mxu0 %v1337
      %v1400 = vpop.f32.mrf.mxu0
      %v1401 = vadd.f32 0.0, %v1400
      %v1402 = vpop.f32.mrf.mxu0
      %v1403 = vadd.f32 0.0, %v1402
      %1404 = vmatmul.bf16.gmra.mxu0 %v1340
      %v1405 = vpop.f32.mrf.mxu0
      %v1406 = vadd.f32 0.0, %v1405
      %v1407 = vpop.f32.mrf.mxu0
      %v1408 = vadd.f32 0.0, %v1407
      %1409 = vmatmul.bf16.gmra.mxu0 %v1343
      %v1410 = vpop.f32.mrf.mxu0
      %v1411 = vadd.f32 0.0, %v1410
      %v1412 = vpop.f32.mrf.mxu0
      %v1413 = vadd.f32 0.0, %v1412
      %1414 = vmatmul.bf16.gmra.mxu0 %v1346
      %v1415 = vpop.f32.mrf.mxu0
      %v1416 = vadd.f32 0.0, %v1415
      %v1417 = vpop.f32.mrf.mxu0
      %v1418 = vadd.f32 0.0, %v1417
      %1419 = vmatmul.bf16.gmra.mxu0 %v1349
      %v1420 = vpop.f32.mrf.mxu0
      %v1421 = vadd.f32 0.0, %v1420
      %v1422 = vpop.f32.mrf.mxu0
      %v1423 = vadd.f32 0.0, %v1422
      %1424 = vmatmul.bf16.gmra.mxu0 %v1352
      %v1425 = vpop.f32.mrf.mxu0
      %v1426 = vadd.f32 0.0, %v1425
      %v1427 = vpop.f32.mrf.mxu0
      %v1428 = vadd.f32 0.0, %v1427
      %1429 = vmatmul.bf16.gmra.mxu0 %v1355
      %v1430 = vpop.f32.mrf.mxu0
      %v1431 = vadd.f32 0.0, %v1430
      %v1432 = vpop.f32.mrf.mxu0
      %v1433 = vadd.f32 0.0, %v1432
      %1434 = vmatmul.bf16.gmra.mxu0 %v1358
      %v1435 = vpop.f32.mrf.mxu0
      %v1436 = vadd.f32 0.0, %v1435
      %v1437 = vpop.f32.mrf.mxu0
      %v1438 = vadd.f32 0.0, %v1437
      %1439 = vmatmul.bf16.gmra.mxu0 %v1361
      %v1440 = vpop.f32.mrf.mxu0
      %v1441 = vadd.f32 0.0, %v1440
      %v1442 = vpop.f32.mrf.mxu0
      %v1443 = vadd.f32 0.0, %v1442
      %1444 = vmatmul.bf16.gmra.mxu0 %v1364
      %v1445 = vpop.f32.mrf.mxu0
      %v1446 = vadd.f32 0.0, %v1445
      %v1447 = vpop.f32.mrf.mxu0
      %v1448 = vadd.f32 0.0, %v1447
      %1449 = vmatmul.bf16.gmra.mxu0 %v1367
      %v1450 = vpop.f32.mrf.mxu0
      %v1451 = vadd.f32 0.0, %v1450
      %v1452 = vpop.f32.mrf.mxu0
      %v1453 = vadd.f32 0.0, %v1452
      %1454 = vmatmul.bf16.gmra.mxu0 %v1370
      %v1455 = vpop.f32.mrf.mxu0
      %v1456 = vadd.f32 0.0, %v1455
      %v1457 = vpop.f32.mrf.mxu0
      %v1458 = vadd.f32 0.0, %v1457
      %1459 = vmatmul.bf16.gmra.mxu0 %v1373
      %v1460 = vpop.f32.mrf.mxu0
      %v1461 = vadd.f32 0.0, %v1460
      %v1462 = vpop.f32.mrf.mxu0
      %v1463 = vadd.f32 0.0, %v1462
      %1464 = vmatmul.bf16.gmra.mxu0 %v1376
      %v1465 = vpop.f32.mrf.mxu0
      %v1466 = vadd.f32 0.0, %v1465
      %v1467 = vpop.f32.mrf.mxu0
      %v1468 = vadd.f32 0.0, %v1467
      %1469 = vdwg.mxu0
      %v1470 = vadd.f32 %v1248, %v1391
      %v1471 = vadd.f32 %v1249, %v1393
      %v1472 = vadd.f32 %v1250, %v1396
      %v1473 = vadd.f32 %v1251, %v1398
      %v1474 = vadd.f32 %v1252, %v1401
      %v1475 = vadd.f32 %v1253, %v1403
      %v1476 = vadd.f32 %v1254, %v1406
      %v1477 = vadd.f32 %v1255, %v1408
      %v1478 = vadd.f32 %v1256, %v1411
      %v1479 = vadd.f32 %v1257, %v1413
      %v1480 = vadd.f32 %v1258, %v1416
      %v1481 = vadd.f32 %v1259, %v1418
      %v1482 = vadd.f32 %v1260, %v1421
      %v1483 = vadd.f32 %v1261, %v1423
      %v1484 = vadd.f32 %v1262, %v1426
      %v1485 = vadd.f32 %v1263, %v1428
      %v1486 = vadd.f32 %v1264, %v1431
      %v1487 = vadd.f32 %v1265, %v1433
      %v1488 = vadd.f32 %v1266, %v1436
      %v1489 = vadd.f32 %v1267, %v1438
      %v1490 = vadd.f32 %v1268, %v1441
      %v1491 = vadd.f32 %v1269, %v1443
      %v1492 = vadd.f32 %v1270, %v1446
      %v1493 = vadd.f32 %v1271, %v1448
      %v1494 = vadd.f32 %v1272, %v1451
      %v1495 = vadd.f32 %v1273, %v1453
      %v1496 = vadd.f32 %v1274, %v1456
      %v1497 = vadd.f32 %v1275, %v1458
      %v1498 = vadd.f32 %v1276, %v1461
      %v1499 = vadd.f32 %v1277, %v1463
      %v1500 = vadd.f32 %v1278, %v1466
      %v1501 = vadd.f32 %v1279, %v1468
      %v1502 = vld [vmem:[%s612 + $0x1] sm:$0xff]
      %v1503 = vld [vmem:[%s612 + $0x9] sm:$0xff]
      %v1504 = vld [vmem:[%s612 + $0x19] sm:$0xff]
      %v1505 = vld [vmem:[%s612 + $0x21] sm:$0xff]
      %v1506 = vld [vmem:[%s612 + $0x31] sm:$0xff]
      %v1507 = vld [vmem:[%s612 + $0x39] sm:$0xff]
      %v1508 = vld [vmem:[%s612 + $0x49] sm:$0xff]
      %v1509 = vld [vmem:[%s612 + $0x51] sm:$0xff]
      %v1510 = vld [vmem:[%s612 + $0x61] sm:$0xff]
      %v1511 = vld [vmem:[%s612 + $0x69] sm:$0xff]
      %v1512 = vld [vmem:[%s612 + $0x79] sm:$0xff]
      %v1513 = vld [vmem:[%s612 + $0x81] sm:$0xff]
      %v1514 = vld [vmem:[%s612 + $0x91] sm:$0xff]
      %v1515 = vld [vmem:[%s612 + $0x99] sm:$0xff]
      %v1516 = vld [vmem:[%s612 + $0xa9] sm:$0xff]
      %v1517 = vld [vmem:[%s612 + $0xb1] sm:$0xff]
      %v1518 = vld [vmem:[%s612 + $0xc1] sm:$0xff]
      %v1519 = vld [vmem:[%s612 + $0xc9] sm:$0xff]
      %v1520 = vld [vmem:[%s612 + $0xd9] sm:$0xff]
      %v1521 = vld [vmem:[%s612 + $0xe1] sm:$0xff]
      %v1522 = vld [vmem:[%s612 + $0xf1] sm:$0xff]
      %v1523 = vld [vmem:[%s612 + $0xf9] sm:$0xff]
      %v1524 = vld [vmem:[%s612 + $0x109] sm:$0xff]
      %v1525 = vld [vmem:[%s612 + $0x111] sm:$0xff]
      %v1526 = vld [vmem:[%s612 + $0x121] sm:$0xff]
      %v1527 = vld [vmem:[%s612 + $0x129] sm:$0xff]
      %v1528 = vld [vmem:[%s612 + $0x139] sm:$0xff]
      %v1529 = vld [vmem:[%s612 + $0x141] sm:$0xff]
      %v1530 = vld [vmem:[%s612 + $0x151] sm:$0xff]
      %v1531 = vld [vmem:[%s612 + $0x159] sm:$0xff]
      %v1532 = vld [vmem:[%s612 + $0x169] sm:$0xff]
      %v1533 = vld [vmem:[%s612 + $0x171] sm:$0xff]
      %v1534 = vpack.c.bf16 %v1503, %v1502
      %v1535 = vpack.c.bf16 %v1505, %v1504
      %v1536 = vpack.c.bf16 %v1507, %v1506
      %v1537 = vpack.c.bf16 %v1509, %v1508
      %v1538 = vpack.c.bf16 %v1511, %v1510
      %v1539 = vpack.c.bf16 %v1513, %v1512
      %v1540 = vpack.c.bf16 %v1515, %v1514
      %v1541 = vpack.c.bf16 %v1517, %v1516
      %v1542 = vpack.c.bf16 %v1519, %v1518
      %v1543 = vpack.c.bf16 %v1521, %v1520
      %v1544 = vpack.c.bf16 %v1523, %v1522
      %v1545 = vpack.c.bf16 %v1525, %v1524
      %v1546 = vpack.c.bf16 %v1527, %v1526
      %v1547 = vpack.c.bf16 %v1529, %v1528
      %v1548 = vpack.c.bf16 %v1531, %v1530
      %v1549 = vpack.c.bf16 %v1533, %v1532
      %s1550 = scalar_lea.vmem %s3, 16
      %v1551 = vld [vmem:[%s1550] sm:$0xf]
      %v1553 = vsel %vm604, %v1534, 0
      %v1556 = vsel %vm604, %v1535, 0
      %v1559 = vsel %vm604, %v1536, 0
      %v1562 = vsel %vm604, %v1537, 0
      %v1565 = vsel %vm604, %v1538, 0
      %v1568 = vsel %vm604, %v1539, 0
      %v1571 = vsel %vm604, %v1540, 0
      %v1574 = vsel %vm604, %v1541, 0
      %v1577 = vsel %vm604, %v1542, 0
      %v1580 = vsel %vm604, %v1543, 0
      %v1583 = vsel %vm604, %v1544, 0
      %v1586 = vsel %vm604, %v1545, 0
      %v1589 = vsel %vm604, %v1546, 0
      %v1592 = vsel %vm604, %v1547, 0
      %v1595 = vsel %vm604, %v1548, 0
      %v1598 = vsel %vm604, %v1549, 0
      %v1601 = vsel %vm825, %v1551, 0
      %1603 = vmatpush.bf16.msra.mxu0 0
      %1604 = vmatpush.bf16.msra.mxu0 0
      %1605 = vmatpush.bf16.msra.mxu0 0
      %1606 = vmatpush.bf16.msra.mxu0 0
      %1607 = vmatpush.bf16.msra.mxu0 0
      %1608 = vmatpush.bf16.msra.mxu0 0
      %1609 = vmatpush.bf16.msra.mxu0 0
      %1610 = vmatpush.bf16.msra.mxu0 %v1601
      %1611 = vmatmul.bf16.gmra.mxu0 %v1553
      %v1612 = vpop.f32.mrf.mxu0
      %v1613 = vadd.f32 0.0, %v1612
      %v1614 = vpop.f32.mrf.mxu0
      %v1615 = vadd.f32 0.0, %v1614
      %1616 = vmatmul.bf16.gmra.mxu0 %v1556
      %v1617 = vpop.f32.mrf.mxu0
      %v1618 = vadd.f32 0.0, %v1617
      %v1619 = vpop.f32.mrf.mxu0
      %v1620 = vadd.f32 0.0, %v1619
      %1621 = vmatmul.bf16.gmra.mxu0 %v1559
      %v1622 = vpop.f32.mrf.mxu0
      %v1623 = vadd.f32 0.0, %v1622
      %v1624 = vpop.f32.mrf.mxu0
      %v1625 = vadd.f32 0.0, %v1624
      %1626 = vmatmul.bf16.gmra.mxu0 %v1562
      %v1627 = vpop.f32.mrf.mxu0
      %v1628 = vadd.f32 0.0, %v1627
      %v1629 = vpop.f32.mrf.mxu0
      %v1630 = vadd.f32 0.0, %v1629
      %1631 = vmatmul.bf16.gmra.mxu0 %v1565
      %v1632 = vpop.f32.mrf.mxu0
      %v1633 = vadd.f32 0.0, %v1632
      %v1634 = vpop.f32.mrf.mxu0
      %v1635 = vadd.f32 0.0, %v1634
      %1636 = vmatmul.bf16.gmra.mxu0 %v1568
      %v1637 = vpop.f32.mrf.mxu0
      %v1638 = vadd.f32 0.0, %v1637
      %v1639 = vpop.f32.mrf.mxu0
      %v1640 = vadd.f32 0.0, %v1639
      %1641 = vmatmul.bf16.gmra.mxu0 %v1571
      %v1642 = vpop.f32.mrf.mxu0
      %v1643 = vadd.f32 0.0, %v1642
      %v1644 = vpop.f32.mrf.mxu0
      %v1645 = vadd.f32 0.0, %v1644
      %1646 = vmatmul.bf16.gmra.mxu0 %v1574
      %v1647 = vpop.f32.mrf.mxu0
      %v1648 = vadd.f32 0.0, %v1647
      %v1649 = vpop.f32.mrf.mxu0
      %v1650 = vadd.f32 0.0, %v1649
      %1651 = vmatmul.bf16.gmra.mxu0 %v1577
      %v1652 = vpop.f32.mrf.mxu0
      %v1653 = vadd.f32 0.0, %v1652
      %v1654 = vpop.f32.mrf.mxu0
      %v1655 = vadd.f32 0.0, %v1654
      %1656 = vmatmul.bf16.gmra.mxu0 %v1580
      %v1657 = vpop.f32.mrf.mxu0
      %v1658 = vadd.f32 0.0, %v1657
      %v1659 = vpop.f32.mrf.mxu0
      %v1660 = vadd.f32 0.0, %v1659
      %1661 = vmatmul.bf16.gmra.mxu0 %v1583
      %v1662 = vpop.f32.mrf.mxu0
      %v1663 = vadd.f32 0.0, %v1662
      %v1664 = vpop.f32.mrf.mxu0
      %v1665 = vadd.f32 0.0, %v1664
      %1666 = vmatmul.bf16.gmra.mxu0 %v1586
      %v1667 = vpop.f32.mrf.mxu0
      %v1668 = vadd.f32 0.0, %v1667
      %v1669 = vpop.f32.mrf.mxu0
      %v1670 = vadd.f32 0.0, %v1669
      %1671 = vmatmul.bf16.gmra.mxu0 %v1589
      %v1672 = vpop.f32.mrf.mxu0
      %v1673 = vadd.f32 0.0, %v1672
      %v1674 = vpop.f32.mrf.mxu0
      %v1675 = vadd.f32 0.0, %v1674
      %1676 = vmatmul.bf16.gmra.mxu0 %v1592
      %v1677 = vpop.f32.mrf.mxu0
      %v1678 = vadd.f32 0.0, %v1677
      %v1679 = vpop.f32.mrf.mxu0
      %v1680 = vadd.f32 0.0, %v1679
      %1681 = vmatmul.bf16.gmra.mxu0 %v1595
      %v1682 = vpop.f32.mrf.mxu0
      %v1683 = vadd.f32 0.0, %v1682
      %v1684 = vpop.f32.mrf.mxu0
      %v1685 = vadd.f32 0.0, %v1684
      %1686 = vmatmul.bf16.gmra.mxu0 %v1598
      %v1687 = vpop.f32.mrf.mxu0
      %v1688 = vadd.f32 0.0, %v1687
      %v1689 = vpop.f32.mrf.mxu0
      %v1690 = vadd.f32 0.0, %v1689
      %1691 = vdwg.mxu0
      %v1692 = vadd.f32 %v1470, %v1613
      %v1693 = vadd.f32 %v1471, %v1615
      %v1694 = vadd.f32 %v1472, %v1618
      %v1695 = vadd.f32 %v1473, %v1620
      %v1696 = vadd.f32 %v1474, %v1623
      %v1697 = vadd.f32 %v1475, %v1625
      %v1698 = vadd.f32 %v1476, %v1628
      %v1699 = vadd.f32 %v1477, %v1630
      %v1700 = vadd.f32 %v1478, %v1633
      %v1701 = vadd.f32 %v1479, %v1635
      %v1702 = vadd.f32 %v1480, %v1638
      %v1703 = vadd.f32 %v1481, %v1640
      %v1704 = vadd.f32 %v1482, %v1643
      %v1705 = vadd.f32 %v1483, %v1645
      %v1706 = vadd.f32 %v1484, %v1648
      %v1707 = vadd.f32 %v1485, %v1650
      %v1708 = vadd.f32 %v1486, %v1653
      %v1709 = vadd.f32 %v1487, %v1655
      %v1710 = vadd.f32 %v1488, %v1658
      %v1711 = vadd.f32 %v1489, %v1660
      %v1712 = vadd.f32 %v1490, %v1663
      %v1713 = vadd.f32 %v1491, %v1665
      %v1714 = vadd.f32 %v1492, %v1668
      %v1715 = vadd.f32 %v1493, %v1670
      %v1716 = vadd.f32 %v1494, %v1673
      %v1717 = vadd.f32 %v1495, %v1675
      %v1718 = vadd.f32 %v1496, %v1678
      %v1719 = vadd.f32 %v1497, %v1680
      %v1720 = vadd.f32 %v1498, %v1683
      %v1721 = vadd.f32 %v1499, %v1685
      %v1722 = vadd.f32 %v1500, %v1688
      %v1723 = vadd.f32 %v1501, %v1690
      %v1724 = vld [vmem:[%s612 + $0x2] sm:$0xff]
      %v1725 = vld [vmem:[%s612 + $0xa] sm:$0xff]
      %v1726 = vld [vmem:[%s612 + $0x1a] sm:$0xff]
      %v1727 = vld [vmem:[%s612 + $0x22] sm:$0xff]
      %v1728 = vld [vmem:[%s612 + $0x32] sm:$0xff]
      %v1729 = vld [vmem:[%s612 + $0x3a] sm:$0xff]
      %v1730 = vld [vmem:[%s612 + $0x4a] sm:$0xff]
      %v1731 = vld [vmem:[%s612 + $0x52] sm:$0xff]
      %v1732 = vld [vmem:[%s612 + $0x62] sm:$0xff]
      %v1733 = vld [vmem:[%s612 + $0x6a] sm:$0xff]
      %v1734 = vld [vmem:[%s612 + $0x7a] sm:$0xff]
      %v1735 = vld [vmem:[%s612 + $0x82] sm:$0xff]
      %v1736 = vld [vmem:[%s612 + $0x92] sm:$0xff]
      %v1737 = vld [vmem:[%s612 + $0x9a] sm:$0xff]
      %v1738 = vld [vmem:[%s612 + $0xaa] sm:$0xff]
      %v1739 = vld [vmem:[%s612 + $0xb2] sm:$0xff]
      %v1740 = vld [vmem:[%s612 + $0xc2] sm:$0xff]
      %v1741 = vld [vmem:[%s612 + $0xca] sm:$0xff]
      %v1742 = vld [vmem:[%s612 + $0xda] sm:$0xff]
      %v1743 = vld [vmem:[%s612 + $0xe2] sm:$0xff]
      %v1744 = vld [vmem:[%s612 + $0xf2] sm:$0xff]
      %v1745 = vld [vmem:[%s612 + $0xfa] sm:$0xff]
      %v1746 = vld [vmem:[%s612 + $0x10a] sm:$0xff]
      %v1747 = vld [vmem:[%s612 + $0x112] sm:$0xff]
      %v1748 = vld [vmem:[%s612 + $0x122] sm:$0xff]
      %v1749 = vld [vmem:[%s612 + $0x12a] sm:$0xff]
      %v1750 = vld [vmem:[%s612 + $0x13a] sm:$0xff]
      %v1751 = vld [vmem:[%s612 + $0x142] sm:$0xff]
      %v1752 = vld [vmem:[%s612 + $0x152] sm:$0xff]
      %v1753 = vld [vmem:[%s612 + $0x15a] sm:$0xff]
      %v1754 = vld [vmem:[%s612 + $0x16a] sm:$0xff]
      %v1755 = vld [vmem:[%s612 + $0x172] sm:$0xff]
      %v1756 = vpack.c.bf16 %v1725, %v1724
      %v1757 = vpack.c.bf16 %v1727, %v1726
      %v1758 = vpack.c.bf16 %v1729, %v1728
      %v1759 = vpack.c.bf16 %v1731, %v1730
      %v1760 = vpack.c.bf16 %v1733, %v1732
      %v1761 = vpack.c.bf16 %v1735, %v1734
      %v1762 = vpack.c.bf16 %v1737, %v1736
      %v1763 = vpack.c.bf16 %v1739, %v1738
      %v1764 = vpack.c.bf16 %v1741, %v1740
      %v1765 = vpack.c.bf16 %v1743, %v1742
      %v1766 = vpack.c.bf16 %v1745, %v1744
      %v1767 = vpack.c.bf16 %v1747, %v1746
      %v1768 = vpack.c.bf16 %v1749, %v1748
      %v1769 = vpack.c.bf16 %v1751, %v1750
      %v1770 = vpack.c.bf16 %v1753, %v1752
      %v1771 = vpack.c.bf16 %v1755, %v1754
      %s1772 = scalar_lea.vmem %s3, 20
      %v1773 = vld [vmem:[%s1772] sm:$0xf]
      %v1775 = vsel %vm604, %v1756, 0
      %v1778 = vsel %vm604, %v1757, 0
      %v1781 = vsel %vm604, %v1758, 0
      %v1784 = vsel %vm604, %v1759, 0
      %v1787 = vsel %vm604, %v1760, 0
      %v1790 = vsel %vm604, %v1761, 0
      %v1793 = vsel %vm604, %v1762, 0
      %v1796 = vsel %vm604, %v1763, 0
      %v1799 = vsel %vm604, %v1764, 0
      %v1802 = vsel %vm604, %v1765, 0
      %v1805 = vsel %vm604, %v1766, 0
      %v1808 = vsel %vm604, %v1767, 0
      %v1811 = vsel %vm604, %v1768, 0
      %v1814 = vsel %vm604, %v1769, 0
      %v1817 = vsel %vm604, %v1770, 0
      %v1820 = vsel %vm604, %v1771, 0
      %v1823 = vsel %vm825, %v1773, 0
      %1825 = vmatpush.bf16.msra.mxu0 0
      %1826 = vmatpush.bf16.msra.mxu0 0
      %1827 = vmatpush.bf16.msra.mxu0 0
      %1828 = vmatpush.bf16.msra.mxu0 0
      %1829 = vmatpush.bf16.msra.mxu0 0
      %1830 = vmatpush.bf16.msra.mxu0 0
      %1831 = vmatpush.bf16.msra.mxu0 0
      %1832 = vmatpush.bf16.msra.mxu0 %v1823
      %1833 = vmatmul.bf16.gmra.mxu0 %v1775
      %v1834 = vpop.f32.mrf.mxu0
      %v1835 = vadd.f32 0.0, %v1834
      %v1836 = vpop.f32.mrf.mxu0
      %v1837 = vadd.f32 0.0, %v1836
      %1838 = vmatmul.bf16.gmra.mxu0 %v1778
      %v1839 = vpop.f32.mrf.mxu0
      %v1840 = vadd.f32 0.0, %v1839
      %v1841 = vpop.f32.mrf.mxu0
      %v1842 = vadd.f32 0.0, %v1841
      %1843 = vmatmul.bf16.gmra.mxu0 %v1781
      %v1844 = vpop.f32.mrf.mxu0
      %v1845 = vadd.f32 0.0, %v1844
      %v1846 = vpop.f32.mrf.mxu0
      %v1847 = vadd.f32 0.0, %v1846
      %1848 = vmatmul.bf16.gmra.mxu0 %v1784
      %v1849 = vpop.f32.mrf.mxu0
      %v1850 = vadd.f32 0.0, %v1849
      %v1851 = vpop.f32.mrf.mxu0
      %v1852 = vadd.f32 0.0, %v1851
      %1853 = vmatmul.bf16.gmra.mxu0 %v1787
      %v1854 = vpop.f32.mrf.mxu0
      %v1855 = vadd.f32 0.0, %v1854
      %v1856 = vpop.f32.mrf.mxu0
      %v1857 = vadd.f32 0.0, %v1856
      %1858 = vmatmul.bf16.gmra.mxu0 %v1790
      %v1859 = vpop.f32.mrf.mxu0
      %v1860 = vadd.f32 0.0, %v1859
      %v1861 = vpop.f32.mrf.mxu0
      %v1862 = vadd.f32 0.0, %v1861
      %1863 = vmatmul.bf16.gmra.mxu0 %v1793
      %v1864 = vpop.f32.mrf.mxu0
      %v1865 = vadd.f32 0.0, %v1864
      %v1866 = vpop.f32.mrf.mxu0
      %v1867 = vadd.f32 0.0, %v1866
      %1868 = vmatmul.bf16.gmra.mxu0 %v1796
      %v1869 = vpop.f32.mrf.mxu0
      %v1870 = vadd.f32 0.0, %v1869
      %v1871 = vpop.f32.mrf.mxu0
      %v1872 = vadd.f32 0.0, %v1871
      %1873 = vmatmul.bf16.gmra.mxu0 %v1799
      %v1874 = vpop.f32.mrf.mxu0
      %v1875 = vadd.f32 0.0, %v1874
      %v1876 = vpop.f32.mrf.mxu0
      %v1877 = vadd.f32 0.0, %v1876
      %1878 = vmatmul.bf16.gmra.mxu0 %v1802
      %v1879 = vpop.f32.mrf.mxu0
      %v1880 = vadd.f32 0.0, %v1879
      %v1881 = vpop.f32.mrf.mxu0
      %v1882 = vadd.f32 0.0, %v1881
      %1883 = vmatmul.bf16.gmra.mxu0 %v1805
      %v1884 = vpop.f32.mrf.mxu0
      %v1885 = vadd.f32 0.0, %v1884
      %v1886 = vpop.f32.mrf.mxu0
      %v1887 = vadd.f32 0.0, %v1886
      %1888 = vmatmul.bf16.gmra.mxu0 %v1808
      %v1889 = vpop.f32.mrf.mxu0
      %v1890 = vadd.f32 0.0, %v1889
      %v1891 = vpop.f32.mrf.mxu0
      %v1892 = vadd.f32 0.0, %v1891
      %1893 = vmatmul.bf16.gmra.mxu0 %v1811
      %v1894 = vpop.f32.mrf.mxu0
      %v1895 = vadd.f32 0.0, %v1894
      %v1896 = vpop.f32.mrf.mxu0
      %v1897 = vadd.f32 0.0, %v1896
      %1898 = vmatmul.bf16.gmra.mxu0 %v1814
      %v1899 = vpop.f32.mrf.mxu0
      %v1900 = vadd.f32 0.0, %v1899
      %v1901 = vpop.f32.mrf.mxu0
      %v1902 = vadd.f32 0.0, %v1901
      %1903 = vmatmul.bf16.gmra.mxu0 %v1817
      %v1904 = vpop.f32.mrf.mxu0
      %v1905 = vadd.f32 0.0, %v1904
      %v1906 = vpop.f32.mrf.mxu0
      %v1907 = vadd.f32 0.0, %v1906
      %1908 = vmatmul.bf16.gmra.mxu0 %v1820
      %v1909 = vpop.f32.mrf.mxu0
      %v1910 = vadd.f32 0.0, %v1909
      %v1911 = vpop.f32.mrf.mxu0
      %v1912 = vadd.f32 0.0, %v1911
      %1913 = vdwg.mxu0
      %v1914 = vadd.f32 %v1692, %v1835
      %v1915 = vadd.f32 %v1693, %v1837
      %v1916 = vadd.f32 %v1694, %v1840
      %v1917 = vadd.f32 %v1695, %v1842
      %v1918 = vadd.f32 %v1696, %v1845
      %v1919 = vadd.f32 %v1697, %v1847
      %v1920 = vadd.f32 %v1698, %v1850
      %v1921 = vadd.f32 %v1699, %v1852
      %v1922 = vadd.f32 %v1700, %v1855
      %v1923 = vadd.f32 %v1701, %v1857
      %v1924 = vadd.f32 %v1702, %v1860
      %v1925 = vadd.f32 %v1703, %v1862
      %v1926 = vadd.f32 %v1704, %v1865
      %v1927 = vadd.f32 %v1705, %v1867
      %v1928 = vadd.f32 %v1706, %v1870
      %v1929 = vadd.f32 %v1707, %v1872
      %v1930 = vadd.f32 %v1708, %v1875
      %v1931 = vadd.f32 %v1709, %v1877
      %v1932 = vadd.f32 %v1710, %v1880
      %v1933 = vadd.f32 %v1711, %v1882
      %v1934 = vadd.f32 %v1712, %v1885
      %v1935 = vadd.f32 %v1713, %v1887
      %v1936 = vadd.f32 %v1714, %v1890
      %v1937 = vadd.f32 %v1715, %v1892
      %v1938 = vadd.f32 %v1716, %v1895
      %v1939 = vadd.f32 %v1717, %v1897
      %v1940 = vadd.f32 %v1718, %v1900
      %v1941 = vadd.f32 %v1719, %v1902
      %v1942 = vadd.f32 %v1720, %v1905
      %v1943 = vadd.f32 %v1721, %v1907
      %v1944 = vadd.f32 %v1722, %v1910
      %v1945 = vadd.f32 %v1723, %v1912
      %s1946 = scalar_lea.vmem [#allocation2], 48
      %v1947 = vld [vmem:[%s1946] sm:$0xff]
      %v1948 = vld [vmem:[%s1946 + $0x8] sm:$0xff]
      %v1949 = vld [vmem:[%s1946 + $0x18] sm:$0xff]
      %v1950 = vld [vmem:[%s1946 + $0x20] sm:$0xff]
      %v1951 = vld [vmem:[%s1946 + $0x30] sm:$0xff]
      %v1952 = vld [vmem:[%s1946 + $0x38] sm:$0xff]
      %v1953 = vld [vmem:[%s1946 + $0x48] sm:$0xff]
      %v1954 = vld [vmem:[%s1946 + $0x50] sm:$0xff]
      %v1955 = vld [vmem:[%s1946 + $0x60] sm:$0xff]
      %v1956 = vld [vmem:[%s1946 + $0x68] sm:$0xff]
      %v1957 = vld [vmem:[%s1946 + $0x78] sm:$0xff]
      %v1958 = vld [vmem:[%s1946 + $0x80] sm:$0xff]
      %v1959 = vld [vmem:[%s1946 + $0x90] sm:$0xff]
      %v1960 = vld [vmem:[%s1946 + $0x98] sm:$0xff]
      %v1961 = vld [vmem:[%s1946 + $0xa8] sm:$0xff]
      %v1962 = vld [vmem:[%s1946 + $0xb0] sm:$0xff]
      %v1963 = vld [vmem:[%s1946 + $0xc0] sm:$0xff]
      %v1964 = vld [vmem:[%s1946 + $0xc8] sm:$0xff]
      %v1965 = vld [vmem:[%s1946 + $0xd8] sm:$0xff]
      %v1966 = vld [vmem:[%s1946 + $0xe0] sm:$0xff]
      %v1967 = vld [vmem:[%s1946 + $0xf0] sm:$0xff]
      %v1968 = vld [vmem:[%s1946 + $0xf8] sm:$0xff]
      %v1969 = vld [vmem:[%s1946 + $0x108] sm:$0xff]
      %v1970 = vld [vmem:[%s1946 + $0x110] sm:$0xff]
      %v1971 = vld [vmem:[%s1946 + $0x120] sm:$0xff]
      %v1972 = vld [vmem:[%s1946 + $0x128] sm:$0xff]
      %v1973 = vld [vmem:[%s1946 + $0x138] sm:$0xff]
      %v1974 = vld [vmem:[%s1946 + $0x140] sm:$0xff]
      %v1975 = vld [vmem:[%s1946 + $0x150] sm:$0xff]
      %v1976 = vld [vmem:[%s1946 + $0x158] sm:$0xff]
      %v1977 = vld [vmem:[%s1946 + $0x168] sm:$0xff]
      %v1978 = vld [vmem:[%s1946 + $0x170] sm:$0xff]
      %v1979 = vpack.c.bf16 %v1948, %v1947
      %v1980 = vpack.c.bf16 %v1950, %v1949
      %v1981 = vpack.c.bf16 %v1952, %v1951
      %v1982 = vpack.c.bf16 %v1954, %v1953
      %v1983 = vpack.c.bf16 %v1956, %v1955
      %v1984 = vpack.c.bf16 %v1958, %v1957
      %v1985 = vpack.c.bf16 %v1960, %v1959
      %v1986 = vpack.c.bf16 %v1962, %v1961
      %v1987 = vpack.c.bf16 %v1964, %v1963
      %v1988 = vpack.c.bf16 %v1966, %v1965
      %v1989 = vpack.c.bf16 %v1968, %v1967
      %v1990 = vpack.c.bf16 %v1970, %v1969
      %v1991 = vpack.c.bf16 %v1972, %v1971
      %v1992 = vpack.c.bf16 %v1974, %v1973
      %v1993 = vpack.c.bf16 %v1976, %v1975
      %v1994 = vpack.c.bf16 %v1978, %v1977
      %s1995 = scalar_lea.vmem %s3, 24
      %v1996 = vld [vmem:[%s1995] sm:$0xf]
      %v1998 = vsel %vm604, %v1979, 0
      %v2001 = vsel %vm604, %v1980, 0
      %v2004 = vsel %vm604, %v1981, 0
      %v2007 = vsel %vm604, %v1982, 0
      %v2010 = vsel %vm604, %v1983, 0
      %v2013 = vsel %vm604, %v1984, 0
      %v2016 = vsel %vm604, %v1985, 0
      %v2019 = vsel %vm604, %v1986, 0
      %v2022 = vsel %vm604, %v1987, 0
      %v2025 = vsel %vm604, %v1988, 0
      %v2028 = vsel %vm604, %v1989, 0
      %v2031 = vsel %vm604, %v1990, 0
      %v2034 = vsel %vm604, %v1991, 0
      %v2037 = vsel %vm604, %v1992, 0
      %v2040 = vsel %vm604, %v1993, 0
      %v2043 = vsel %vm604, %v1994, 0
      %v2046 = vsel %vm825, %v1996, 0
      %2048 = vmatpush.bf16.msra.mxu0 0
      %2049 = vmatpush.bf16.msra.mxu0 0
      %2050 = vmatpush.bf16.msra.mxu0 0
      %2051 = vmatpush.bf16.msra.mxu0 0
      %2052 = vmatpush.bf16.msra.mxu0 0
      %2053 = vmatpush.bf16.msra.mxu0 0
      %2054 = vmatpush.bf16.msra.mxu0 0
      %2055 = vmatpush.bf16.msra.mxu0 %v2046
      %2056 = vmatmul.bf16.gmra.mxu0 %v1998
      %v2057 = vpop.f32.mrf.mxu0
      %v2058 = vadd.f32 0.0, %v2057
      %v2059 = vpop.f32.mrf.mxu0
      %v2060 = vadd.f32 0.0, %v2059
      %2061 = vmatmul.bf16.gmra.mxu0 %v2001
      %v2062 = vpop.f32.mrf.mxu0
      %v2063 = vadd.f32 0.0, %v2062
      %v2064 = vpop.f32.mrf.mxu0
      %v2065 = vadd.f32 0.0, %v2064
      %2066 = vmatmul.bf16.gmra.mxu0 %v2004
      %v2067 = vpop.f32.mrf.mxu0
      %v2068 = vadd.f32 0.0, %v2067
      %v2069 = vpop.f32.mrf.mxu0
      %v2070 = vadd.f32 0.0, %v2069
      %2071 = vmatmul.bf16.gmra.mxu0 %v2007
      %v2072 = vpop.f32.mrf.mxu0
      %v2073 = vadd.f32 0.0, %v2072
      %v2074 = vpop.f32.mrf.mxu0
      %v2075 = vadd.f32 0.0, %v2074
      %2076 = vmatmul.bf16.gmra.mxu0 %v2010
      %v2077 = vpop.f32.mrf.mxu0
      %v2078 = vadd.f32 0.0, %v2077
      %v2079 = vpop.f32.mrf.mxu0
      %v2080 = vadd.f32 0.0, %v2079
      %2081 = vmatmul.bf16.gmra.mxu0 %v2013
      %v2082 = vpop.f32.mrf.mxu0
      %v2083 = vadd.f32 0.0, %v2082
      %v2084 = vpop.f32.mrf.mxu0
      %v2085 = vadd.f32 0.0, %v2084
      %2086 = vmatmul.bf16.gmra.mxu0 %v2016
      %v2087 = vpop.f32.mrf.mxu0
      %v2088 = vadd.f32 0.0, %v2087
      %v2089 = vpop.f32.mrf.mxu0
      %v2090 = vadd.f32 0.0, %v2089
      %2091 = vmatmul.bf16.gmra.mxu0 %v2019
      %v2092 = vpop.f32.mrf.mxu0
      %v2093 = vadd.f32 0.0, %v2092
      %v2094 = vpop.f32.mrf.mxu0
      %v2095 = vadd.f32 0.0, %v2094
      %2096 = vmatmul.bf16.gmra.mxu0 %v2022
      %v2097 = vpop.f32.mrf.mxu0
      %v2098 = vadd.f32 0.0, %v2097
      %v2099 = vpop.f32.mrf.mxu0
      %v2100 = vadd.f32 0.0, %v2099
      %2101 = vmatmul.bf16.gmra.mxu0 %v2025
      %v2102 = vpop.f32.mrf.mxu0
      %v2103 = vadd.f32 0.0, %v2102
      %v2104 = vpop.f32.mrf.mxu0
      %v2105 = vadd.f32 0.0, %v2104
      %2106 = vmatmul.bf16.gmra.mxu0 %v2028
      %v2107 = vpop.f32.mrf.mxu0
      %v2108 = vadd.f32 0.0, %v2107
      %v2109 = vpop.f32.mrf.mxu0
      %v2110 = vadd.f32 0.0, %v2109
      %2111 = vmatmul.bf16.gmra.mxu0 %v2031
      %v2112 = vpop.f32.mrf.mxu0
      %v2113 = vadd.f32 0.0, %v2112
      %v2114 = vpop.f32.mrf.mxu0
      %v2115 = vadd.f32 0.0, %v2114
      %2116 = vmatmul.bf16.gmra.mxu0 %v2034
      %v2117 = vpop.f32.mrf.mxu0
      %v2118 = vadd.f32 0.0, %v2117
      %v2119 = vpop.f32.mrf.mxu0
      %v2120 = vadd.f32 0.0, %v2119
      %2121 = vmatmul.bf16.gmra.mxu0 %v2037
      %v2122 = vpop.f32.mrf.mxu0
      %v2123 = vadd.f32 0.0, %v2122
      %v2124 = vpop.f32.mrf.mxu0
      %v2125 = vadd.f32 0.0, %v2124
      %2126 = vmatmul.bf16.gmra.mxu0 %v2040
      %v2127 = vpop.f32.mrf.mxu0
      %v2128 = vadd.f32 0.0, %v2127
      %v2129 = vpop.f32.mrf.mxu0
      %v2130 = vadd.f32 0.0, %v2129
      %2131 = vmatmul.bf16.gmra.mxu0 %v2043
      %v2132 = vpop.f32.mrf.mxu0
      %v2133 = vadd.f32 0.0, %v2132
      %v2134 = vpop.f32.mrf.mxu0
      %v2135 = vadd.f32 0.0, %v2134
      %2136 = vdwg.mxu0
      %v2137 = vadd.f32 %v1914, %v2058
      %v2138 = vadd.f32 %v1915, %v2060
      %v2139 = vadd.f32 %v1916, %v2063
      %v2140 = vadd.f32 %v1917, %v2065
      %v2141 = vadd.f32 %v1918, %v2068
      %v2142 = vadd.f32 %v1919, %v2070
      %v2143 = vadd.f32 %v1920, %v2073
      %v2144 = vadd.f32 %v1921, %v2075
      %v2145 = vadd.f32 %v1922, %v2078
      %v2146 = vadd.f32 %v1923, %v2080
      %v2147 = vadd.f32 %v1924, %v2083
      %v2148 = vadd.f32 %v1925, %v2085
      %v2149 = vadd.f32 %v1926, %v2088
      %v2150 = vadd.f32 %v1927, %v2090
      %v2151 = vadd.f32 %v1928, %v2093
      %v2152 = vadd.f32 %v1929, %v2095
      %v2153 = vadd.f32 %v1930, %v2098
      %v2154 = vadd.f32 %v1931, %v2100
      %v2155 = vadd.f32 %v1932, %v2103
      %v2156 = vadd.f32 %v1933, %v2105
      %v2157 = vadd.f32 %v1934, %v2108
      %v2158 = vadd.f32 %v1935, %v2110
      %v2159 = vadd.f32 %v1936, %v2113
      %v2160 = vadd.f32 %v1937, %v2115
      %v2161 = vadd.f32 %v1938, %v2118
      %v2162 = vadd.f32 %v1939, %v2120
      %v2163 = vadd.f32 %v1940, %v2123
      %v2164 = vadd.f32 %v1941, %v2125
      %v2165 = vadd.f32 %v1942, %v2128
      %v2166 = vadd.f32 %v1943, %v2130
      %v2167 = vadd.f32 %v1944, %v2133
      %v2168 = vadd.f32 %v1945, %v2135
      %v2169 = vld [vmem:[%s1946 + $0x1] sm:$0xff]
      %v2170 = vld [vmem:[%s1946 + $0x9] sm:$0xff]
      %v2171 = vld [vmem:[%s1946 + $0x19] sm:$0xff]
      %v2172 = vld [vmem:[%s1946 + $0x21] sm:$0xff]
      %v2173 = vld [vmem:[%s1946 + $0x31] sm:$0xff]
      %v2174 = vld [vmem:[%s1946 + $0x39] sm:$0xff]
      %v2175 = vld [vmem:[%s1946 + $0x49] sm:$0xff]
      %v2176 = vld [vmem:[%s1946 + $0x51] sm:$0xff]
      %v2177 = vld [vmem:[%s1946 + $0x61] sm:$0xff]
      %v2178 = vld [vmem:[%s1946 + $0x69] sm:$0xff]
      %v2179 = vld [vmem:[%s1946 + $0x79] sm:$0xff]
      %v2180 = vld [vmem:[%s1946 + $0x81] sm:$0xff]
      %v2181 = vld [vmem:[%s1946 + $0x91] sm:$0xff]
      %v2182 = vld [vmem:[%s1946 + $0x99] sm:$0xff]
      %v2183 = vld [vmem:[%s1946 + $0xa9] sm:$0xff]
      %v2184 = vld [vmem:[%s1946 + $0xb1] sm:$0xff]
      %v2185 = vld [vmem:[%s1946 + $0xc1] sm:$0xff]
      %v2186 = vld [vmem:[%s1946 + $0xc9] sm:$0xff]
      %v2187 = vld [vmem:[%s1946 + $0xd9] sm:$0xff]
      %v2188 = vld [vmem:[%s1946 + $0xe1] sm:$0xff]
      %v2189 = vld [vmem:[%s1946 + $0xf1] sm:$0xff]
      %v2190 = vld [vmem:[%s1946 + $0xf9] sm:$0xff]
      %v2191 = vld [vmem:[%s1946 + $0x109] sm:$0xff]
      %v2192 = vld [vmem:[%s1946 + $0x111] sm:$0xff]
      %v2193 = vld [vmem:[%s1946 + $0x121] sm:$0xff]
      %v2194 = vld [vmem:[%s1946 + $0x129] sm:$0xff]
      %v2195 = vld [vmem:[%s1946 + $0x139] sm:$0xff]
      %v2196 = vld [vmem:[%s1946 + $0x141] sm:$0xff]
      %v2197 = vld [vmem:[%s1946 + $0x151] sm:$0xff]
      %v2198 = vld [vmem:[%s1946 + $0x159] sm:$0xff]
      %v2199 = vld [vmem:[%s1946 + $0x169] sm:$0xff]
      %v2200 = vld [vmem:[%s1946 + $0x171] sm:$0xff]
      %v2201 = vpack.c.bf16 %v2170, %v2169
      %v2202 = vpack.c.bf16 %v2172, %v2171
      %v2203 = vpack.c.bf16 %v2174, %v2173
      %v2204 = vpack.c.bf16 %v2176, %v2175
      %v2205 = vpack.c.bf16 %v2178, %v2177
      %v2206 = vpack.c.bf16 %v2180, %v2179
      %v2207 = vpack.c.bf16 %v2182, %v2181
      %v2208 = vpack.c.bf16 %v2184, %v2183
      %v2209 = vpack.c.bf16 %v2186, %v2185
      %v2210 = vpack.c.bf16 %v2188, %v2187
      %v2211 = vpack.c.bf16 %v2190, %v2189
      %v2212 = vpack.c.bf16 %v2192, %v2191
      %v2213 = vpack.c.bf16 %v2194, %v2193
      %v2214 = vpack.c.bf16 %v2196, %v2195
      %v2215 = vpack.c.bf16 %v2198, %v2197
      %v2216 = vpack.c.bf16 %v2200, %v2199
      %s2217 = scalar_lea.vmem %s3, 28
      %v2218 = vld [vmem:[%s2217] sm:$0xf]
      %v2220 = vsel %vm604, %v2201, 0
      %v2223 = vsel %vm604, %v2202, 0
      %v2226 = vsel %vm604, %v2203, 0
      %v2229 = vsel %vm604, %v2204, 0
      %v2232 = vsel %vm604, %v2205, 0
      %v2235 = vsel %vm604, %v2206, 0
      %v2238 = vsel %vm604, %v2207, 0
      %v2241 = vsel %vm604, %v2208, 0
      %v2244 = vsel %vm604, %v2209, 0
      %v2247 = vsel %vm604, %v2210, 0
      %v2250 = vsel %vm604, %v2211, 0
      %v2253 = vsel %vm604, %v2212, 0
      %v2256 = vsel %vm604, %v2213, 0
      %v2259 = vsel %vm604, %v2214, 0
      %v2262 = vsel %vm604, %v2215, 0
      %v2265 = vsel %vm604, %v2216, 0
      %v2268 = vsel %vm825, %v2218, 0
      %2270 = vmatpush.bf16.msra.mxu0 0
      %2271 = vmatpush.bf16.msra.mxu0 0
      %2272 = vmatpush.bf16.msra.mxu0 0
      %2273 = vmatpush.bf16.msra.mxu0 0
      %2274 = vmatpush.bf16.msra.mxu0 0
      %2275 = vmatpush.bf16.msra.mxu0 0
      %2276 = vmatpush.bf16.msra.mxu0 0
      %2277 = vmatpush.bf16.msra.mxu0 %v2268
      %2278 = vmatmul.bf16.gmra.mxu0 %v2220
      %v2279 = vpop.f32.mrf.mxu0
      %v2280 = vadd.f32 0.0, %v2279
      %v2281 = vpop.f32.mrf.mxu0
      %v2282 = vadd.f32 0.0, %v2281
      %2283 = vmatmul.bf16.gmra.mxu0 %v2223
      %v2284 = vpop.f32.mrf.mxu0
      %v2285 = vadd.f32 0.0, %v2284
      %v2286 = vpop.f32.mrf.mxu0
      %v2287 = vadd.f32 0.0, %v2286
      %2288 = vmatmul.bf16.gmra.mxu0 %v2226
      %v2289 = vpop.f32.mrf.mxu0
      %v2290 = vadd.f32 0.0, %v2289
      %v2291 = vpop.f32.mrf.mxu0
      %v2292 = vadd.f32 0.0, %v2291
      %2293 = vmatmul.bf16.gmra.mxu0 %v2229
      %v2294 = vpop.f32.mrf.mxu0
      %v2295 = vadd.f32 0.0, %v2294
      %v2296 = vpop.f32.mrf.mxu0
      %v2297 = vadd.f32 0.0, %v2296
      %2298 = vmatmul.bf16.gmra.mxu0 %v2232
      %v2299 = vpop.f32.mrf.mxu0
      %v2300 = vadd.f32 0.0, %v2299
      %v2301 = vpop.f32.mrf.mxu0
      %v2302 = vadd.f32 0.0, %v2301
      %2303 = vmatmul.bf16.gmra.mxu0 %v2235
      %v2304 = vpop.f32.mrf.mxu0
      %v2305 = vadd.f32 0.0, %v2304
      %v2306 = vpop.f32.mrf.mxu0
      %v2307 = vadd.f32 0.0, %v2306
      %2308 = vmatmul.bf16.gmra.mxu0 %v2238
      %v2309 = vpop.f32.mrf.mxu0
      %v2310 = vadd.f32 0.0, %v2309
      %v2311 = vpop.f32.mrf.mxu0
      %v2312 = vadd.f32 0.0, %v2311
      %2313 = vmatmul.bf16.gmra.mxu0 %v2241
      %v2314 = vpop.f32.mrf.mxu0
      %v2315 = vadd.f32 0.0, %v2314
      %v2316 = vpop.f32.mrf.mxu0
      %v2317 = vadd.f32 0.0, %v2316
      %2318 = vmatmul.bf16.gmra.mxu0 %v2244
      %v2319 = vpop.f32.mrf.mxu0
      %v2320 = vadd.f32 0.0, %v2319
      %v2321 = vpop.f32.mrf.mxu0
      %v2322 = vadd.f32 0.0, %v2321
      %2323 = vmatmul.bf16.gmra.mxu0 %v2247
      %v2324 = vpop.f32.mrf.mxu0
      %v2325 = vadd.f32 0.0, %v2324
      %v2326 = vpop.f32.mrf.mxu0
      %v2327 = vadd.f32 0.0, %v2326
      %2328 = vmatmul.bf16.gmra.mxu0 %v2250
      %v2329 = vpop.f32.mrf.mxu0
      %v2330 = vadd.f32 0.0, %v2329
      %v2331 = vpop.f32.mrf.mxu0
      %v2332 = vadd.f32 0.0, %v2331
      %2333 = vmatmul.bf16.gmra.mxu0 %v2253
      %v2334 = vpop.f32.mrf.mxu0
      %v2335 = vadd.f32 0.0, %v2334
      %v2336 = vpop.f32.mrf.mxu0
      %v2337 = vadd.f32 0.0, %v2336
      %2338 = vmatmul.bf16.gmra.mxu0 %v2256
      %v2339 = vpop.f32.mrf.mxu0
      %v2340 = vadd.f32 0.0, %v2339
      %v2341 = vpop.f32.mrf.mxu0
      %v2342 = vadd.f32 0.0, %v2341
      %2343 = vmatmul.bf16.gmra.mxu0 %v2259
      %v2344 = vpop.f32.mrf.mxu0
      %v2345 = vadd.f32 0.0, %v2344
      %v2346 = vpop.f32.mrf.mxu0
      %v2347 = vadd.f32 0.0, %v2346
      %2348 = vmatmul.bf16.gmra.mxu0 %v2262
      %v2349 = vpop.f32.mrf.mxu0
      %v2350 = vadd.f32 0.0, %v2349
      %v2351 = vpop.f32.mrf.mxu0
      %v2352 = vadd.f32 0.0, %v2351
      %2353 = vmatmul.bf16.gmra.mxu0 %v2265
      %v2354 = vpop.f32.mrf.mxu0
      %v2355 = vadd.f32 0.0, %v2354
      %v2356 = vpop.f32.mrf.mxu0
      %v2357 = vadd.f32 0.0, %v2356
      %2358 = vdwg.mxu0
      %v2359 = vadd.f32 %v2137, %v2280
      %v2360 = vadd.f32 %v2138, %v2282
      %v2361 = vadd.f32 %v2139, %v2285
      %v2362 = vadd.f32 %v2140, %v2287
      %v2363 = vadd.f32 %v2141, %v2290
      %v2364 = vadd.f32 %v2142, %v2292
      %v2365 = vadd.f32 %v2143, %v2295
      %v2366 = vadd.f32 %v2144, %v2297
      %v2367 = vadd.f32 %v2145, %v2300
      %v2368 = vadd.f32 %v2146, %v2302
      %v2369 = vadd.f32 %v2147, %v2305
      %v2370 = vadd.f32 %v2148, %v2307
      %v2371 = vadd.f32 %v2149, %v2310
      %v2372 = vadd.f32 %v2150, %v2312
      %v2373 = vadd.f32 %v2151, %v2315
      %v2374 = vadd.f32 %v2152, %v2317
      %v2375 = vadd.f32 %v2153, %v2320
      %v2376 = vadd.f32 %v2154, %v2322
      %v2377 = vadd.f32 %v2155, %v2325
      %v2378 = vadd.f32 %v2156, %v2327
      %v2379 = vadd.f32 %v2157, %v2330
      %v2380 = vadd.f32 %v2158, %v2332
      %v2381 = vadd.f32 %v2159, %v2335
      %v2382 = vadd.f32 %v2160, %v2337
      %v2383 = vadd.f32 %v2161, %v2340
      %v2384 = vadd.f32 %v2162, %v2342
      %v2385 = vadd.f32 %v2163, %v2345
      %v2386 = vadd.f32 %v2164, %v2347
      %v2387 = vadd.f32 %v2165, %v2350
      %v2388 = vadd.f32 %v2166, %v2352
      %v2389 = vadd.f32 %v2167, %v2355
      %v2390 = vadd.f32 %v2168, %v2357
      %v2391 = vld [vmem:[%s1946 + $0x2] sm:$0xff]
      %v2392 = vld [vmem:[%s1946 + $0xa] sm:$0xff]
      %v2393 = vld [vmem:[%s1946 + $0x1a] sm:$0xff]
      %v2394 = vld [vmem:[%s1946 + $0x22] sm:$0xff]
      %v2395 = vld [vmem:[%s1946 + $0x32] sm:$0xff]
      %v2396 = vld [vmem:[%s1946 + $0x3a] sm:$0xff]
      %v2397 = vld [vmem:[%s1946 + $0x4a] sm:$0xff]
      %v2398 = vld [vmem:[%s1946 + $0x52] sm:$0xff]
      %v2399 = vld [vmem:[%s1946 + $0x62] sm:$0xff]
      %v2400 = vld [vmem:[%s1946 + $0x6a] sm:$0xff]
      %v2401 = vld [vmem:[%s1946 + $0x7a] sm:$0xff]
      %v2402 = vld [vmem:[%s1946 + $0x82] sm:$0xff]
      %v2403 = vld [vmem:[%s1946 + $0x92] sm:$0xff]
      %v2404 = vld [vmem:[%s1946 + $0x9a] sm:$0xff]
      %v2405 = vld [vmem:[%s1946 + $0xaa] sm:$0xff]
      %v2406 = vld [vmem:[%s1946 + $0xb2] sm:$0xff]
      %v2407 = vld [vmem:[%s1946 + $0xc2] sm:$0xff]
      %v2408 = vld [vmem:[%s1946 + $0xca] sm:$0xff]
      %v2409 = vld [vmem:[%s1946 + $0xda] sm:$0xff]
      %v2410 = vld [vmem:[%s1946 + $0xe2] sm:$0xff]
      %v2411 = vld [vmem:[%s1946 + $0xf2] sm:$0xff]
      %v2412 = vld [vmem:[%s1946 + $0xfa] sm:$0xff]
      %v2413 = vld [vmem:[%s1946 + $0x10a] sm:$0xff]
      %v2414 = vld [vmem:[%s1946 + $0x112] sm:$0xff]
      %v2415 = vld [vmem:[%s1946 + $0x122] sm:$0xff]
      %v2416 = vld [vmem:[%s1946 + $0x12a] sm:$0xff]
      %v2417 = vld [vmem:[%s1946 + $0x13a] sm:$0xff]
      %v2418 = vld [vmem:[%s1946 + $0x142] sm:$0xff]
      %v2419 = vld [vmem:[%s1946 + $0x152] sm:$0xff]
      %v2420 = vld [vmem:[%s1946 + $0x15a] sm:$0xff]
      %v2421 = vld [vmem:[%s1946 + $0x16a] sm:$0xff]
      %v2422 = vld [vmem:[%s1946 + $0x172] sm:$0xff]
      %v2423 = vpack.c.bf16 %v2392, %v2391
      %v2424 = vpack.c.bf16 %v2394, %v2393
      %v2425 = vpack.c.bf16 %v2396, %v2395
      %v2426 = vpack.c.bf16 %v2398, %v2397
      %v2427 = vpack.c.bf16 %v2400, %v2399
      %v2428 = vpack.c.bf16 %v2402, %v2401
      %v2429 = vpack.c.bf16 %v2404, %v2403
      %v2430 = vpack.c.bf16 %v2406, %v2405
      %v2431 = vpack.c.bf16 %v2408, %v2407
      %v2432 = vpack.c.bf16 %v2410, %v2409
      %v2433 = vpack.c.bf16 %v2412, %v2411
      %v2434 = vpack.c.bf16 %v2414, %v2413
      %v2435 = vpack.c.bf16 %v2416, %v2415
      %v2436 = vpack.c.bf16 %v2418, %v2417
      %v2437 = vpack.c.bf16 %v2420, %v2419
      %v2438 = vpack.c.bf16 %v2422, %v2421
      %s2439 = scalar_lea.vmem %s3, 32
      %v2440 = vld [vmem:[%s2439] sm:$0xf]
      %v2442 = vsel %vm604, %v2423, 0
      %v2445 = vsel %vm604, %v2424, 0
      %v2448 = vsel %vm604, %v2425, 0
      %v2451 = vsel %vm604, %v2426, 0
      %v2454 = vsel %vm604, %v2427, 0
      %v2457 = vsel %vm604, %v2428, 0
      %v2460 = vsel %vm604, %v2429, 0
      %v2463 = vsel %vm604, %v2430, 0
      %v2466 = vsel %vm604, %v2431, 0
      %v2469 = vsel %vm604, %v2432, 0
      %v2472 = vsel %vm604, %v2433, 0
      %v2475 = vsel %vm604, %v2434, 0
      %v2478 = vsel %vm604, %v2435, 0
      %v2481 = vsel %vm604, %v2436, 0
      %v2484 = vsel %vm604, %v2437, 0
      %v2487 = vsel %vm604, %v2438, 0
      %v2490 = vsel %vm825, %v2440, 0
      %2492 = vmatpush.bf16.msra.mxu0 0
      %2493 = vmatpush.bf16.msra.mxu0 0
      %2494 = vmatpush.bf16.msra.mxu0 0
      %2495 = vmatpush.bf16.msra.mxu0 0
      %2496 = vmatpush.bf16.msra.mxu0 0
      %2497 = vmatpush.bf16.msra.mxu0 0
      %2498 = vmatpush.bf16.msra.mxu0 0
      %2499 = vmatpush.bf16.msra.mxu0 %v2490
      %2500 = vmatmul.bf16.gmra.mxu0 %v2442
      %v2501 = vpop.f32.mrf.mxu0
      %v2502 = vadd.f32 0.0, %v2501
      %v2503 = vpop.f32.mrf.mxu0
      %v2504 = vadd.f32 0.0, %v2503
      %2505 = vmatmul.bf16.gmra.mxu0 %v2445
      %v2506 = vpop.f32.mrf.mxu0
      %v2507 = vadd.f32 0.0, %v2506
      %v2508 = vpop.f32.mrf.mxu0
      %v2509 = vadd.f32 0.0, %v2508
      %2510 = vmatmul.bf16.gmra.mxu0 %v2448
      %v2511 = vpop.f32.mrf.mxu0
      %v2512 = vadd.f32 0.0, %v2511
      %v2513 = vpop.f32.mrf.mxu0
      %v2514 = vadd.f32 0.0, %v2513
      %2515 = vmatmul.bf16.gmra.mxu0 %v2451
      %v2516 = vpop.f32.mrf.mxu0
      %v2517 = vadd.f32 0.0, %v2516
      %v2518 = vpop.f32.mrf.mxu0
      %v2519 = vadd.f32 0.0, %v2518
      %2520 = vmatmul.bf16.gmra.mxu0 %v2454
      %v2521 = vpop.f32.mrf.mxu0
      %v2522 = vadd.f32 0.0, %v2521
      %v2523 = vpop.f32.mrf.mxu0
      %v2524 = vadd.f32 0.0, %v2523
      %2525 = vmatmul.bf16.gmra.mxu0 %v2457
      %v2526 = vpop.f32.mrf.mxu0
      %v2527 = vadd.f32 0.0, %v2526
      %v2528 = vpop.f32.mrf.mxu0
      %v2529 = vadd.f32 0.0, %v2528
      %2530 = vmatmul.bf16.gmra.mxu0 %v2460
      %v2531 = vpop.f32.mrf.mxu0
      %v2532 = vadd.f32 0.0, %v2531
      %v2533 = vpop.f32.mrf.mxu0
      %v2534 = vadd.f32 0.0, %v2533
      %2535 = vmatmul.bf16.gmra.mxu0 %v2463
      %v2536 = vpop.f32.mrf.mxu0
      %v2537 = vadd.f32 0.0, %v2536
      %v2538 = vpop.f32.mrf.mxu0
      %v2539 = vadd.f32 0.0, %v2538
      %2540 = vmatmul.bf16.gmra.mxu0 %v2466
      %v2541 = vpop.f32.mrf.mxu0
      %v2542 = vadd.f32 0.0, %v2541
      %v2543 = vpop.f32.mrf.mxu0
      %v2544 = vadd.f32 0.0, %v2543
      %2545 = vmatmul.bf16.gmra.mxu0 %v2469
      %v2546 = vpop.f32.mrf.mxu0
      %v2547 = vadd.f32 0.0, %v2546
      %v2548 = vpop.f32.mrf.mxu0
      %v2549 = vadd.f32 0.0, %v2548
      %2550 = vmatmul.bf16.gmra.mxu0 %v2472
      %v2551 = vpop.f32.mrf.mxu0
      %v2552 = vadd.f32 0.0, %v2551
      %v2553 = vpop.f32.mrf.mxu0
      %v2554 = vadd.f32 0.0, %v2553
      %2555 = vmatmul.bf16.gmra.mxu0 %v2475
      %v2556 = vpop.f32.mrf.mxu0
      %v2557 = vadd.f32 0.0, %v2556
      %v2558 = vpop.f32.mrf.mxu0
      %v2559 = vadd.f32 0.0, %v2558
      %2560 = vmatmul.bf16.gmra.mxu0 %v2478
      %v2561 = vpop.f32.mrf.mxu0
      %v2562 = vadd.f32 0.0, %v2561
      %v2563 = vpop.f32.mrf.mxu0
      %v2564 = vadd.f32 0.0, %v2563
      %2565 = vmatmul.bf16.gmra.mxu0 %v2481
      %v2566 = vpop.f32.mrf.mxu0
      %v2567 = vadd.f32 0.0, %v2566
      %v2568 = vpop.f32.mrf.mxu0
      %v2569 = vadd.f32 0.0, %v2568
      %2570 = vmatmul.bf16.gmra.mxu0 %v2484
      %v2571 = vpop.f32.mrf.mxu0
      %v2572 = vadd.f32 0.0, %v2571
      %v2573 = vpop.f32.mrf.mxu0
      %v2574 = vadd.f32 0.0, %v2573
      %2575 = vmatmul.bf16.gmra.mxu0 %v2487
      %v2576 = vpop.f32.mrf.mxu0
      %v2577 = vadd.f32 0.0, %v2576
      %v2578 = vpop.f32.mrf.mxu0
      %v2579 = vadd.f32 0.0, %v2578
      %2580 = vdwg.mxu0
      %v2581 = vadd.f32 %v2359, %v2502
      %v2582 = vadd.f32 %v2360, %v2504
      %v2583 = vadd.f32 %v2361, %v2507
      %v2584 = vadd.f32 %v2362, %v2509
      %v2585 = vadd.f32 %v2363, %v2512
      %v2586 = vadd.f32 %v2364, %v2514
      %v2587 = vadd.f32 %v2365, %v2517
      %v2588 = vadd.f32 %v2366, %v2519
      %v2589 = vadd.f32 %v2367, %v2522
      %v2590 = vadd.f32 %v2368, %v2524
      %v2591 = vadd.f32 %v2369, %v2527
      %v2592 = vadd.f32 %v2370, %v2529
      %v2593 = vadd.f32 %v2371, %v2532
      %v2594 = vadd.f32 %v2372, %v2534
      %v2595 = vadd.f32 %v2373, %v2537
      %v2596 = vadd.f32 %v2374, %v2539
      %v2597 = vadd.f32 %v2375, %v2542
      %v2598 = vadd.f32 %v2376, %v2544
      %v2599 = vadd.f32 %v2377, %v2547
      %v2600 = vadd.f32 %v2378, %v2549
      %v2601 = vadd.f32 %v2379, %v2552
      %v2602 = vadd.f32 %v2380, %v2554
      %v2603 = vadd.f32 %v2381, %v2557
      %v2604 = vadd.f32 %v2382, %v2559
      %v2605 = vadd.f32 %v2383, %v2562
      %v2606 = vadd.f32 %v2384, %v2564
      %v2607 = vadd.f32 %v2385, %v2567
      %v2608 = vadd.f32 %v2386, %v2569
      %v2609 = vadd.f32 %v2387, %v2572
      %v2610 = vadd.f32 %v2388, %v2574
      %v2611 = vadd.f32 %v2389, %v2577
      %v2612 = vadd.f32 %v2390, %v2579
      %v2613 = vld [vmem:[%s4] sm:$0x1]
      %v2615 = vperm.slane %v2613, 0
      %v2617 = vadd.f32 %v2581, %v2615
      %v2618 = vadd.f32 %v2582, %v2615
      %v2619 = vadd.f32 %v2583, %v2615
      %v2620 = vadd.f32 %v2584, %v2615
      %v2621 = vadd.f32 %v2585, %v2615
      %v2622 = vadd.f32 %v2586, %v2615
      %v2623 = vadd.f32 %v2587, %v2615
      %v2624 = vadd.f32 %v2588, %v2615
      %v2625 = vadd.f32 %v2589, %v2615
      %v2626 = vadd.f32 %v2590, %v2615
      %v2627 = vadd.f32 %v2591, %v2615
      %v2628 = vadd.f32 %v2592, %v2615
      %v2629 = vadd.f32 %v2593, %v2615
      %v2630 = vadd.f32 %v2594, %v2615
      %v2631 = vadd.f32 %v2595, %v2615
      %v2632 = vadd.f32 %v2596, %v2615
      %v2633 = vadd.f32 %v2597, %v2615
      %v2634 = vadd.f32 %v2598, %v2615
      %v2635 = vadd.f32 %v2599, %v2615
      %v2636 = vadd.f32 %v2600, %v2615
      %v2637 = vadd.f32 %v2601, %v2615
      %v2638 = vadd.f32 %v2602, %v2615
      %v2639 = vadd.f32 %v2603, %v2615
      %v2640 = vadd.f32 %v2604, %v2615
      %v2641 = vadd.f32 %v2605, %v2615
      %v2642 = vadd.f32 %v2606, %v2615
      %v2643 = vadd.f32 %v2607, %v2615
      %v2644 = vadd.f32 %v2608, %v2615
      %v2645 = vadd.f32 %v2609, %v2615
      %v2646 = vadd.f32 %v2610, %v2615
      %v2647 = vadd.f32 %v2611, %v2615
      %v2648 = vadd.f32 %v2612, %v2615
      %v2649 = vmax.f32 %v2617, 0.0
      %v2650 = vmax.f32 %v2618, 0.0
      %v2651 = vmax.f32 %v2619, 0.0
      %v2652 = vmax.f32 %v2620, 0.0
      %v2653 = vmax.f32 %v2621, 0.0
      %v2654 = vmax.f32 %v2622, 0.0
      %v2655 = vmax.f32 %v2623, 0.0
      %v2656 = vmax.f32 %v2624, 0.0
      %v2657 = vmax.f32 %v2625, 0.0
      %v2658 = vmax.f32 %v2626, 0.0
      %v2659 = vmax.f32 %v2627, 0.0
      %v2660 = vmax.f32 %v2628, 0.0
      %v2661 = vmax.f32 %v2629, 0.0
      %v2662 = vmax.f32 %v2630, 0.0
      %v2663 = vmax.f32 %v2631, 0.0
      %v2664 = vmax.f32 %v2632, 0.0
      %v2665 = vmax.f32 %v2633, 0.0
      %v2666 = vmax.f32 %v2634, 0.0
      %v2667 = vmax.f32 %v2635, 0.0
      %v2668 = vmax.f32 %v2636, 0.0
      %v2669 = vmax.f32 %v2637, 0.0
      %v2670 = vmax.f32 %v2638, 0.0
      %v2671 = vmax.f32 %v2639, 0.0
      %v2672 = vmax.f32 %v2640, 0.0
      %v2673 = vmax.f32 %v2641, 0.0
      %v2674 = vmax.f32 %v2642, 0.0
      %v2675 = vmax.f32 %v2643, 0.0
      %v2676 = vmax.f32 %v2644, 0.0
      %v2677 = vmax.f32 %v2645, 0.0
      %v2678 = vmax.f32 %v2646, 0.0
      %v2679 = vmax.f32 %v2647, 0.0
      %v2680 = vmax.f32 %v2648, 0.0
      %v2681 = vpack.c.bf16 %v2650, %v2649
      %v2682 = vpack.c.bf16 %v2652, %v2651
      %v2683 = vpack.c.bf16 %v2654, %v2653
      %v2684 = vpack.c.bf16 %v2656, %v2655
      %v2685 = vpack.c.bf16 %v2658, %v2657
      %v2686 = vpack.c.bf16 %v2660, %v2659
      %v2687 = vpack.c.bf16 %v2662, %v2661
      %v2688 = vpack.c.bf16 %v2664, %v2663
      %v2689 = vpack.c.bf16 %v2666, %v2665
      %v2690 = vpack.c.bf16 %v2668, %v2667
      %v2691 = vpack.c.bf16 %v2670, %v2669
      %v2692 = vpack.c.bf16 %v2672, %v2671
      %v2693 = vpack.c.bf16 %v2674, %v2673
      %v2694 = vpack.c.bf16 %v2676, %v2675
      %v2695 = vpack.c.bf16 %v2678, %v2677
      %v2696 = vpack.c.bf16 %v2680, %v2679
      %v2697 = vld [vmem:[%s5] sm:$0xf]
      %v2698 = vld [vmem:[%s6] sm:$0x1]
      %v2700 = vperm.slane %v2698, 0
      %v2703 = vsel %vm604, %v2681, 0
      %v2706 = vsel %vm604, %v2682, 0
      %v2709 = vsel %vm604, %v2683, 0
      %v2712 = vsel %vm604, %v2684, 0
      %v2715 = vsel %vm604, %v2685, 0
      %v2718 = vsel %vm604, %v2686, 0
      %v2721 = vsel %vm604, %v2687, 0
      %v2724 = vsel %vm604, %v2688, 0
      %v2727 = vsel %vm604, %v2689, 0
      %v2730 = vsel %vm604, %v2690, 0
      %v2733 = vsel %vm604, %v2691, 0
      %v2736 = vsel %vm604, %v2692, 0
      %v2739 = vsel %vm604, %v2693, 0
      %v2742 = vsel %vm604, %v2694, 0
      %v2745 = vsel %vm604, %v2695, 0
      %v2748 = vsel %vm604, %v2696, 0
      %v2751 = vsel %vm825, %v2697, 0
      %2753 = vmatpush.bf16.msra.mxu0 0
      %2754 = vmatpush.bf16.msra.mxu0 0
      %2755 = vmatpush.bf16.msra.mxu0 0
      %2756 = vmatpush.bf16.msra.mxu0 0
      %2757 = vmatpush.bf16.msra.mxu0 0
      %2758 = vmatpush.bf16.msra.mxu0 0
      %2759 = vmatpush.bf16.msra.mxu0 0
      %2760 = vmatpush.bf16.msra.mxu0 %v2751
      %2761 = vmatmul.bf16.gmra.mxu0 %v2703
      %v2762 = vpop.f32.mrf.mxu0
      %v2763 = vadd.f32 %v2700, %v2762
      %v2764 = vpop.f32.mrf.mxu0
      %v2765 = vadd.f32 %v2700, %v2764
      %2766 = vmatmul.bf16.gmra.mxu0 %v2706
      %v2767 = vpop.f32.mrf.mxu0
      %v2768 = vadd.f32 %v2700, %v2767
      %v2769 = vpop.f32.mrf.mxu0
      %v2770 = vadd.f32 %v2700, %v2769
      %2771 = vmatmul.bf16.gmra.mxu0 %v2709
      %v2772 = vpop.f32.mrf.mxu0
      %v2773 = vadd.f32 %v2700, %v2772
      %v2774 = vpop.f32.mrf.mxu0
      %v2775 = vadd.f32 %v2700, %v2774
      %2776 = vmatmul.bf16.gmra.mxu0 %v2712
      %v2777 = vpop.f32.mrf.mxu0
      %v2778 = vadd.f32 %v2700, %v2777
      %v2779 = vpop.f32.mrf.mxu0
      %v2780 = vadd.f32 %v2700, %v2779
      %2781 = vmatmul.bf16.gmra.mxu0 %v2715
      %v2782 = vpop.f32.mrf.mxu0
      %v2783 = vadd.f32 %v2700, %v2782
      %v2784 = vpop.f32.mrf.mxu0
      %v2785 = vadd.f32 %v2700, %v2784
      %2786 = vmatmul.bf16.gmra.mxu0 %v2718
      %v2787 = vpop.f32.mrf.mxu0
      %v2788 = vadd.f32 %v2700, %v2787
      %v2789 = vpop.f32.mrf.mxu0
      %v2790 = vadd.f32 %v2700, %v2789
      %2791 = vmatmul.bf16.gmra.mxu0 %v2721
      %v2792 = vpop.f32.mrf.mxu0
      %v2793 = vadd.f32 %v2700, %v2792
      %v2794 = vpop.f32.mrf.mxu0
      %v2795 = vadd.f32 %v2700, %v2794
      %2796 = vmatmul.bf16.gmra.mxu0 %v2724
      %v2797 = vpop.f32.mrf.mxu0
      %v2798 = vadd.f32 %v2700, %v2797
      %v2799 = vpop.f32.mrf.mxu0
      %v2800 = vadd.f32 %v2700, %v2799
      %2801 = vmatmul.bf16.gmra.mxu0 %v2727
      %v2802 = vpop.f32.mrf.mxu0
      %v2803 = vadd.f32 %v2700, %v2802
      %v2804 = vpop.f32.mrf.mxu0
      %v2805 = vadd.f32 %v2700, %v2804
      %2806 = vmatmul.bf16.gmra.mxu0 %v2730
      %v2807 = vpop.f32.mrf.mxu0
      %v2808 = vadd.f32 %v2700, %v2807
      %v2809 = vpop.f32.mrf.mxu0
      %v2810 = vadd.f32 %v2700, %v2809
      %2811 = vmatmul.bf16.gmra.mxu0 %v2733
      %v2812 = vpop.f32.mrf.mxu0
      %v2813 = vadd.f32 %v2700, %v2812
      %v2814 = vpop.f32.mrf.mxu0
      %v2815 = vadd.f32 %v2700, %v2814
      %2816 = vmatmul.bf16.gmra.mxu0 %v2736
      %v2817 = vpop.f32.mrf.mxu0
      %v2818 = vadd.f32 %v2700, %v2817
      %v2819 = vpop.f32.mrf.mxu0
      %v2820 = vadd.f32 %v2700, %v2819
      %2821 = vmatmul.bf16.gmra.mxu0 %v2739
      %v2822 = vpop.f32.mrf.mxu0
      %v2823 = vadd.f32 %v2700, %v2822
      %v2824 = vpop.f32.mrf.mxu0
      %v2825 = vadd.f32 %v2700, %v2824
      %2826 = vmatmul.bf16.gmra.mxu0 %v2742
      %v2827 = vpop.f32.mrf.mxu0
      %v2828 = vadd.f32 %v2700, %v2827
      %v2829 = vpop.f32.mrf.mxu0
      %v2830 = vadd.f32 %v2700, %v2829
      %2831 = vmatmul.bf16.gmra.mxu0 %v2745
      %v2832 = vpop.f32.mrf.mxu0
      %v2833 = vadd.f32 %v2700, %v2832
      %v2834 = vpop.f32.mrf.mxu0
      %v2835 = vadd.f32 %v2700, %v2834
      %2836 = vmatmul.bf16.gmra.mxu0 %v2748
      %v2837 = vpop.f32.mrf.mxu0
      %v2838 = vadd.f32 %v2700, %v2837
      %v2839 = vpop.f32.mrf.mxu0
      %v2840 = vadd.f32 %v2700, %v2839
      %2841 = vdwg.mxu0
      %2874 = vrot.lane.b32.xlu0 %v572, 120
      %v2875 = vpop.permute.xlu0 %2874
      %2876 = vrot.lane.b32.xlu0 %v573, 120
      %v2877 = vpop.permute.xlu0 %2876
      %2878 = vrot.lane.b32.xlu0 %v574, 120
      %v2879 = vpop.permute.xlu0 %2878
      %2880 = vrot.lane.b32.xlu0 %v575, 120
      %v2881 = vpop.permute.xlu0 %2880
      %2882 = vrot.lane.b32.xlu0 %v576, 120
      %v2883 = vpop.permute.xlu0 %2882
      %2884 = vrot.lane.b32.xlu0 %v577, 120
      %v2885 = vpop.permute.xlu0 %2884
      %2886 = vrot.lane.b32.xlu0 %v578, 120
      %v2887 = vpop.permute.xlu0 %2886
      %2888 = vrot.lane.b32.xlu0 %v579, 120
      %v2889 = vpop.permute.xlu0 %2888
      %2890 = vrot.lane.b32.xlu0 %v580, 120
      %v2891 = vpop.permute.xlu0 %2890
      %2892 = vrot.lane.b32.xlu0 %v581, 120
      %v2893 = vpop.permute.xlu0 %2892
      %2894 = vrot.lane.b32.xlu0 %v582, 120
      %v2895 = vpop.permute.xlu0 %2894
      %2896 = vrot.lane.b32.xlu0 %v583, 120
      %v2897 = vpop.permute.xlu0 %2896
      %2898 = vrot.lane.b32.xlu0 %v584, 120
      %v2899 = vpop.permute.xlu0 %2898
      %2900 = vrot.lane.b32.xlu0 %v585, 120
      %v2901 = vpop.permute.xlu0 %2900
      %2902 = vrot.lane.b32.xlu0 %v586, 120
      %v2903 = vpop.permute.xlu0 %2902
      %2904 = vrot.lane.b32.xlu0 %v587, 120
      %v2905 = vpop.permute.xlu0 %2904
      %2906 = vrot.lane.b32.xlu0 %v588, 120
      %v2907 = vpop.permute.xlu0 %2906
      %2908 = vrot.lane.b32.xlu0 %v589, 120
      %v2909 = vpop.permute.xlu0 %2908
      %2910 = vrot.lane.b32.xlu0 %v590, 120
      %v2911 = vpop.permute.xlu0 %2910
      %2912 = vrot.lane.b32.xlu0 %v591, 120
      %v2913 = vpop.permute.xlu0 %2912
      %2914 = vrot.lane.b32.xlu0 %v592, 120
      %v2915 = vpop.permute.xlu0 %2914
      %2916 = vrot.lane.b32.xlu0 %v593, 120
      %v2917 = vpop.permute.xlu0 %2916
      %2918 = vrot.lane.b32.xlu0 %v594, 120
      %v2919 = vpop.permute.xlu0 %2918
      %2920 = vrot.lane.b32.xlu0 %v595, 120
      %v2921 = vpop.permute.xlu0 %2920
      %2922 = vrot.lane.b32.xlu0 %v596, 120
      %v2923 = vpop.permute.xlu0 %2922
      %2924 = vrot.lane.b32.xlu0 %v597, 120
      %v2925 = vpop.permute.xlu0 %2924
      %2926 = vrot.lane.b32.xlu0 %v598, 120
      %v2927 = vpop.permute.xlu0 %2926
      %2928 = vrot.lane.b32.xlu0 %v599, 120
      %v2929 = vpop.permute.xlu0 %2928
      %2930 = vrot.lane.b32.xlu0 %v600, 120
      %v2931 = vpop.permute.xlu0 %2930
      %2932 = vrot.lane.b32.xlu0 %v601, 120
      %v2933 = vpop.permute.xlu0 %2932
      %2934 = vrot.lane.b32.xlu0 %v602, 120
      %v2935 = vpop.permute.xlu0 %2934
      %2936 = vrot.lane.b32.xlu0 %v603, 120
      %v2937 = vpop.permute.xlu0 %2936
      %v2970 = vadd.f32 %v2763, %v2875
      %v2971 = vadd.f32 %v2765, %v2877
      %v2972 = vadd.f32 %v2768, %v2879
      %v2973 = vadd.f32 %v2770, %v2881
      %v2974 = vadd.f32 %v2773, %v2883
      %v2975 = vadd.f32 %v2775, %v2885
      %v2976 = vadd.f32 %v2778, %v2887
      %v2977 = vadd.f32 %v2780, %v2889
      %v2978 = vadd.f32 %v2783, %v2891
      %v2979 = vadd.f32 %v2785, %v2893
      %v2980 = vadd.f32 %v2788, %v2895
      %v2981 = vadd.f32 %v2790, %v2897
      %v2982 = vadd.f32 %v2793, %v2899
      %v2983 = vadd.f32 %v2795, %v2901
      %v2984 = vadd.f32 %v2798, %v2903
      %v2985 = vadd.f32 %v2800, %v2905
      %v2986 = vadd.f32 %v2803, %v2907
      %v2987 = vadd.f32 %v2805, %v2909
      %v2988 = vadd.f32 %v2808, %v2911
      %v2989 = vadd.f32 %v2810, %v2913
      %v2990 = vadd.f32 %v2813, %v2915
      %v2991 = vadd.f32 %v2815, %v2917
      %v2992 = vadd.f32 %v2818, %v2919
      %v2993 = vadd.f32 %v2820, %v2921
      %v2994 = vadd.f32 %v2823, %v2923
      %v2995 = vadd.f32 %v2825, %v2925
      %v2996 = vadd.f32 %v2828, %v2927
      %v2997 = vadd.f32 %v2830, %v2929
      %v2998 = vadd.f32 %v2833, %v2931
      %v2999 = vadd.f32 %v2835, %v2933
      %v3000 = vadd.f32 %v2838, %v2935
      %v3001 = vadd.f32 %v2840, %v2937
      %v3002 = vmax.f32 %v2970, 0.0
      %v3003 = vmax.f32 %v2971, 0.0
      %v3004 = vmax.f32 %v2972, 0.0
      %v3005 = vmax.f32 %v2973, 0.0
      %v3006 = vmax.f32 %v2974, 0.0
      %v3007 = vmax.f32 %v2975, 0.0
      %v3008 = vmax.f32 %v2976, 0.0
      %v3009 = vmax.f32 %v2977, 0.0
      %v3010 = vmax.f32 %v2978, 0.0
      %v3011 = vmax.f32 %v2979, 0.0
      %v3012 = vmax.f32 %v2980, 0.0
      %v3013 = vmax.f32 %v2981, 0.0
      %v3014 = vmax.f32 %v2982, 0.0
      %v3015 = vmax.f32 %v2983, 0.0
      %v3016 = vmax.f32 %v2984, 0.0
      %v3017 = vmax.f32 %v2985, 0.0
      %v3018 = vmax.f32 %v2986, 0.0
      %v3019 = vmax.f32 %v2987, 0.0
      %v3020 = vmax.f32 %v2988, 0.0
      %v3021 = vmax.f32 %v2989, 0.0
      %v3022 = vmax.f32 %v2990, 0.0
      %v3023 = vmax.f32 %v2991, 0.0
      %v3024 = vmax.f32 %v2992, 0.0
      %v3025 = vmax.f32 %v2993, 0.0
      %v3026 = vmax.f32 %v2994, 0.0
      %v3027 = vmax.f32 %v2995, 0.0
      %v3028 = vmax.f32 %v2996, 0.0
      %v3029 = vmax.f32 %v2997, 0.0
      %v3030 = vmax.f32 %v2998, 0.0
      %v3031 = vmax.f32 %v2999, 0.0
      %v3032 = vmax.f32 %v3000, 0.0
      %v3033 = vmax.f32 %v3001, 0.0
      %vm3034 = vcmask 261120
      %3035 = vst.msk [vmem:[%s305] sm:$0xff] %vm3034, %v3002
      %3036 = vst.msk [vmem:[%s305 + $0x8] sm:$0xff] %vm3034, %v3003
      %3037 = vst.msk [vmem:[%s305 + $0x10] sm:$0xff] %vm3034, %v3004
      %3038 = vst.msk [vmem:[%s305 + $0x18] sm:$0xff] %vm3034, %v3005
      %3039 = vst.msk [vmem:[%s305 + $0x20] sm:$0xff] %vm3034, %v3006
      %3040 = vst.msk [vmem:[%s305 + $0x28] sm:$0xff] %vm3034, %v3007
      %3041 = vst.msk [vmem:[%s305 + $0x30] sm:$0xff] %vm3034, %v3008
      %3042 = vst.msk [vmem:[%s305 + $0x38] sm:$0xff] %vm3034, %v3009
      %3043 = vst.msk [vmem:[%s305 + $0x40] sm:$0xff] %vm3034, %v3010
      %3044 = vst.msk [vmem:[%s305 + $0x48] sm:$0xff] %vm3034, %v3011
      %3045 = vst.msk [vmem:[%s305 + $0x50] sm:$0xff] %vm3034, %v3012
      %3046 = vst.msk [vmem:[%s305 + $0x58] sm:$0xff] %vm3034, %v3013
      %3047 = vst.msk [vmem:[%s305 + $0x60] sm:$0xff] %vm3034, %v3014
      %3048 = vst.msk [vmem:[%s305 + $0x68] sm:$0xff] %vm3034, %v3015
      %3049 = vst.msk [vmem:[%s305 + $0x70] sm:$0xff] %vm3034, %v3016
      %3050 = vst.msk [vmem:[%s305 + $0x78] sm:$0xff] %vm3034, %v3017
      %3051 = vst.msk [vmem:[%s305 + $0x80] sm:$0xff] %vm3034, %v3018
      %3052 = vst.msk [vmem:[%s305 + $0x88] sm:$0xff] %vm3034, %v3019
      %3053 = vst.msk [vmem:[%s305 + $0x90] sm:$0xff] %vm3034, %v3020
      %3054 = vst.msk [vmem:[%s305 + $0x98] sm:$0xff] %vm3034, %v3021
      %3055 = vst.msk [vmem:[%s305 + $0xa0] sm:$0xff] %vm3034, %v3022
      %3056 = vst.msk [vmem:[%s305 + $0xa8] sm:$0xff] %vm3034, %v3023
      %3057 = vst.msk [vmem:[%s305 + $0xb0] sm:$0xff] %vm3034, %v3024
      %3058 = vst.msk [vmem:[%s305 + $0xb8] sm:$0xff] %vm3034, %v3025
      %3059 = vst.msk [vmem:[%s305 + $0xc0] sm:$0xff] %vm3034, %v3026
      %3060 = vst.msk [vmem:[%s305 + $0xc8] sm:$0xff] %vm3034, %v3027
      %3061 = vst.msk [vmem:[%s305 + $0xd0] sm:$0xff] %vm3034, %v3028
      %3062 = vst.msk [vmem:[%s305 + $0xd8] sm:$0xff] %vm3034, %v3029
      %3063 = vst.msk [vmem:[%s305 + $0xe0] sm:$0xff] %vm3034, %v3030
      %3064 = vst.msk [vmem:[%s305 + $0xe8] sm:$0xff] %vm3034, %v3031
      %3065 = vst.msk [vmem:[%s305 + $0xf0] sm:$0xff] %vm3034, %v3032
      %3066 = vst.msk [vmem:[%s305 + $0xf8] sm:$0xff] %vm3034, %v3033
      %p3067 = scmp.lt.s32.totalorder %s19, 1
      %s3068 = scalar_select %p3067, %s19, 1
      %s3069 = smul.addr %s3068, 32
      %s3070 = smul.addr %s3069, 8
      %s3071 = scalar_lea.vmem %s8, %s3070
      // Predicated region
      $region53: #{tpu_custom_call.1} parent=51 // pred_check
        %p3072 = pneg %p210
      $region54: #{tpu_custom_call.1} parent=51 // pred_check_branch
        %3074 = sbr.rel (%p3072) target = $region56
      $region55: #{tpu_custom_call.1} parent=51 // pred_region
        _
      $region56: #{tpu_custom_call.1} parent=51 // pred_fallthru
        _
    $region52: #{tpu_custom_call.1} parent=5 // pred_fallthru
      _
    %p3075 = scmp.le.s32.totalorder 2, %s14
    // Predicated region
    $region57: #{tpu_custom_call.1} parent=5 // pred_check
      %p3076 = pneg %p3075
    $region58: #{tpu_custom_call.1} parent=5 // pred_check_branch
      %3078 = sbr.rel (%p3076) target = $region60
    $region59: #{tpu_custom_call.1} parent=5 // pred_region
      %s3079 = ssub.s32 %s14, 2
      // Predicated region
      $region61: #{tpu_custom_call.1} parent=59 // pred_check
        %p3080 = pneg %p216
      $region62: #{tpu_custom_call.1} parent=59 // pred_check_branch
        %3082 = sbr.rel (%p3080) target = $region64
      $region63: #{tpu_custom_call.1} parent=59 // pred_region
        %p3083 = scmp.lt.s32.totalorder %s20, 1
        %s3084 = scalar_select %p3083, %s20, 1
        %s3085 = smul.addr %s3084, 32
        %s3086 = smul.addr %s3085, 8
        %s3087 = scalar_lea.vmem %s8, %s3086
      $region64: #{tpu_custom_call.1} parent=59 // pred_fallthru
        _
    $region60: #{tpu_custom_call.1} parent=5 // pred_fallthru
      _
  $region6: #{tpu_custom_call.1} parent=0 // loop_footer
    %s18 = sadd.s32 1, %s14
  $region7: #{tpu_custom_call.1} parent=0 // loop_footer_branch
    %13 = sbr.rel target = $region3
  $region8: #{tpu_custom_call.1} parent=0 // loop_exit
    _

</llo_original>
